<compile_context>
chip_gen: v5e
topology: v5e:2x2
jax: 0.10.0
libtpu: 0.0.40
codegen_flags: <defaults>
</compile_context>

<pallas_src>
import functools

import jax
import jax.numpy as jnp
import numpy as np
from jax.experimental import pallas as pl
from jax.experimental.pallas import tpu as pltpu

EPS = 1e-5
_VMEM_LIMIT = 48 * 1024 * 1024  # stay below v7x's 64 MiB physical VMEM


# --------------------------------------------------------------------------- #
# Kernels
# --------------------------------------------------------------------------- #
def _conv1x1_stats_kernel(x_ref, w_ref, y_ref, sum_ref, ssq_ref, *, mm_dtype):
    """y = x @ w  (1x1 conv as row-tiled matmul) + per-channel sum / sumsq."""
    @pl.when(pl.program_id(0) == 0)
    def _():
        sum_ref[...] = jnp.zeros_like(sum_ref)
        ssq_ref[...] = jnp.zeros_like(ssq_ref)

    y = jnp.dot(x_ref[...].astype(mm_dtype), w_ref[...].astype(mm_dtype),
                preferred_element_type=jnp.float32)
    y_ref[...] = y.astype(y_ref.dtype)
    sum_ref[...] += jnp.sum(y, axis=0, keepdims=True)
    ssq_ref[...] += jnp.sum(y * y, axis=0, keepdims=True)


def _bn_relu_conv1x1_stats_kernel(y_ref, s_ref, t_ref, w_ref,
                                  o_ref, sum_ref, ssq_ref, *, mm_dtype):
    """o = relu(y*scale+shift) @ w  + per-channel sum / sumsq of o."""
    @pl.when(pl.program_id(0) == 0)
    def _():
        sum_ref[...] = jnp.zeros_like(sum_ref)
        ssq_ref[...] = jnp.zeros_like(ssq_ref)

    z = jnp.maximum(y_ref[...].astype(jnp.float32) * s_ref[...] + t_ref[...], 0.0)
    o = jnp.dot(z.astype(mm_dtype), w_ref[...].astype(mm_dtype),
                preferred_element_type=jnp.float32)
    o_ref[...] = o.astype(o_ref.dtype)
    sum_ref[...] += jnp.sum(o, axis=0, keepdims=True)
    ssq_ref[...] += jnp.sum(o * o, axis=0, keepdims=True)


def _bn_relu_conv3x3_stats_kernel(y_ref, s_ref, t_ref, w_ref,
                                  o_ref, sum_ref, ssq_ref, pad_ref, *, mm_dtype):
    """z = relu(y*scale+shift);  o = conv3x3(z, pad=1)  (im2col, K=3P) + stats."""
    TB, H, W, P = y_ref.shape

    @pl.when(pl.program_id(0) == 0)
    def _():
        sum_ref[...] = jnp.zeros_like(sum_ref)
        ssq_ref[...] = jnp.zeros_like(ssq_ref)
        # The 1-pixel halo is constant zero: zero only the 4 thin slabs, once.
        pad_ref[:, 0:1, :, :] = jnp.zeros((TB, 1, W + 2, P), pad_ref.dtype)
        pad_ref[:, H + 1:H + 2, :, :] = jnp.zeros((TB, 1, W + 2, P), pad_ref.dtype)
        pad_ref[:, 1:H + 1, 0:1, :] = jnp.zeros((TB, H, 1, P), pad_ref.dtype)
        pad_ref[:, 1:H + 1, W + 1:W + 2, :] = jnp.zeros((TB, H, 1, P), pad_ref.dtype)

    # bn + relu prologue, written into the interior of the padded scratch.
    z = jnp.maximum(y_ref[...].astype(jnp.float32) * s_ref[...] + t_ref[...], 0.0)
    # Note: interior store is offset by one row/column (masked vst); kept f32 so
    # the sublane-offset stores/slices stay on the well-supported path.
    pad_ref[:, 1:H + 1, 1:W + 1, :] = z

    w2 = w_ref[...].astype(mm_dtype)                     # (3, 3P, P), kw-major rows
    acc = jnp.zeros((TB * H * W, P), jnp.float32)
    for kh in range(3):                                  # 3 matmuls with K = 3P
        slab = pad_ref[:, kh:kh + H, :, :]               # (TB, H, W+2, P)
        patch = jnp.concatenate(
            [slab[:, :, 0:W, :], slab[:, :, 1:W + 1, :], slab[:, :, 2:W + 2, :]],
            axis=-1)                                     # (TB, H, W, 3P), kw-major
        acc = acc + jnp.dot(
            patch.reshape(TB * H * W, 3 * P).astype(mm_dtype), w2[kh],
            preferred_element_type=jnp.float32)

    o_ref[...] = acc.reshape(TB, H, W, P).astype(o_ref.dtype)
    sum_ref[...] += jnp.sum(acc, axis=0, keepdims=True)
    ssq_ref[...] += jnp.sum(acc * acc, axis=0, keepdims=True)


def _bn_add_relu_kernel(y_ref, x_ref, s_ref, t_ref, o_ref):
    """out = relu(y*scale + shift + x)   (bn3 + residual + relu)."""
    out = jnp.maximum(
        y_ref[...].astype(jnp.float32) * s_ref[...] + t_ref[...]
        + x_ref[...].astype(jnp.float32), 0.0)
    o_ref[...] = out.astype(o_ref.dtype)


# --------------------------------------------------------------------------- #
# Host-side helpers
# --------------------------------------------------------------------------- #
def _bn_fold(s, ss, count, gamma, beta):
    """Fold batch statistics + affine params into per-channel (scale, shift)."""
    mean = s / count
    var = jnp.maximum(ss / count - mean * mean, 0.0)   # biased var (PyTorch train BN)
    scale = gamma * jax.lax.rsqrt(var + EPS)
    return scale, beta - mean * scale


def _largest_divisor(n, target, multiple_of=1):
    """Largest d with d | n, d % multiple_of == 0, d <= target (fallback: n)."""
    best = None
    for d in range(1, min(n, max(int(target), 1)) + 1):
        if n % d == 0 and d % multiple_of == 0:
            best = d
    return best if best is not None else n


def bottleneck_forward(x, params, *, mm_dtype=jnp.bfloat16,
                       row_tile=None, batch_tile=None):
    """x: (N, H, W, Cin) float32 NHWC.  Requires Cin == 4*planes (downsample=None)."""
    N, H, W, Cin = x.shape
    P = params["w1"].shape[1]
    Cout = params["w3"].shape[1]
    assert Cin == Cout, "downsample is None => inplanes must equal planes * 4"

    f32 = jnp.float32
    act_bytes = jnp.dtype(mm_dtype).itemsize
    R = N * H * W
    count = float(R)

    # ---- tile selection (sized for v7x's 64 MiB VMEM; v5e/v6e have headroom) ----
    if row_tile is None:
        bytes_per_row = 2 * ((Cin + Cout) * 4 + 2 * P * act_bytes)  # 2-deep pipeline
        row_tile = _largest_divisor(R, max(8, (8 << 20) // max(bytes_per_row, 1)),
                                    multiple_of=8)
    TR = row_tile if (R % row_tile == 0 and (row_tile % 8 == 0 or row_tile == R)) else R

    if batch_tile is None:
        per_img = (H + 2) * (W + 2) * P * 4 + 2 * H * W * P * (4 + act_bytes)
        batch_tile = _largest_divisor(N, max(1, (12 << 20) // max(per_img, 1)))
    TB = batch_tile if N % batch_tile == 0 else 1

    grid_rows = (R // TR,)
    reduce_params = pltpu.CompilerParams(
        dimension_semantics=("arbitrary",),   # stats accumulator revisits its block
        vmem_limit_bytes=_VMEM_LIMIT)
    parallel_params = pltpu.CompilerParams(
        dimension_semantics=("parallel",),    # pure map: megacore-shardable (v7x)
        vmem_limit_bytes=_VMEM_LIMIT)

    x2d = x.reshape(R, Cin)
    w1 = params["w1"]                          # (Cin, P)
    w2r = params["w2"].reshape(3, 3 * P, P)    # HWIO -> (kh, kw*Cin, Cout) im2col layout
    w3 = params["w3"]                          # (P, Cout)

    row_spec = lambda c: pl.BlockSpec((TR, c), lambda i: (i, 0))
    chan_spec = lambda c: pl.BlockSpec((1, c), lambda i: (0, 0))

    # ---------------- stage 1: conv1 (1x1) + stats ----------------
    y1, s1, q1 = pl.pallas_call(
        functools.partial(_conv1x1_stats_kernel, mm_dtype=mm_dtype),
        grid=grid_rows,
        in_specs=[row_spec(Cin), pl.BlockSpec((Cin, P), lambda i: (0, 0))],
        out_specs=(row_spec(P), chan_spec(P), chan_spec(P)),
        out_shape=(jax.ShapeDtypeStruct((R, P), mm_dtype),
                   jax.ShapeDtypeStruct((1, P), f32),
                   jax.ShapeDtypeStruct((1, P), f32)),
        compiler_params=reduce_params,
        cost_estimate=pl.CostEstimate(
            flops=2 * R * Cin * P, transcendentals=0,
            bytes_accessed=R * Cin * 4 + R * P * act_bytes + Cin * P * 4),
    )(x2d, w1)
    scale1, shift1 = _bn_fold(s1, q1, count, params["g1"], params["b1"])

    # ---------------- stage 2: bn1 + relu + conv2 (3x3, pad=1) + stats ----------------
    y2, s2, q2 = pl.pallas_call(
        functools.partial(_bn_relu_conv3x3_stats_kernel, mm_dtype=mm_dtype),
        grid=(N // TB,),
        in_specs=[pl.BlockSpec((TB, H, W, P), lambda b: (b, 0, 0, 0)),
                  pl.BlockSpec((1, P), lambda b: (0, 0)),
                  pl.BlockSpec((1, P), lambda b: (0, 0)),
                  pl.BlockSpec((3, 3 * P, P), lambda b: (0, 0, 0))],
        out_specs=(pl.BlockSpec((TB, H, W, P), lambda b: (b, 0, 0, 0)),
                   pl.BlockSpec((1, P), lambda b: (0, 0)),
                   pl.BlockSpec((1, P), lambda b: (0, 0))),
        out_shape=(jax.ShapeDtypeStruct((N, H, W, P), mm_dtype),
                   jax.ShapeDtypeStruct((1, P), f32),
                   jax.ShapeDtypeStruct((1, P), f32)),
        scratch_shapes=[pltpu.VMEM((TB, H + 2, W + 2, P), f32)],
        compiler_params=reduce_params,
        cost_estimate=pl.CostEstimate(
            flops=2 * R * 9 * P * P, transcendentals=0,
            bytes_accessed=2 * R * P * act_bytes + 9 * P * P * 4),
    )(y1.reshape(N, H, W, P), scale1, shift1, w2r)
    scale2, shift2 = _bn_fold(s2, q2, count, params["g2"], params["b2"])

    # ---------------- stage 3: bn2 + relu + conv3 (1x1) + stats ----------------
    y3, s3, q3 = pl.pallas_call(
        functools.partial(_bn_relu_conv1x1_stats_kernel, mm_dtype=mm_dtype),
        grid=grid_rows,
        in_specs=[row_spec(P), chan_spec(P), chan_spec(P),
                  pl.BlockSpec((P, Cout), lambda i: (0, 0))],
        out_specs=(row_spec(Cout), chan_spec(Cout), chan_spec(Cout)),
        out_shape=(jax.ShapeDtypeStruct((R, Cout), mm_dtype),
                   jax.ShapeDtypeStruct((1, Cout), f32),
                   jax.ShapeDtypeStruct((1, Cout), f32)),
        compiler_params=reduce_params,
        cost_estimate=pl.CostEstimate(
            flops=2 * R * P * Cout, transcendentals=0,
            bytes_accessed=R * P * act_bytes + R * Cout * act_bytes + P * Cout * 4),
    )(y2.reshape(R, P), scale2, shift2, w3)
    scale3, shift3 = _bn_fold(s3, q3, count, params["g3"], params["b3"])

    # ---------------- stage 4: bn3 + residual add + relu ----------------
    out2d = pl.pallas_call(
        _bn_add_relu_kernel,
        grid=grid_rows,
        in_specs=[row_spec(Cout), row_spec(Cout), chan_spec(Cout), chan_spec(Cout)],
        out_specs=row_spec(Cout),
        out_shape=jax.ShapeDtypeStruct((R, Cout), x.dtype),
        compiler_params=parallel_params,
        cost_estimate=pl.CostEstimate(
            flops=3 * R * Cout, transcendentals=0,
            bytes_accessed=R * Cout * (8 + act_bytes)),
    )(y3, x2d, scale3, shift3)

    return out2d.reshape(N, H, W, Cout)


# ---------------- pure-JAX reference (for verification) ----------------
def bottleneck_ref(x, p):
    def bn(y, g, b):
        mean = y.mean(axis=(0, 1, 2), keepdims=True)
        var = ((y - mean) ** 2).mean(axis=(0, 1, 2), keepdims=True)
        return (y - mean) / jnp.sqrt(var + EPS) * g.reshape(1, 1, 1, -1) + b.reshape(1, 1, 1, -1)

    def conv1x1(y, w):
        return jnp.einsum("nhwc,cd->nhwd", y, w)

    def conv3x3(y, w):  # w: (3,3,cin,cout), HWIO
        return jax.lax.conv_general_dilated(
            y, w, window_strides=(1, 1), padding="SAME",
            dimension_numbers=("NHWC", "HWIO", "NHWC"))

    out = jax.nn.relu(bn(conv1x1(x, p["w1"]), p["g1"], p["b1"]))
    out = jax.nn.relu(bn(conv3x3(out, p["w2"]), p["g2"], p["b2"]))
    out = bn(conv1x1(out, p["w3"]), p["g3"], p["b3"])
    return jax.nn.relu(out + x)


if __name__ == "__main__":
    # Small deterministic config: planes=4 -> inplanes = 4*planes = 16.
    # NOTE: at these channel widths the lane axis is mostly padding; realistic
    # perf should be measured at planes >= 32 (C >= 128).
    N, H, W = 2, 16, 16
    planes = 4
    inplanes = planes * 4

    key = jax.random.PRNGKey(0)
    keys = jax.random.split(key, 10)

    params = {
        # conv weights stored matmul-style: (Cin, Cout); conv2 as (kh, kw, Cin, Cout)
        "w1": jax.random.normal(keys[0], (inplanes, planes), jnp.float32) * 0.1,
        "w2": jax.random.normal(keys[1], (3, 3, planes, planes), jnp.float32) * 0.1,
        "w3": jax.random.normal(keys[2], (planes, planes * 4), jnp.float32) * 0.1,
        # BatchNorm affine params, shaped (1, C) for direct broadcast in-kernel
        "g1": 1.0 + 0.1 * jax.random.normal(keys[3], (1, planes), jnp.float32),
        "b1": 0.1 * jax.random.normal(keys[4], (1, planes), jnp.float32),
        "g2": 1.0 + 0.1 * jax.random.normal(keys[5], (1, planes), jnp.float32),
        "b2": 0.1 * jax.random.normal(keys[6], (1, planes), jnp.float32),
        "g3": 1.0 + 0.1 * jax.random.normal(keys[7], (1, planes * 4), jnp.float32),
        "b3": 0.1 * jax.random.normal(keys[8], (1, planes * 4), jnp.float32),
    }

    x = jax.random.normal(keys[9], (N, H, W, inplanes), jnp.float32)

    ref = jax.block_until_ready(bottleneck_ref(x, params))

    # f32 matmuls: tight check against the reference (row_tile=256 -> 2 grid steps,
    # exercising the cross-tile BN stats accumulation; batch_tile=1 -> 2 steps in k2).
    fwd_f32 = jax.jit(functools.partial(
        bottleneck_forward, mm_dtype=jnp.float32, row_tile=256, batch_tile=1))
    out_f32 = jax.block_until_ready(fwd_f32(x, params))
    np.testing.assert_allclose(np.asarray(out_f32), np.asarray(ref),
                               rtol=1e-3, atol=1e-3)

    # bf16 matmul inputs / intermediates (f32 accumulation): fast path, looser check.
    fwd_bf16 = jax.jit(functools.partial(
        bottleneck_forward, mm_dtype=jnp.bfloat16, row_tile=256, batch_tile=1))
    out_bf16 = jax.block_until_ready(fwd_bf16(x, params))
    np.testing.assert_allclose(np.asarray(out_bf16), np.asarray(ref),
                               rtol=5e-2, atol=1e-1)

    print("KERNEL_OK")
</pallas_src>

<mosaic_0001>
module attributes {stable_mosaic.version = 11 : i64} {
  func.func @_conv1x1_stats_kernel(%arg0: i32, %arg1: memref<256x16xf32, #tpu.memory_space<vmem>>, %arg2: memref<16x4xf32, #tpu.memory_space<vmem>>, %arg3: memref<256x4xf32, #tpu.memory_space<vmem>>, %arg4: memref<1x4xf32, #tpu.memory_space<vmem>>, %arg5: memref<1x4xf32, #tpu.memory_space<vmem>>) attributes {dimension_semantics = [#tpu.dimension_semantics<arbitrary>], iteration_bounds = array<i64: 2>, scalar_prefetch = 0 : i64, scratch_operands = 0 : i64, tpu.core_type = #tpu.core_type<tc>, window_params = [{transform_indices = @transform_0, window_bounds = array<i64: 256, 16>}, {pipeline_mode = #tpu.pipeline_mode<synchronous>, transform_indices = @transform_1, window_bounds = array<i64: 16, 4>}, {transform_indices = @transform_2, window_bounds = array<i64: 256, 4>}, {pipeline_mode = #tpu.pipeline_mode<synchronous>, transform_indices = @transform_3, window_bounds = array<i64: 1, 4>}, {pipeline_mode = #tpu.pipeline_mode<synchronous>, transform_indices = @transform_4, window_bounds = array<i64: 1, 4>}]} {
    %c0_i32 = arith.constant 0 : i32
    %0 = arith.cmpi eq, %arg0, %c0_i32 : i32
    %1 = arith.extui %0 : i1 to i32
    %c0_i32_0 = arith.constant 0 : i32
    %2 = arith.cmpi ne, %1, %c0_i32_0 : i32
    scf.if %2 {
      %cst_16 = arith.constant 0.000000e+00 : f32
      %18 = vector.broadcast %cst_16 : f32 to vector<1x4xf32>
      %c0_17 = arith.constant 0 : index
      %c0_18 = arith.constant 0 : index
      %19 = vector.load %arg4[%c0_17, %c0_18] : memref<1x4xf32, #tpu.memory_space<vmem>>, vector<1x4xf32>
      tpu.vector_store %arg4[%c0_17, %c0_18], %18 {strides = array<i32>} : memref<1x4xf32, #tpu.memory_space<vmem>>, vector<1x4xf32>,
      %cst_19 = arith.constant 0.000000e+00 : f32
      %20 = vector.broadcast %cst_19 : f32 to vector<1x4xf32>
      %c0_20 = arith.constant 0 : index
      %c0_21 = arith.constant 0 : index
      %21 = vector.load %arg5[%c0_20, %c0_21] : memref<1x4xf32, #tpu.memory_space<vmem>>, vector<1x4xf32>
      tpu.vector_store %arg5[%c0_20, %c0_21], %20 {strides = array<i32>} : memref<1x4xf32, #tpu.memory_space<vmem>>, vector<1x4xf32>,
    } else {
    }
    %c0 = arith.constant 0 : index
    %c0_1 = arith.constant 0 : index
    %3 = vector.load %arg1[%c0, %c0_1] : memref<256x16xf32, #tpu.memory_space<vmem>>, vector<256x16xf32>
    %c0_2 = arith.constant 0 : index
    %c0_3 = arith.constant 0 : index
    %4 = vector.load %arg2[%c0_2, %c0_3] : memref<16x4xf32, #tpu.memory_space<vmem>>, vector<16x4xf32>
    %cst = arith.constant dense<0.000000e+00> : vector<256x4xf32>
    %5 = tpu.matmul %3, %4, %cst {dimension_numbers = #tpu.dot_dimension_numbers<[1], [0], [0], [1], [0, 0, 1, 1], [], []>} : vector<256x16xf32>, vector<16x4xf32>, vector<256x4xf32> -> vector<256x4xf32>
    %c0_4 = arith.constant 0 : index
    %c0_5 = arith.constant 0 : index
    %6 = vector.load %arg3[%c0_4, %c0_5] : memref<256x4xf32, #tpu.memory_space<vmem>>, vector<256x4xf32>
    tpu.vector_store %arg3[%c0_4, %c0_5], %5 {strides = array<i32>} : memref<256x4xf32, #tpu.memory_space<vmem>>, vector<256x4xf32>,
    %c0_6 = arith.constant 0 : index
    %c0_7 = arith.constant 0 : index
    %7 = vector.load %arg4[%c0_6, %c0_7] : memref<1x4xf32, #tpu.memory_space<vmem>>, vector<1x4xf32>
    %cst_8 = arith.constant dense<0.000000e+00> : vector<4xf32>
    %8 = vector.multi_reduction <add>, %5, %cst_8 [0] : vector<256x4xf32> to vector<4xf32>
    %9 = vector.shape_cast %8 : vector<4xf32> to vector<1x4xf32>
    %10 = arith.addf %7, %9 : vector<1x4xf32>
    %c0_9 = arith.constant 0 : index
    %c0_10 = arith.constant 0 : index
    %11 = vector.load %arg4[%c0_9, %c0_10] : memref<1x4xf32, #tpu.memory_space<vmem>>, vector<1x4xf32>
    tpu.vector_store %arg4[%c0_9, %c0_10], %10 {strides = array<i32>} : memref<1x4xf32, #tpu.memory_space<vmem>>, vector<1x4xf32>,
    %c0_11 = arith.constant 0 : index
    %c0_12 = arith.constant 0 : index
    %12 = vector.load %arg5[%c0_11, %c0_12] : memref<1x4xf32, #tpu.memory_space<vmem>>, vector<1x4xf32>
    %13 = arith.mulf %5, %5 : vector<256x4xf32>
    %cst_13 = arith.constant dense<0.000000e+00> : vector<4xf32>
    %14 = vector.multi_reduction <add>, %13, %cst_13 [0] : vector<256x4xf32> to vector<4xf32>
    %15 = vector.shape_cast %14 : vector<4xf32> to vector<1x4xf32>
    %16 = arith.addf %12, %15 : vector<1x4xf32>
    %c0_14 = arith.constant 0 : index
    %c0_15 = arith.constant 0 : index
    %17 = vector.load %arg5[%c0_14, %c0_15] : memref<1x4xf32, #tpu.memory_space<vmem>>, vector<1x4xf32>
    tpu.vector_store %arg5[%c0_14, %c0_15], %16 {strides = array<i32>} : memref<1x4xf32, #tpu.memory_space<vmem>>, vector<1x4xf32>,
    return
  }
  func.func @transform_0(%arg0: i32) -> (i32, i32) {
    %c0_i32 = arith.constant 0 : i32
    %c0_i32_0 = arith.constant 0 : i32
    return %arg0, %c0_i32 : i32, i32
  }
  func.func @transform_1(%arg0: i32) -> (i32, i32) {
    %c0_i32 = arith.constant 0 : i32
    %c0_i32_0 = arith.constant 0 : i32
    %c0_i32_1 = arith.constant 0 : i32
    return %c0_i32, %c0_i32_0 : i32, i32
  }
  func.func @transform_2(%arg0: i32) -> (i32, i32) {
    %c0_i32 = arith.constant 0 : i32
    %c0_i32_0 = arith.constant 0 : i32
    return %arg0, %c0_i32 : i32, i32
  }
  func.func @transform_3(%arg0: i32) -> (i32, i32) {
    %c0_i32 = arith.constant 0 : i32
    %c0_i32_0 = arith.constant 0 : i32
    %c0_i32_1 = arith.constant 0 : i32
    return %c0_i32, %c0_i32_0 : i32, i32
  }
  func.func @transform_4(%arg0: i32) -> (i32, i32) {
    %c0_i32 = arith.constant 0 : i32
    %c0_i32_0 = arith.constant 0 : i32
    %c0_i32_1 = arith.constant 0 : i32
    return %c0_i32, %c0_i32_0 : i32, i32
  }
}

module attributes {stable_mosaic.version = 11 : i64} {
  func.func @_bn_add_relu_kernel(%arg0: i32, %arg1: memref<256x16xf32, #tpu.memory_space<vmem>>, %arg2: memref<256x16xf32, #tpu.memory_space<vmem>>, %arg3: memref<1x16xf32, #tpu.memory_space<vmem>>, %arg4: memref<1x16xf32, #tpu.memory_space<vmem>>, %arg5: memref<256x16xf32, #tpu.memory_space<vmem>>) attributes {dimension_semantics = [#tpu.dimension_semantics<parallel>], iteration_bounds = array<i64: 2>, scalar_prefetch = 0 : i64, scratch_operands = 0 : i64, tpu.core_type = #tpu.core_type<tc>, window_params = [{transform_indices = @transform_0, window_bounds = array<i64: 256, 16>}, {transform_indices = @transform_1, window_bounds = array<i64: 256, 16>}, {pipeline_mode = #tpu.pipeline_mode<synchronous>, transform_indices = @transform_2, window_bounds = array<i64: 1, 16>}, {pipeline_mode = #tpu.pipeline_mode<synchronous>, transform_indices = @transform_3, window_bounds = array<i64: 1, 16>}, {transform_indices = @transform_4, window_bounds = array<i64: 256, 16>}]} {
    %c0 = arith.constant 0 : index
    %c0_0 = arith.constant 0 : index
    %0 = vector.load %arg1[%c0, %c0_0] : memref<256x16xf32, #tpu.memory_space<vmem>>, vector<256x16xf32>
    %c0_1 = arith.constant 0 : index
    %c0_2 = arith.constant 0 : index
    %1 = vector.load %arg3[%c0_1, %c0_2] : memref<1x16xf32, #tpu.memory_space<vmem>>, vector<1x16xf32>
    %2 = vector.broadcast %1 : vector<1x16xf32> to vector<256x16xf32>
    %3 = arith.mulf %0, %2 : vector<256x16xf32>
    %c0_3 = arith.constant 0 : index
    %c0_4 = arith.constant 0 : index
    %4 = vector.load %arg4[%c0_3, %c0_4] : memref<1x16xf32, #tpu.memory_space<vmem>>, vector<1x16xf32>
    %5 = vector.broadcast %4 : vector<1x16xf32> to vector<256x16xf32>
    %6 = arith.addf %3, %5 : vector<256x16xf32>
    %c0_5 = arith.constant 0 : index
    %c0_6 = arith.constant 0 : index
    %7 = vector.load %arg2[%c0_5, %c0_6] : memref<256x16xf32, #tpu.memory_space<vmem>>, vector<256x16xf32>
    %8 = arith.addf %6, %7 : vector<256x16xf32>
    %cst = arith.constant 0.000000e+00 : f32
    %9 = vector.broadcast %cst : f32 to vector<256x16xf32>
    %10 = arith.maximumf %8, %9 : vector<256x16xf32>
    %c0_7 = arith.constant 0 : index
    %c0_8 = arith.constant 0 : index
    %11 = vector.load %arg5[%c0_7, %c0_8] : memref<256x16xf32, #tpu.memory_space<vmem>>, vector<256x16xf32>
    tpu.vector_store %arg5[%c0_7, %c0_8], %10 {strides = array<i32>} : memref<256x16xf32, #tpu.memory_space<vmem>>, vector<256x16xf32>,
    return
  }
  func.func @transform_0(%arg0: i32) -> (i32, i32) {
    %c0_i32 = arith.constant 0 : i32
    %c0_i32_0 = arith.constant 0 : i32
    return %arg0, %c0_i32 : i32, i32
  }
  func.func @transform_1(%arg0: i32) -> (i32, i32) {
    %c0_i32 = arith.constant 0 : i32
    %c0_i32_0 = arith.constant 0 : i32
    return %arg0, %c0_i32 : i32, i32
  }
  func.func @transform_2(%arg0: i32) -> (i32, i32) {
    %c0_i32 = arith.constant 0 : i32
    %c0_i32_0 = arith.constant 0 : i32
    %c0_i32_1 = arith.constant 0 : i32
    return %c0_i32, %c0_i32_0 : i32, i32
  }
  func.func @transform_3(%arg0: i32) -> (i32, i32) {
    %c0_i32 = arith.constant 0 : i32
    %c0_i32_0 = arith.constant 0 : i32
    %c0_i32_1 = arith.constant 0 : i32
    return %c0_i32, %c0_i32_0 : i32, i32
  }
  func.func @transform_4(%arg0: i32) -> (i32, i32) {
    %c0_i32 = arith.constant 0 : i32
    %c0_i32_0 = arith.constant 0 : i32
    return %arg0, %c0_i32 : i32, i32
  }
}

module attributes {stable_mosaic.version = 11 : i64} {
  func.func @_bn_relu_conv1x1_stats_kernel(%arg0: i32, %arg1: memref<256x4xf32, #tpu.memory_space<vmem>>, %arg2: memref<1x4xf32, #tpu.memory_space<vmem>>, %arg3: memref<1x4xf32, #tpu.memory_space<vmem>>, %arg4: memref<4x16xf32, #tpu.memory_space<vmem>>, %arg5: memref<256x16xf32, #tpu.memory_space<vmem>>, %arg6: memref<1x16xf32, #tpu.memory_space<vmem>>, %arg7: memref<1x16xf32, #tpu.memory_space<vmem>>) attributes {dimension_semantics = [#tpu.dimension_semantics<arbitrary>], iteration_bounds = array<i64: 2>, scalar_prefetch = 0 : i64, scratch_operands = 0 : i64, tpu.core_type = #tpu.core_type<tc>, window_params = [{transform_indices = @transform_0, window_bounds = array<i64: 256, 4>}, {pipeline_mode = #tpu.pipeline_mode<synchronous>, transform_indices = @transform_1, window_bounds = array<i64: 1, 4>}, {pipeline_mode = #tpu.pipeline_mode<synchronous>, transform_indices = @transform_2, window_bounds = array<i64: 1, 4>}, {pipeline_mode = #tpu.pipeline_mode<synchronous>, transform_indices = @transform_3, window_bounds = array<i64: 4, 16>}, {transform_indices = @transform_4, window_bounds = array<i64: 256, 16>}, {pipeline_mode = #tpu.pipeline_mode<synchronous>, transform_indices = @transform_5, window_bounds = array<i64: 1, 16>}, {pipeline_mode = #tpu.pipeline_mode<synchronous>, transform_indices = @transform_6, window_bounds = array<i64: 1, 16>}]} {
    %c0_i32 = arith.constant 0 : i32
    %0 = arith.cmpi eq, %arg0, %c0_i32 : i32
    %1 = arith.extui %0 : i1 to i32
    %c0_i32_0 = arith.constant 0 : i32
    %2 = arith.cmpi ne, %1, %c0_i32_0 : i32
    scf.if %2 {
      %cst_21 = arith.constant 0.000000e+00 : f32
      %26 = vector.broadcast %cst_21 : f32 to vector<1x16xf32>
      %c0_22 = arith.constant 0 : index
      %c0_23 = arith.constant 0 : index
      %27 = vector.load %arg6[%c0_22, %c0_23] : memref<1x16xf32, #tpu.memory_space<vmem>>, vector<1x16xf32>
      tpu.vector_store %arg6[%c0_22, %c0_23], %26 {strides = array<i32>} : memref<1x16xf32, #tpu.memory_space<vmem>>, vector<1x16xf32>,
      %cst_24 = arith.constant 0.000000e+00 : f32
      %28 = vector.broadcast %cst_24 : f32 to vector<1x16xf32>
      %c0_25 = arith.constant 0 : index
      %c0_26 = arith.constant 0 : index
      %29 = vector.load %arg7[%c0_25, %c0_26] : memref<1x16xf32, #tpu.memory_space<vmem>>, vector<1x16xf32>
      tpu.vector_store %arg7[%c0_25, %c0_26], %28 {strides = array<i32>} : memref<1x16xf32, #tpu.memory_space<vmem>>, vector<1x16xf32>,
    } else {
    }
    %c0 = arith.constant 0 : index
    %c0_1 = arith.constant 0 : index
    %3 = vector.load %arg1[%c0, %c0_1] : memref<256x4xf32, #tpu.memory_space<vmem>>, vector<256x4xf32>
    %c0_2 = arith.constant 0 : index
    %c0_3 = arith.constant 0 : index
    %4 = vector.load %arg2[%c0_2, %c0_3] : memref<1x4xf32, #tpu.memory_space<vmem>>, vector<1x4xf32>
    %5 = vector.broadcast %4 : vector<1x4xf32> to vector<256x4xf32>
    %6 = arith.mulf %3, %5 : vector<256x4xf32>
    %c0_4 = arith.constant 0 : index
    %c0_5 = arith.constant 0 : index
    %7 = vector.load %arg3[%c0_4, %c0_5] : memref<1x4xf32, #tpu.memory_space<vmem>>, vector<1x4xf32>
    %8 = vector.broadcast %7 : vector<1x4xf32> to vector<256x4xf32>
    %9 = arith.addf %6, %8 : vector<256x4xf32>
    %cst = arith.constant 0.000000e+00 : f32
    %10 = vector.broadcast %cst : f32 to vector<256x4xf32>
    %11 = arith.maximumf %9, %10 : vector<256x4xf32>
    %c0_6 = arith.constant 0 : index
    %c0_7 = arith.constant 0 : index
    %12 = vector.load %arg4[%c0_6, %c0_7] : memref<4x16xf32, #tpu.memory_space<vmem>>, vector<4x16xf32>
    %cst_8 = arith.constant dense<0.000000e+00> : vector<256x16xf32>
    %13 = tpu.matmul %11, %12, %cst_8 {dimension_numbers = #tpu.dot_dimension_numbers<[1], [0], [0], [1], [0, 0, 1, 1], [], []>} : vector<256x4xf32>, vector<4x16xf32>, vector<256x16xf32> -> vector<256x16xf32>
    %c0_9 = arith.constant 0 : index
    %c0_10 = arith.constant 0 : index
    %14 = vector.load %arg5[%c0_9, %c0_10] : memref<256x16xf32, #tpu.memory_space<vmem>>, vector<256x16xf32>
    tpu.vector_store %arg5[%c0_9, %c0_10], %13 {strides = array<i32>} : memref<256x16xf32, #tpu.memory_space<vmem>>, vector<256x16xf32>,
    %c0_11 = arith.constant 0 : index
    %c0_12 = arith.constant 0 : index
    %15 = vector.load %arg6[%c0_11, %c0_12] : memref<1x16xf32, #tpu.memory_space<vmem>>, vector<1x16xf32>
    %cst_13 = arith.constant dense<0.000000e+00> : vector<16xf32>
    %16 = vector.multi_reduction <add>, %13, %cst_13 [0] : vector<256x16xf32> to vector<16xf32>
    %17 = vector.shape_cast %16 : vector<16xf32> to vector<1x16xf32>
    %18 = arith.addf %15, %17 : vector<1x16xf32>
    %c0_14 = arith.constant 0 : index
    %c0_15 = arith.constant 0 : index
    %19 = vector.load %arg6[%c0_14, %c0_15] : memref<1x16xf32, #tpu.memory_space<vmem>>, vector<1x16xf32>
    tpu.vector_store %arg6[%c0_14, %c0_15], %18 {strides = array<i32>} : memref<1x16xf32, #tpu.memory_space<vmem>>, vector<1x16xf32>,
    %c0_16 = arith.constant 0 : index
    %c0_17 = arith.constant 0 : index
    %20 = vector.load %arg7[%c0_16, %c0_17] : memref<1x16xf32, #tpu.memory_space<vmem>>, vector<1x16xf32>
    %21 = arith.mulf %13, %13 : vector<256x16xf32>
    %cst_18 = arith.constant dense<0.000000e+00> : vector<16xf32>
    %22 = vector.multi_reduction <add>, %21, %cst_18 [0] : vector<256x16xf32> to vector<16xf32>
    %23 = vector.shape_cast %22 : vector<16xf32> to vector<1x16xf32>
    %24 = arith.addf %20, %23 : vector<1x16xf32>
    %c0_19 = arith.constant 0 : index
    %c0_20 = arith.constant 0 : index
    %25 = vector.load %arg7[%c0_19, %c0_20] : memref<1x16xf32, #tpu.memory_space<vmem>>, vector<1x16xf32>
    tpu.vector_store %arg7[%c0_19, %c0_20], %24 {strides = array<i32>} : memref<1x16xf32, #tpu.memory_space<vmem>>, vector<1x16xf32>,
    return
  }
  func.func @transform_0(%arg0: i32) -> (i32, i32) {
    %c0_i32 = arith.constant 0 : i32
    %c0_i32_0 = arith.constant 0 : i32
    return %arg0, %c0_i32 : i32, i32
  }
  func.func @transform_1(%arg0: i32) -> (i32, i32) {
    %c0_i32 = arith.constant 0 : i32
    %c0_i32_0 = arith.constant 0 : i32
    %c0_i32_1 = arith.constant 0 : i32
    return %c0_i32, %c0_i32_0 : i32, i32
  }
  func.func @transform_2(%arg0: i32) -> (i32, i32) {
    %c0_i32 = arith.constant 0 : i32
    %c0_i32_0 = arith.constant 0 : i32
    %c0_i32_1 = arith.constant 0 : i32
    return %c0_i32, %c0_i32_0 : i32, i32
  }
  func.func @transform_3(%arg0: i32) -> (i32, i32) {
    %c0_i32 = arith.constant 0 : i32
    %c0_i32_0 = arith.constant 0 : i32
    %c0_i32_1 = arith.constant 0 : i32
    return %c0_i32, %c0_i32_0 : i32, i32
  }
  func.func @transform_4(%arg0: i32) -> (i32, i32) {
    %c0_i32 = arith.constant 0 : i32
    %c0_i32_0 = arith.constant 0 : i32
    return %arg0, %c0_i32 : i32, i32
  }
  func.func @transform_5(%arg0: i32) -> (i32, i32) {
    %c0_i32 = arith.constant 0 : i32
    %c0_i32_0 = arith.constant 0 : i32
    %c0_i32_1 = arith.constant 0 : i32
    return %c0_i32, %c0_i32_0 : i32, i32
  }
  func.func @transform_6(%arg0: i32) -> (i32, i32) {
    %c0_i32 = arith.constant 0 : i32
    %c0_i32_0 = arith.constant 0 : i32
    %c0_i32_1 = arith.constant 0 : i32
    return %c0_i32, %c0_i32_0 : i32, i32
  }
}

module attributes {stable_mosaic.version = 11 : i64} {
  func.func @_bn_relu_conv3x3_stats_kernel(%arg0: i32, %arg1: memref<1x16x16x4xf32, #tpu.memory_space<vmem>>, %arg2: memref<1x4xf32, #tpu.memory_space<vmem>>, %arg3: memref<1x4xf32, #tpu.memory_space<vmem>>, %arg4: memref<3x12x4xf32, #tpu.memory_space<vmem>>, %arg5: memref<1x16x16x4xf32, #tpu.memory_space<vmem>>, %arg6: memref<1x4xf32, #tpu.memory_space<vmem>>, %arg7: memref<1x4xf32, #tpu.memory_space<vmem>>, %arg8: memref<1x18x18x4xf32, #tpu.memory_space<vmem>>) attributes {dimension_semantics = [#tpu.dimension_semantics<arbitrary>], iteration_bounds = array<i64: 2>, scalar_prefetch = 0 : i64, scratch_operands = 1 : i64, tpu.core_type = #tpu.core_type<tc>, window_params = [{transform_indices = @transform_0, window_bounds = array<i64: 1, 16, 16, 4>}, {pipeline_mode = #tpu.pipeline_mode<synchronous>, transform_indices = @transform_1, window_bounds = array<i64: 1, 4>}, {pipeline_mode = #tpu.pipeline_mode<synchronous>, transform_indices = @transform_2, window_bounds = array<i64: 1, 4>}, {pipeline_mode = #tpu.pipeline_mode<synchronous>, transform_indices = @transform_3, window_bounds = array<i64: 3, 12, 4>}, {transform_indices = @transform_4, window_bounds = array<i64: 1, 16, 16, 4>}, {pipeline_mode = #tpu.pipeline_mode<synchronous>, transform_indices = @transform_5, window_bounds = array<i64: 1, 4>}, {pipeline_mode = #tpu.pipeline_mode<synchronous>, transform_indices = @transform_6, window_bounds = array<i64: 1, 4>}]} {
    %c0_i32 = arith.constant 0 : i32
    %0 = arith.cmpi eq, %arg0, %c0_i32 : i32
    %1 = arith.extui %0 : i1 to i32
    %c0_i32_0 = arith.constant 0 : i32
    %2 = arith.cmpi ne, %1, %c0_i32_0 : i32
    scf.if %2 {
      %cst_43 = arith.constant 0.000000e+00 : f32
      %60 = vector.broadcast %cst_43 : f32 to vector<1x4xf32>
      %c0_44 = arith.constant 0 : index
      %c0_45 = arith.constant 0 : index
      %61 = vector.load %arg6[%c0_44, %c0_45] : memref<1x4xf32, #tpu.memory_space<vmem>>, vector<1x4xf32>
      tpu.vector_store %arg6[%c0_44, %c0_45], %60 {strides = array<i32>} : memref<1x4xf32, #tpu.memory_space<vmem>>, vector<1x4xf32>,
      %cst_46 = arith.constant 0.000000e+00 : f32
      %62 = vector.broadcast %cst_46 : f32 to vector<1x4xf32>
      %c0_47 = arith.constant 0 : index
      %c0_48 = arith.constant 0 : index
      %63 = vector.load %arg7[%c0_47, %c0_48] : memref<1x4xf32, #tpu.memory_space<vmem>>, vector<1x4xf32>
      tpu.vector_store %arg7[%c0_47, %c0_48], %62 {strides = array<i32>} : memref<1x4xf32, #tpu.memory_space<vmem>>, vector<1x4xf32>,
      %cst_49 = arith.constant 0.000000e+00 : f32
      %64 = vector.broadcast %cst_49 : f32 to vector<1x1x18x4xf32>
      %c0_50 = arith.constant 0 : index
      %c0_51 = arith.constant 0 : index
      %c0_52 = arith.constant 0 : index
      %c0_53 = arith.constant 0 : index
      %65 = vector.load %arg8[%c0_50, %c0_51, %c0_52, %c0_53] : memref<1x18x18x4xf32, #tpu.memory_space<vmem>>, vector<1x1x18x4xf32>
      tpu.vector_store %arg8[%c0_50, %c0_51, %c0_52, %c0_53], %64 {strides = array<i32>} : memref<1x18x18x4xf32, #tpu.memory_space<vmem>>, vector<1x1x18x4xf32>,
      %cst_54 = arith.constant 0.000000e+00 : f32
      %66 = vector.broadcast %cst_54 : f32 to vector<1x1x18x4xf32>
      %c0_55 = arith.constant 0 : index
      %c17 = arith.constant 17 : index
      %c0_56 = arith.constant 0 : index
      %c0_57 = arith.constant 0 : index
      %67 = vector.load %arg8[%c0_55, %c17, %c0_56, %c0_57] : memref<1x18x18x4xf32, #tpu.memory_space<vmem>>, vector<1x1x18x4xf32>
      tpu.vector_store %arg8[%c0_55, %c17, %c0_56, %c0_57], %66 {strides = array<i32>} : memref<1x18x18x4xf32, #tpu.memory_space<vmem>>, vector<1x1x18x4xf32>,
      %cst_58 = arith.constant 0.000000e+00 : f32
      %68 = vector.broadcast %cst_58 : f32 to vector<1x16x1x4xf32>
      %c0_59 = arith.constant 0 : index
      %c1_60 = arith.constant 1 : index
      %c0_61 = arith.constant 0 : index
      %c0_62 = arith.constant 0 : index
      %69 = vector.load %arg8[%c0_59, %c1_60, %c0_61, %c0_62] : memref<1x18x18x4xf32, #tpu.memory_space<vmem>>, vector<1x16x1x4xf32>
      tpu.vector_store %arg8[%c0_59, %c1_60, %c0_61, %c0_62], %68 {strides = array<i32>} : memref<1x18x18x4xf32, #tpu.memory_space<vmem>>, vector<1x16x1x4xf32>,
      %cst_63 = arith.constant 0.000000e+00 : f32
      %70 = vector.broadcast %cst_63 : f32 to vector<1x16x1x4xf32>
      %c0_64 = arith.constant 0 : index
      %c1_65 = arith.constant 1 : index
      %c17_66 = arith.constant 17 : index
      %c0_67 = arith.constant 0 : index
      %71 = vector.load %arg8[%c0_64, %c1_65, %c17_66, %c0_67] : memref<1x18x18x4xf32, #tpu.memory_space<vmem>>, vector<1x16x1x4xf32>
      tpu.vector_store %arg8[%c0_64, %c1_65, %c17_66, %c0_67], %70 {strides = array<i32>} : memref<1x18x18x4xf32, #tpu.memory_space<vmem>>, vector<1x16x1x4xf32>,
    } else {
    }
    %c0 = arith.constant 0 : index
    %c0_1 = arith.constant 0 : index
    %c0_2 = arith.constant 0 : index
    %c0_3 = arith.constant 0 : index
    %3 = vector.load %arg1[%c0, %c0_1, %c0_2, %c0_3] : memref<1x16x16x4xf32, #tpu.memory_space<vmem>>, vector<1x16x16x4xf32>
    %c0_4 = arith.constant 0 : index
    %c0_5 = arith.constant 0 : index
    %4 = vector.load %arg2[%c0_4, %c0_5] : memref<1x4xf32, #tpu.memory_space<vmem>>, vector<1x4xf32>
    %5 = vector.shape_cast %4 : vector<1x4xf32> to vector<1x1x1x4xf32>
    %6 = vector.broadcast %5 : vector<1x1x1x4xf32> to vector<1x16x16x4xf32>
    %7 = arith.mulf %3, %6 : vector<1x16x16x4xf32>
    %c0_6 = arith.constant 0 : index
    %c0_7 = arith.constant 0 : index
    %8 = vector.load %arg3[%c0_6, %c0_7] : memref<1x4xf32, #tpu.memory_space<vmem>>, vector<1x4xf32>
    %9 = vector.shape_cast %8 : vector<1x4xf32> to vector<1x1x1x4xf32>
    %10 = vector.broadcast %9 : vector<1x1x1x4xf32> to vector<1x16x16x4xf32>
    %11 = arith.addf %7, %10 : vector<1x16x16x4xf32>
    %cst = arith.constant 0.000000e+00 : f32
    %12 = vector.broadcast %cst : f32 to vector<1x16x16x4xf32>
    %13 = arith.maximumf %11, %12 : vector<1x16x16x4xf32>
    %c0_8 = arith.constant 0 : index
    %c1 = arith.constant 1 : index
    %c1_9 = arith.constant 1 : index
    %c0_10 = arith.constant 0 : index
    %14 = vector.load %arg8[%c0_8, %c1, %c1_9, %c0_10] : memref<1x18x18x4xf32, #tpu.memory_space<vmem>>, vector<1x16x16x4xf32>
    tpu.vector_store %arg8[%c0_8, %c1, %c1_9, %c0_10], %13 {strides = array<i32>} : memref<1x18x18x4xf32, #tpu.memory_space<vmem>>, vector<1x16x16x4xf32>,
    %c0_11 = arith.constant 0 : index
    %c0_12 = arith.constant 0 : index
    %c0_13 = arith.constant 0 : index
    %15 = vector.load %arg4[%c0_11, %c0_12, %c0_13] : memref<3x12x4xf32, #tpu.memory_space<vmem>>, vector<3x12x4xf32>
    %cst_14 = arith.constant 0.000000e+00 : f32
    %16 = vector.broadcast %cst_14 : f32 to vector<256x4xf32>
    %c0_15 = arith.constant 0 : index
    %c0_16 = arith.constant 0 : index
    %c0_17 = arith.constant 0 : index
    %c0_18 = arith.constant 0 : index
    %17 = vector.load %arg8[%c0_15, %c0_16, %c0_17, %c0_18] : memref<1x18x18x4xf32, #tpu.memory_space<vmem>>, vector<1x16x18x4xf32>
    %18 = vector.extract_strided_slice %17 {offsets = [0, 0, 0, 0], sizes = [1, 16, 16, 4], strides = [1, 1, 1, 1]} : vector<1x16x18x4xf32> to vector<1x16x16x4xf32>
    %19 = vector.extract_strided_slice %17 {offsets = [0, 0, 1, 0], sizes = [1, 16, 16, 4], strides = [1, 1, 1, 1]} : vector<1x16x18x4xf32> to vector<1x16x16x4xf32>
    %20 = vector.extract_strided_slice %17 {offsets = [0, 0, 2, 0], sizes = [1, 16, 16, 4], strides = [1, 1, 1, 1]} : vector<1x16x18x4xf32> to vector<1x16x16x4xf32>
    %21 = tpu.concatenate %18, %19, %20 in 3 : vector<1x16x16x4xf32>, vector<1x16x16x4xf32>, vector<1x16x16x4xf32> -> vector<1x16x16x12xf32>
    %22 = vector.shape_cast %21 : vector<1x16x16x12xf32> to vector<256x12xf32>
    %23 = vector.extract_strided_slice %15 {offsets = [0, 0, 0], sizes = [1, 12, 4], strides = [1, 1, 1]} : vector<3x12x4xf32> to vector<1x12x4xf32>
    %24 = vector.shape_cast %23 : vector<1x12x4xf32> to vector<12x4xf32>
    %cst_19 = arith.constant dense<0.000000e+00> : vector<256x4xf32>
    %25 = tpu.matmul %22, %24, %cst_19 {dimension_numbers = #tpu.dot_dimension_numbers<[1], [0], [0], [1], [0, 0, 1, 1], [], []>} : vector<256x12xf32>, vector<12x4xf32>, vector<256x4xf32> -> vector<256x4xf32>
    %26 = arith.addf %16, %25 : vector<256x4xf32>
    %c0_20 = arith.constant 0 : index
    %c1_21 = arith.constant 1 : index
    %c0_22 = arith.constant 0 : index
    %c0_23 = arith.constant 0 : index
    %27 = vector.load %arg8[%c0_20, %c1_21, %c0_22, %c0_23] : memref<1x18x18x4xf32, #tpu.memory_space<vmem>>, vector<1x16x18x4xf32>
    %28 = vector.extract_strided_slice %27 {offsets = [0, 0, 0, 0], sizes = [1, 16, 16, 4], strides = [1, 1, 1, 1]} : vector<1x16x18x4xf32> to vector<1x16x16x4xf32>
    %29 = vector.extract_strided_slice %27 {offsets = [0, 0, 1, 0], sizes = [1, 16, 16, 4], strides = [1, 1, 1, 1]} : vector<1x16x18x4xf32> to vector<1x16x16x4xf32>
    %30 = vector.extract_strided_slice %27 {offsets = [0, 0, 2, 0], sizes = [1, 16, 16, 4], strides = [1, 1, 1, 1]} : vector<1x16x18x4xf32> to vector<1x16x16x4xf32>
    %31 = tpu.concatenate %28, %29, %30 in 3 : vector<1x16x16x4xf32>, vector<1x16x16x4xf32>, vector<1x16x16x4xf32> -> vector<1x16x16x12xf32>
    %32 = vector.shape_cast %31 : vector<1x16x16x12xf32> to vector<256x12xf32>
    %33 = vector.extract_strided_slice %15 {offsets = [1, 0, 0], sizes = [1, 12, 4], strides = [1, 1, 1]} : vector<3x12x4xf32> to vector<1x12x4xf32>
    %34 = vector.shape_cast %33 : vector<1x12x4xf32> to vector<12x4xf32>
    %cst_24 = arith.constant dense<0.000000e+00> : vector<256x4xf32>
    %35 = tpu.matmul %32, %34, %cst_24 {dimension_numbers = #tpu.dot_dimension_numbers<[1], [0], [0], [1], [0, 0, 1, 1], [], []>} : vector<256x12xf32>, vector<12x4xf32>, vector<256x4xf32> -> vector<256x4xf32>
    %36 = arith.addf %26, %35 : vector<256x4xf32>
    %c0_25 = arith.constant 0 : index
    %c2 = arith.constant 2 : index
    %c0_26 = arith.constant 0 : index
    %c0_27 = arith.constant 0 : index
    %37 = vector.load %arg8[%c0_25, %c2, %c0_26, %c0_27] : memref<1x18x18x4xf32, #tpu.memory_space<vmem>>, vector<1x16x18x4xf32>
    %38 = vector.extract_strided_slice %37 {offsets = [0, 0, 0, 0], sizes = [1, 16, 16, 4], strides = [1, 1, 1, 1]} : vector<1x16x18x4xf32> to vector<1x16x16x4xf32>
    %39 = vector.extract_strided_slice %37 {offsets = [0, 0, 1, 0], sizes = [1, 16, 16, 4], strides = [1, 1, 1, 1]} : vector<1x16x18x4xf32> to vector<1x16x16x4xf32>
    %40 = vector.extract_strided_slice %37 {offsets = [0, 0, 2, 0], sizes = [1, 16, 16, 4], strides = [1, 1, 1, 1]} : vector<1x16x18x4xf32> to vector<1x16x16x4xf32>
    %41 = tpu.concatenate %38, %39, %40 in 3 : vector<1x16x16x4xf32>, vector<1x16x16x4xf32>, vector<1x16x16x4xf32> -> vector<1x16x16x12xf32>
    %42 = vector.shape_cast %41 : vector<1x16x16x12xf32> to vector<256x12xf32>
    %43 = vector.extract_strided_slice %15 {offsets = [2, 0, 0], sizes = [1, 12, 4], strides = [1, 1, 1]} : vector<3x12x4xf32> to vector<1x12x4xf32>
    %44 = vector.shape_cast %43 : vector<1x12x4xf32> to vector<12x4xf32>
    %cst_28 = arith.constant dense<0.000000e+00> : vector<256x4xf32>
    %45 = tpu.matmul %42, %44, %cst_28 {dimension_numbers = #tpu.dot_dimension_numbers<[1], [0], [0], [1], [0, 0, 1, 1], [], []>} : vector<256x12xf32>, vector<12x4xf32>, vector<256x4xf32> -> vector<256x4xf32>
    %46 = arith.addf %36, %45 : vector<256x4xf32>
    %47 = vector.shape_cast %46 : vector<256x4xf32> to vector<1x16x16x4xf32>
    %c0_29 = arith.constant 0 : index
    %c0_30 = arith.constant 0 : index
    %c0_31 = arith.constant 0 : index
    %c0_32 = arith.constant 0 : index
    %48 = vector.load %arg5[%c0_29, %c0_30, %c0_31, %c0_32] : memref<1x16x16x4xf32, #tpu.memory_space<vmem>>, vector<1x16x16x4xf32>
    tpu.vector_store %arg5[%c0_29, %c0_30, %c0_31, %c0_32], %47 {strides = array<i32>} : memref<1x16x16x4xf32, #tpu.memory_space<vmem>>, vector<1x16x16x4xf32>,
    %c0_33 = arith.constant 0 : index
    %c0_34 = arith.constant 0 : index
    %49 = vector.load %arg6[%c0_33, %c0_34] : memref<1x4xf32, #tpu.memory_space<vmem>>, vector<1x4xf32>
    %cst_35 = arith.constant dense<0.000000e+00> : vector<4xf32>
    %50 = vector.multi_reduction <add>, %46, %cst_35 [0] : vector<256x4xf32> to vector<4xf32>
    %51 = vector.shape_cast %50 : vector<4xf32> to vector<1x4xf32>
    %52 = arith.addf %49, %51 : vector<1x4xf32>
    %c0_36 = arith.constant 0 : index
    %c0_37 = arith.constant 0 : index
    %53 = vector.load %arg6[%c0_36, %c0_37] : memref<1x4xf32, #tpu.memory_space<vmem>>, vector<1x4xf32>
    tpu.vector_store %arg6[%c0_36, %c0_37], %52 {strides = array<i32>} : memref<1x4xf32, #tpu.memory_space<vmem>>, vector<1x4xf32>,
    %c0_38 = arith.constant 0 : index
    %c0_39 = arith.constant 0 : index
    %54 = vector.load %arg7[%c0_38, %c0_39] : memref<1x4xf32, #tpu.memory_space<vmem>>, vector<1x4xf32>
    %55 = arith.mulf %46, %46 : vector<256x4xf32>
    %cst_40 = arith.constant dense<0.000000e+00> : vector<4xf32>
    %56 = vector.multi_reduction <add>, %55, %cst_40 [0] : vector<256x4xf32> to vector<4xf32>
    %57 = vector.shape_cast %56 : vector<4xf32> to vector<1x4xf32>
    %58 = arith.addf %54, %57 : vector<1x4xf32>
    %c0_41 = arith.constant 0 : index
    %c0_42 = arith.constant 0 : index
    %59 = vector.load %arg7[%c0_41, %c0_42] : memref<1x4xf32, #tpu.memory_space<vmem>>, vector<1x4xf32>
    tpu.vector_store %arg7[%c0_41, %c0_42], %58 {strides = array<i32>} : memref<1x4xf32, #tpu.memory_space<vmem>>, vector<1x4xf32>,
    return
  }
  func.func @transform_0(%arg0: i32) -> (i32, i32, i32, i32) {
    %c0_i32 = arith.constant 0 : i32
    %c0_i32_0 = arith.constant 0 : i32
    %c0_i32_1 = arith.constant 0 : i32
    %c0_i32_2 = arith.constant 0 : i32
    return %arg0, %c0_i32, %c0_i32_0, %c0_i32_1 : i32, i32, i32, i32
  }
  func.func @transform_1(%arg0: i32) -> (i32, i32) {
    %c0_i32 = arith.constant 0 : i32
    %c0_i32_0 = arith.constant 0 : i32
    %c0_i32_1 = arith.constant 0 : i32
    return %c0_i32, %c0_i32_0 : i32, i32
  }
  func.func @transform_2(%arg0: i32) -> (i32, i32) {
    %c0_i32 = arith.constant 0 : i32
    %c0_i32_0 = arith.constant 0 : i32
    %c0_i32_1 = arith.constant 0 : i32
    return %c0_i32, %c0_i32_0 : i32, i32
  }
  func.func @transform_3(%arg0: i32) -> (i32, i32, i32) {
    %c0_i32 = arith.constant 0 : i32
    %c0_i32_0 = arith.constant 0 : i32
    %c0_i32_1 = arith.constant 0 : i32
    %c0_i32_2 = arith.constant 0 : i32
    return %c0_i32, %c0_i32_0, %c0_i32_1 : i32, i32, i32
  }
  func.func @transform_4(%arg0: i32) -> (i32, i32, i32, i32) {
    %c0_i32 = arith.constant 0 : i32
    %c0_i32_0 = arith.constant 0 : i32
    %c0_i32_1 = arith.constant 0 : i32
    %c0_i32_2 = arith.constant 0 : i32
    return %arg0, %c0_i32, %c0_i32_0, %c0_i32_1 : i32, i32, i32, i32
  }
  func.func @transform_5(%arg0: i32) -> (i32, i32) {
    %c0_i32 = arith.constant 0 : i32
    %c0_i32_0 = arith.constant 0 : i32
    %c0_i32_1 = arith.constant 0 : i32
    return %c0_i32, %c0_i32_0 : i32, i32
  }
  func.func @transform_6(%arg0: i32) -> (i32, i32) {
    %c0_i32 = arith.constant 0 : i32
    %c0_i32_0 = arith.constant 0 : i32
    %c0_i32_1 = arith.constant 0 : i32
    return %c0_i32, %c0_i32_0 : i32, i32
  }
}

</mosaic_0001>

<llo_original>
// kernel: bottleneck_forward.7
$region0: #{bottleneck_forward.7}
  #allocation0 [shape = 'u32[]', space=smem, size = 0x4, offset = 0x4, fixed_abs, tag = 'smem constant byte address 0x4 - core index']
  #allocation1 [shape = 'u32[72,128]{1,0:T(1,128)}', space=vmem, size = 0x9000, scoped, tag = 'internal scratch']
  %s0 = inlined_call_operand.vmem [shape: f32[512,16], index: 0, kind: input, shape index: {}]
  %s1 = inlined_call_operand.hbm [shape: f32[512,16], index: 1, kind: input, shape index: {}]
  %s2 = inlined_call_operand.vmem [shape: f32[1,16], index: 2, kind: input, shape index: {}]
  %s3 = inlined_call_operand.vmem [shape: f32[1,16], index: 3, kind: input, shape index: {}]
  %s4 = inlined_call_operand.hbm [shape: f32[512,16], index: 4, kind: output, shape index: {}]
  %s5 = sld [smem:[#allocation0]]
  $region53: #{bottleneck_forward.7} parent=0
    _
  %s7 = ssub.s32 1, %s5
  %s8 = scalar_select 0, %s7, %s5
  $region1: #{bottleneck_forward.7} parent=0
    #allocation2 [shape = 'u8[262144]{0}', space=vmem, size = 0x40000, scoped, tag = 'input window, operand 1']
    #allocation3 [shape = 's32[2]{0}', space=sflag, size = 0x8, scoped, tag = 'scoped memory for bottleneck_forward.7']
    #allocation4 [shape = 's32[2]{0}', space=sflag, size = 0x8, scoped, tag = 'scoped memory for bottleneck_forward.7']
    #allocation5 [shape = 'u8[262144]{0}', space=vmem, size = 0x40000, scoped, tag = 'output window, operand 0']
    %9 = vsyncpa [#allocation3], 0
    %s10 = scalar_lea.sflag [#allocation3], 1
    %11 = vsyncpa %s10, 0
    %12 = vsyncpa [#allocation4], 0
    %s13 = scalar_lea.sflag [#allocation4], 1
    %14 = vsyncpa %s13, 0
    loop: start=0, step=1, limit=4
    $region2: #{bottleneck_forward.7} parent=1 // loop_pre_header
      _
    $region3: #{bottleneck_forward.7} parent=1 // loop_header
      %s16 = sphi 0, %s20
      %p17 = scmp.ge.s32.totalorder %s16, 4
      %s26 = sphi 0, %s28
      %s29 = sphi 0, %s26
      %s30 = sphi 0, %s29
      %s46 = sphi 0, %s30
      %s52 = sphi 0, %s54
      %s55 = sphi 0, %s52
      %s56 = sphi 0, %s55
      %s72 = sphi 0, %s56
      %s76 = sphi 0, %s76
      %s78 = sphi 0, %s76
      %s79 = sphi 0, %s78
      %s93 = sphi 0, %s79
      %s97 = sphi 0, %s97
      %s99 = sphi 0, %s97
      %s100 = sphi 0, %s99
      %s114 = sphi 0, %s100
      %s120 = sphi 0, %s122
      %s123 = sphi 0, %s120
      %s124 = sphi 0, %s123
      %s140 = sphi 0, %s124
    $region4: #{bottleneck_forward.7} parent=1 // loop_header_branch
      %19 = sbr.rel (%p17) target = $region8
    $region5: #{bottleneck_forward.7} parent=1 // loop_body
      %s21 = ssub.s32 %s16, 1
      %s22 = ssub.s32 %s16, 2
      %s23 = sadd.s32 %s16, 1
      %s24 = ssub.s32 %s16, %s23
      %p25 = scmp.eq.s32.totalorder %s24, 0
      %s27 = sadd.s32 %s26, 1
      %s28 = scalar_select %p25, %s26, %s27
      %p31 = pneg %p25
      %p32 = scmp.eq.s32.totalorder %s16, 1
      %p33 = por %p31, %p32
      %p34 = scmp.ne.s32.totalorder %s26, %s29
      %p35 = scmp.eq.s32.totalorder %s16, 0
      %p36 = por %p34, %p35
      %p37 = scmp.ne.s32.totalorder %s26, %s29
      %p38 = scmp.eq.s32.totalorder %s21, 1
      %p39 = por %p37, %p38
      %p40 = scmp.ne.s32.totalorder %s29, %s30
      %p41 = scmp.eq.s32.totalorder %s21, 0
      %p42 = por %p40, %p41
      %p43 = scmp.ne.s32.totalorder %s29, %s30
      %p44 = scmp.eq.s32.totalorder %s22, 1
      %p45 = por %p43, %p44
      %p47 = scmp.ne.s32.totalorder %s30, %s46
      %p48 = scmp.eq.s32.totalorder %s22, 0
      %p49 = por %p47, %p48
      %s50 = ssub.s32 %s16, %s23
      %p51 = scmp.eq.s32.totalorder %s50, 0
      %s53 = sadd.s32 %s52, 1
      %s54 = scalar_select %p51, %s52, %s53
      %p57 = pneg %p51
      %p58 = scmp.eq.s32.totalorder %s16, 1
      %p59 = por %p57, %p58
      %p60 = scmp.ne.s32.totalorder %s52, %s55
      %p61 = scmp.eq.s32.totalorder %s16, 0
      %p62 = por %p60, %p61
      %p63 = scmp.ne.s32.totalorder %s52, %s55
      %p64 = scmp.eq.s32.totalorder %s21, 1
      %p65 = por %p63, %p64
      %p66 = scmp.ne.s32.totalorder %s55, %s56
      %p67 = scmp.eq.s32.totalorder %s21, 0
      %p68 = por %p66, %p67
      %p69 = scmp.ne.s32.totalorder %s55, %s56
      %p70 = scmp.eq.s32.totalorder %s22, 1
      %p71 = por %p69, %p70
      %p73 = scmp.ne.s32.totalorder %s56, %s72
      %p74 = scmp.eq.s32.totalorder %s22, 0
      %p75 = por %p73, %p74
      %s77 = sadd.s32 %s76, 1
      %p80 = scmp.eq.s32.totalorder %s16, 1
      %p81 = scmp.ne.s32.totalorder %s76, %s78
      %p82 = scmp.eq.s32.totalorder %s16, 0
      %p83 = por %p81, %p82
      %p84 = scmp.ne.s32.totalorder %s76, %s78
      %p85 = scmp.eq.s32.totalorder %s21, 1
      %p86 = por %p84, %p85
      %p87 = scmp.ne.s32.totalorder %s78, %s79
      %p88 = scmp.eq.s32.totalorder %s21, 0
      %p89 = por %p87, %p88
      %p90 = scmp.ne.s32.totalorder %s78, %s79
      %p91 = scmp.eq.s32.totalorder %s22, 1
      %p92 = por %p90, %p91
      %p94 = scmp.ne.s32.totalorder %s79, %s93
      %p95 = scmp.eq.s32.totalorder %s22, 0
      %p96 = por %p94, %p95
      %s98 = sadd.s32 %s97, 1
      %p101 = scmp.eq.s32.totalorder %s16, 1
      %p102 = scmp.ne.s32.totalorder %s97, %s99
      %p103 = scmp.eq.s32.totalorder %s16, 0
      %p104 = por %p102, %p103
      %p105 = scmp.ne.s32.totalorder %s97, %s99
      %p106 = scmp.eq.s32.totalorder %s21, 1
      %p107 = por %p105, %p106
      %p108 = scmp.ne.s32.totalorder %s99, %s100
      %p109 = scmp.eq.s32.totalorder %s21, 0
      %p110 = por %p108, %p109
      %p111 = scmp.ne.s32.totalorder %s99, %s100
      %p112 = scmp.eq.s32.totalorder %s22, 1
      %p113 = por %p111, %p112
      %p115 = scmp.ne.s32.totalorder %s100, %s114
      %p116 = scmp.eq.s32.totalorder %s22, 0
      %p117 = por %p115, %p116
      %s118 = ssub.s32 %s16, %s23
      %p119 = scmp.eq.s32.totalorder %s118, 0
      %s121 = sadd.s32 %s120, 1
      %s122 = scalar_select %p119, %s120, %s121
      %p125 = pneg %p119
      %p126 = scmp.eq.s32.totalorder %s16, 1
      %p127 = por %p125, %p126
      %p128 = scmp.ne.s32.totalorder %s120, %s123
      %p129 = scmp.eq.s32.totalorder %s16, 0
      %p130 = por %p128, %p129
      %p131 = scmp.ne.s32.totalorder %s120, %s123
      %p132 = scmp.eq.s32.totalorder %s21, 1
      %p133 = por %p131, %p132
      %p134 = scmp.ne.s32.totalorder %s123, %s124
      %p135 = scmp.eq.s32.totalorder %s21, 0
      %p136 = por %p134, %p135
      %p137 = scmp.ne.s32.totalorder %s123, %s124
      %p138 = scmp.eq.s32.totalorder %s22, 1
      %p139 = por %p137, %p138
      %p141 = scmp.ne.s32.totalorder %s124, %s140
      %p142 = scmp.eq.s32.totalorder %s22, 0
      %p143 = por %p141, %p142
      %p144 = scmp.le.s32.totalorder 1, %s16
      %p145 = scmp.lt.s32.totalorder %s16, 3
      %p146 = pnand %p144, %p145
      %p147 = pneg %p146
      // Predicated region
      $region9: #{bottleneck_forward.7} parent=5 // pred_check
        _
      $region10: #{bottleneck_forward.7} parent=5 // pred_check_branch
        %149 = sbr.rel (%p146) target = $region12
      $region11: #{bottleneck_forward.7} parent=5 // pred_region
        %s150 = ssub.s32 %s16, 1
        // Predicated region
        $region13: #{bottleneck_forward.7} parent=11 // pred_check
          %p151 = pneg %p89
        $region14: #{bottleneck_forward.7} parent=11 // pred_check_branch
          %153 = sbr.rel (%p151) target = $region16
        $region15: #{bottleneck_forward.7} parent=11 // pred_region
          _
        $region16: #{bottleneck_forward.7} parent=11 // pred_fallthru
          _
        // Predicated region
        $region17: #{bottleneck_forward.7} parent=11 // pred_check
          %p154 = pneg %p110
        $region18: #{bottleneck_forward.7} parent=11 // pred_check_branch
          %156 = sbr.rel (%p154) target = $region20
        $region19: #{bottleneck_forward.7} parent=11 // pred_region
          _
        $region20: #{bottleneck_forward.7} parent=11 // pred_fallthru
          _
      $region12: #{bottleneck_forward.7} parent=5 // pred_fallthru
        _
      %p157 = scmp.lt.s32.totalorder %s16, 2
      // Predicated region
      $region21: #{bottleneck_forward.7} parent=5 // pred_check
        %p158 = pneg %p157
      $region22: #{bottleneck_forward.7} parent=5 // pred_check_branch
        %160 = sbr.rel (%p158) target = $region24
      $region23: #{bottleneck_forward.7} parent=5 // pred_region
        // Predicated region
        $region25: #{bottleneck_forward.7} parent=23 // pred_check
          %p161 = pneg %p36
        $region26: #{bottleneck_forward.7} parent=23 // pred_check_branch
          %163 = sbr.rel (%p161) target = $region28
        $region27: #{bottleneck_forward.7} parent=23 // pred_region
          %s164 = smul.u32 32, %s16
          %p165 = scmp.lt.s32.totalorder %s164, 63
          %s166 = scalar_select %p165, %s164, 63
          %s167 = smul.addr %s166, 8
          %s168 = scalar_lea.vmem %s0, %s167
          %s169 = smul.u32 32, %s16
        $region28: #{bottleneck_forward.7} parent=23 // pred_fallthru
          _
        // Predicated region
        $region29: #{bottleneck_forward.7} parent=23 // pred_check
          %p170 = pneg %p62
        $region30: #{bottleneck_forward.7} parent=23 // pred_check_branch
          %172 = sbr.rel (%p170) target = $region32
        $region31: #{bottleneck_forward.7} parent=23 // pred_region
          %s173 = sand.u32 %s52, 1
          %s174 = scalar_lea.sflag [#allocation3], %s173
          %s175 = sand.u32 %s52, 1
          %s176 = smul.addr %s175, 256
          %s177 = scalar_lea.vmem [#allocation2], %s176
          %s178 = smul.u32 32, %s16
          %180 = vsyncadd %s174, 0
          %s181 = smul.addr %s178, 8
          %s182 = scalar_lea.hbm %s1, %s181
          %s183 = sshll.u32 %s182, 4
          %s184 = int_to_ptr.hbm [resolvable:$true] %s183
          %s185 = sshll.u32 %s177, 4
          %s186 = int_to_ptr.vmem [resolvable:$true] %s185
          %191 = dma.hbm_to_vmem [thread:$0]  %s184, 4096, %s186, %s174, 128, 128, 8
        $region32: #{bottleneck_forward.7} parent=23 // pred_fallthru
          _
      $region24: #{bottleneck_forward.7} parent=5 // pred_fallthru
        _
      %p192 = scmp.le.s32.totalorder 1, %s16
      %p193 = scmp.lt.s32.totalorder %s16, 3
      %p194 = pnand %p192, %p193
      %p195 = pneg %p194
      // Predicated region
      $region33: #{bottleneck_forward.7} parent=5 // pred_check
        _
      $region34: #{bottleneck_forward.7} parent=5 // pred_check_branch
        %197 = sbr.rel (%p194) target = $region36
      $region35: #{bottleneck_forward.7} parent=5 // pred_region
        %s198 = ssub.s32 %s16, 1
        %s199 = sand.u32 %s55, 1
        %s200 = scalar_lea.sflag [#allocation3], %s199
        %s201 = sand.u32 %s55, 1
        %s202 = smul.addr %s201, 256
        %s203 = scalar_lea.vmem [#allocation2], %s202
        // Predicated region
        $region37: #{bottleneck_forward.7} parent=35 // pred_check
          %p204 = pneg %p68
        $region38: #{bottleneck_forward.7} parent=35 // pred_check_branch
          %206 = sbr.rel (%p204) target = $region40
        $region39: #{bottleneck_forward.7} parent=35 // pred_region
          %208 = dma.done %s200, 4096
        $region40: #{bottleneck_forward.7} parent=35 // pred_fallthru
          _
        %s209 = smul.u32 32, %s21
        %p210 = scmp.lt.s32.totalorder %s209, 63
        %s211 = scalar_select %p210, %s209, 63
        %s212 = smul.addr %s211, 8
        %s213 = scalar_lea.vmem %s0, %s212
        %p214 = pneg %p42
        %p215 = pneg %p39
        %s216 = sand.u32 %s55, 1
        %s217 = scalar_lea.sflag [#allocation3], %s216
        %s218 = sand.u32 %s55, 1
        %s219 = smul.addr %s218, 256
        %s220 = scalar_lea.vmem [#allocation2], %s219
        %p221 = pneg %p68
        %p222 = pneg %p65
        %p223 = pneg %p89
        %p224 = pneg %p86
        %p225 = pneg %p110
        %p226 = pneg %p107
        %p227 = pneg %p136
        %p228 = pneg %p133
        %s229 = sand.u32 %s123, 1
        %s230 = scalar_lea.sflag [#allocation4], %s229
        %s231 = sand.u32 %s123, 1
        %s232 = smul.addr %s231, 256
        %s233 = scalar_lea.vmem [#allocation5], %s232
        %s234 = smul.u32 32, %s21
        %p235 = scmp.lt.s32.totalorder %s234, 63
        %s236 = scalar_select %p235, %s234, 63
        %s237 = smul.addr %s236, 8
        %s238 = scalar_lea.vmem %s0, %s237
        %s239 = smul.u32 32, %s21
        %s240 = smul.u32 32, %s21
        %s241 = smul.u32 32, %s21
        %v242 = vld [vmem:[%s238] sm:$0xff]
        %v243 = vld [vmem:[%s238 + $0x8] sm:$0xff]
        %v244 = vld [vmem:[%s238 + $0x10] sm:$0xff]
        %v245 = vld [vmem:[%s238 + $0x18] sm:$0xff]
        %v246 = vld [vmem:[%s238 + $0x20] sm:$0xff]
        %v247 = vld [vmem:[%s238 + $0x28] sm:$0xff]
        %v248 = vld [vmem:[%s238 + $0x30] sm:$0xff]
        %v249 = vld [vmem:[%s238 + $0x38] sm:$0xff]
        %v250 = vld [vmem:[%s238 + $0x40] sm:$0xff]
        %v251 = vld [vmem:[%s238 + $0x48] sm:$0xff]
        %v252 = vld [vmem:[%s238 + $0x50] sm:$0xff]
        %v253 = vld [vmem:[%s238 + $0x58] sm:$0xff]
        %v254 = vld [vmem:[%s238 + $0x60] sm:$0xff]
        %v255 = vld [vmem:[%s238 + $0x68] sm:$0xff]
        %v256 = vld [vmem:[%s238 + $0x70] sm:$0xff]
        %v257 = vld [vmem:[%s238 + $0x78] sm:$0xff]
        %v258 = vld [vmem:[%s238 + $0x80] sm:$0xff]
        %v259 = vld [vmem:[%s238 + $0x88] sm:$0xff]
        %v260 = vld [vmem:[%s238 + $0x90] sm:$0xff]
        %v261 = vld [vmem:[%s238 + $0x98] sm:$0xff]
        %v262 = vld [vmem:[%s238 + $0xa0] sm:$0xff]
        %v263 = vld [vmem:[%s238 + $0xa8] sm:$0xff]
        %v264 = vld [vmem:[%s238 + $0xb0] sm:$0xff]
        %v265 = vld [vmem:[%s238 + $0xb8] sm:$0xff]
        %v266 = vld [vmem:[%s238 + $0xc0] sm:$0xff]
        %v267 = vld [vmem:[%s238 + $0xc8] sm:$0xff]
        %v268 = vld [vmem:[%s238 + $0xd0] sm:$0xff]
        %v269 = vld [vmem:[%s238 + $0xd8] sm:$0xff]
        %v270 = vld [vmem:[%s238 + $0xe0] sm:$0xff]
        %v271 = vld [vmem:[%s238 + $0xe8] sm:$0xff]
        %v272 = vld [vmem:[%s238 + $0xf0] sm:$0xff]
        %v273 = vld [vmem:[%s238 + $0xf8] sm:$0xff]
        %v274 = vld [vmem:[%s2] sm:$0x1]
        %v276 = vperm.slane %v274, 0
        %v278 = vmul.f32 %v242, %v276
        %v279 = vmul.f32 %v243, %v276
        %v280 = vmul.f32 %v244, %v276
        %v281 = vmul.f32 %v245, %v276
        %v282 = vmul.f32 %v246, %v276
        %v283 = vmul.f32 %v247, %v276
        %v284 = vmul.f32 %v248, %v276
        %v285 = vmul.f32 %v249, %v276
        %v286 = vmul.f32 %v250, %v276
        %v287 = vmul.f32 %v251, %v276
        %v288 = vmul.f32 %v252, %v276
        %v289 = vmul.f32 %v253, %v276
        %v290 = vmul.f32 %v254, %v276
        %v291 = vmul.f32 %v255, %v276
        %v292 = vmul.f32 %v256, %v276
        %v293 = vmul.f32 %v257, %v276
        %v294 = vmul.f32 %v258, %v276
        %v295 = vmul.f32 %v259, %v276
        %v296 = vmul.f32 %v260, %v276
        %v297 = vmul.f32 %v261, %v276
        %v298 = vmul.f32 %v262, %v276
        %v299 = vmul.f32 %v263, %v276
        %v300 = vmul.f32 %v264, %v276
        %v301 = vmul.f32 %v265, %v276
        %v302 = vmul.f32 %v266, %v276
        %v303 = vmul.f32 %v267, %v276
        %v304 = vmul.f32 %v268, %v276
        %v305 = vmul.f32 %v269, %v276
        %v306 = vmul.f32 %v270, %v276
        %v307 = vmul.f32 %v271, %v276
        %v308 = vmul.f32 %v272, %v276
        %v309 = vmul.f32 %v273, %v276
        %v310 = vld [vmem:[%s3] sm:$0x1]
        %v312 = vperm.slane %v310, 0
        %v314 = vadd.f32 %v278, %v312
        %v315 = vadd.f32 %v279, %v312
        %v316 = vadd.f32 %v280, %v312
        %v317 = vadd.f32 %v281, %v312
        %v318 = vadd.f32 %v282, %v312
        %v319 = vadd.f32 %v283, %v312
        %v320 = vadd.f32 %v284, %v312
        %v321 = vadd.f32 %v285, %v312
        %v322 = vadd.f32 %v286, %v312
        %v323 = vadd.f32 %v287, %v312
        %v324 = vadd.f32 %v288, %v312
        %v325 = vadd.f32 %v289, %v312
        %v326 = vadd.f32 %v290, %v312
        %v327 = vadd.f32 %v291, %v312
        %v328 = vadd.f32 %v292, %v312
        %v329 = vadd.f32 %v293, %v312
        %v330 = vadd.f32 %v294, %v312
        %v331 = vadd.f32 %v295, %v312
        %v332 = vadd.f32 %v296, %v312
        %v333 = vadd.f32 %v297, %v312
        %v334 = vadd.f32 %v298, %v312
        %v335 = vadd.f32 %v299, %v312
        %v336 = vadd.f32 %v300, %v312
        %v337 = vadd.f32 %v301, %v312
        %v338 = vadd.f32 %v302, %v312
        %v339 = vadd.f32 %v303, %v312
        %v340 = vadd.f32 %v304, %v312
        %v341 = vadd.f32 %v305, %v312
        %v342 = vadd.f32 %v306, %v312
        %v343 = vadd.f32 %v307, %v312
        %v344 = vadd.f32 %v308, %v312
        %v345 = vadd.f32 %v309, %v312
        %v346 = vld [vmem:[%s203] sm:$0xff]
        %v347 = vld [vmem:[%s203 + $0x8] sm:$0xff]
        %v348 = vld [vmem:[%s203 + $0x10] sm:$0xff]
        %v349 = vld [vmem:[%s203 + $0x18] sm:$0xff]
        %v350 = vld [vmem:[%s203 + $0x20] sm:$0xff]
        %v351 = vld [vmem:[%s203 + $0x28] sm:$0xff]
        %v352 = vld [vmem:[%s203 + $0x30] sm:$0xff]
        %v353 = vld [vmem:[%s203 + $0x38] sm:$0xff]
        %v354 = vld [vmem:[%s203 + $0x40] sm:$0xff]
        %v355 = vld [vmem:[%s203 + $0x48] sm:$0xff]
        %v356 = vld [vmem:[%s203 + $0x50] sm:$0xff]
        %v357 = vld [vmem:[%s203 + $0x58] sm:$0xff]
        %v358 = vld [vmem:[%s203 + $0x60] sm:$0xff]
        %v359 = vld [vmem:[%s203 + $0x68] sm:$0xff]
        %v360 = vld [vmem:[%s203 + $0x70] sm:$0xff]
        %v361 = vld [vmem:[%s203 + $0x78] sm:$0xff]
        %v362 = vld [vmem:[%s203 + $0x80] sm:$0xff]
        %v363 = vld [vmem:[%s203 + $0x88] sm:$0xff]
        %v364 = vld [vmem:[%s203 + $0x90] sm:$0xff]
        %v365 = vld [vmem:[%s203 + $0x98] sm:$0xff]
        %v366 = vld [vmem:[%s203 + $0xa0] sm:$0xff]
        %v367 = vld [vmem:[%s203 + $0xa8] sm:$0xff]
        %v368 = vld [vmem:[%s203 + $0xb0] sm:$0xff]
        %v369 = vld [vmem:[%s203 + $0xb8] sm:$0xff]
        %v370 = vld [vmem:[%s203 + $0xc0] sm:$0xff]
        %v371 = vld [vmem:[%s203 + $0xc8] sm:$0xff]
        %v372 = vld [vmem:[%s203 + $0xd0] sm:$0xff]
        %v373 = vld [vmem:[%s203 + $0xd8] sm:$0xff]
        %v374 = vld [vmem:[%s203 + $0xe0] sm:$0xff]
        %v375 = vld [vmem:[%s203 + $0xe8] sm:$0xff]
        %v376 = vld [vmem:[%s203 + $0xf0] sm:$0xff]
        %v377 = vld [vmem:[%s203 + $0xf8] sm:$0xff]
        %v378 = vadd.f32 %v314, %v346
        %v379 = vadd.f32 %v315, %v347
        %v380 = vadd.f32 %v316, %v348
        %v381 = vadd.f32 %v317, %v349
        %v382 = vadd.f32 %v318, %v350
        %v383 = vadd.f32 %v319, %v351
        %v384 = vadd.f32 %v320, %v352
        %v385 = vadd.f32 %v321, %v353
        %v386 = vadd.f32 %v322, %v354
        %v387 = vadd.f32 %v323, %v355
        %v388 = vadd.f32 %v324, %v356
        %v389 = vadd.f32 %v325, %v357
        %v390 = vadd.f32 %v326, %v358
        %v391 = vadd.f32 %v327, %v359
        %v392 = vadd.f32 %v328, %v360
        %v393 = vadd.f32 %v329, %v361
        %v394 = vadd.f32 %v330, %v362
        %v395 = vadd.f32 %v331, %v363
        %v396 = vadd.f32 %v332, %v364
        %v397 = vadd.f32 %v333, %v365
        %v398 = vadd.f32 %v334, %v366
        %v399 = vadd.f32 %v335, %v367
        %v400 = vadd.f32 %v336, %v368
        %v401 = vadd.f32 %v337, %v369
        %v402 = vadd.f32 %v338, %v370
        %v403 = vadd.f32 %v339, %v371
        %v404 = vadd.f32 %v340, %v372
        %v405 = vadd.f32 %v341, %v373
        %v406 = vadd.f32 %v342, %v374
        %v407 = vadd.f32 %v343, %v375
        %v408 = vadd.f32 %v344, %v376
        %v409 = vadd.f32 %v345, %v377
        %v410 = vmax.f32 %v378, 0.0
        %v411 = vmax.f32 %v379, 0.0
        %v412 = vmax.f32 %v380, 0.0
        %v413 = vmax.f32 %v381, 0.0
        %v414 = vmax.f32 %v382, 0.0
        %v415 = vmax.f32 %v383, 0.0
        %v416 = vmax.f32 %v384, 0.0
        %v417 = vmax.f32 %v385, 0.0
        %v418 = vmax.f32 %v386, 0.0
        %v419 = vmax.f32 %v387, 0.0
        %v420 = vmax.f32 %v388, 0.0
        %v421 = vmax.f32 %v389, 0.0
        %v422 = vmax.f32 %v390, 0.0
        %v423 = vmax.f32 %v391, 0.0
        %v424 = vmax.f32 %v392, 0.0
        %v425 = vmax.f32 %v393, 0.0
        %v426 = vmax.f32 %v394, 0.0
        %v427 = vmax.f32 %v395, 0.0
        %v428 = vmax.f32 %v396, 0.0
        %v429 = vmax.f32 %v397, 0.0
        %v430 = vmax.f32 %v398, 0.0
        %v431 = vmax.f32 %v399, 0.0
        %v432 = vmax.f32 %v400, 0.0
        %v433 = vmax.f32 %v401, 0.0
        %v434 = vmax.f32 %v402, 0.0
        %v435 = vmax.f32 %v403, 0.0
        %v436 = vmax.f32 %v404, 0.0
        %v437 = vmax.f32 %v405, 0.0
        %v438 = vmax.f32 %v406, 0.0
        %v439 = vmax.f32 %v407, 0.0
        %v440 = vmax.f32 %v408, 0.0
        %v441 = vmax.f32 %v409, 0.0
        %vm442 = vcmask 130048
        %443 = vst.msk [vmem:[%s233] sm:$0xff] %vm442, %v410
        %444 = vst.msk [vmem:[%s233 + $0x8] sm:$0xff] %vm442, %v411
        %445 = vst.msk [vmem:[%s233 + $0x10] sm:$0xff] %vm442, %v412
        %446 = vst.msk [vmem:[%s233 + $0x18] sm:$0xff] %vm442, %v413
        %447 = vst.msk [vmem:[%s233 + $0x20] sm:$0xff] %vm442, %v414
        %448 = vst.msk [vmem:[%s233 + $0x28] sm:$0xff] %vm442, %v415
        %449 = vst.msk [vmem:[%s233 + $0x30] sm:$0xff] %vm442, %v416
        %450 = vst.msk [vmem:[%s233 + $0x38] sm:$0xff] %vm442, %v417
        %451 = vst.msk [vmem:[%s233 + $0x40] sm:$0xff] %vm442, %v418
        %452 = vst.msk [vmem:[%s233 + $0x48] sm:$0xff] %vm442, %v419
        %453 = vst.msk [vmem:[%s233 + $0x50] sm:$0xff] %vm442, %v420
        %454 = vst.msk [vmem:[%s233 + $0x58] sm:$0xff] %vm442, %v421
        %455 = vst.msk [vmem:[%s233 + $0x60] sm:$0xff] %vm442, %v422
        %456 = vst.msk [vmem:[%s233 + $0x68] sm:$0xff] %vm442, %v423
        %457 = vst.msk [vmem:[%s233 + $0x70] sm:$0xff] %vm442, %v424
        %458 = vst.msk [vmem:[%s233 + $0x78] sm:$0xff] %vm442, %v425
        %459 = vst.msk [vmem:[%s233 + $0x80] sm:$0xff] %vm442, %v426
        %460 = vst.msk [vmem:[%s233 + $0x88] sm:$0xff] %vm442, %v427
        %461 = vst.msk [vmem:[%s233 + $0x90] sm:$0xff] %vm442, %v428
        %462 = vst.msk [vmem:[%s233 + $0x98] sm:$0xff] %vm442, %v429
        %463 = vst.msk [vmem:[%s233 + $0xa0] sm:$0xff] %vm442, %v430
        %464 = vst.msk [vmem:[%s233 + $0xa8] sm:$0xff] %vm442, %v431
        %465 = vst.msk [vmem:[%s233 + $0xb0] sm:$0xff] %vm442, %v432
        %466 = vst.msk [vmem:[%s233 + $0xb8] sm:$0xff] %vm442, %v433
        %467 = vst.msk [vmem:[%s233 + $0xc0] sm:$0xff] %vm442, %v434
        %468 = vst.msk [vmem:[%s233 + $0xc8] sm:$0xff] %vm442, %v435
        %469 = vst.msk [vmem:[%s233 + $0xd0] sm:$0xff] %vm442, %v436
        %470 = vst.msk [vmem:[%s233 + $0xd8] sm:$0xff] %vm442, %v437
        %471 = vst.msk [vmem:[%s233 + $0xe0] sm:$0xff] %vm442, %v438
        %472 = vst.msk [vmem:[%s233 + $0xe8] sm:$0xff] %vm442, %v439
        %473 = vst.msk [vmem:[%s233 + $0xf0] sm:$0xff] %vm442, %v440
        %474 = vst.msk [vmem:[%s233 + $0xf8] sm:$0xff] %vm442, %v441
        %s475 = sand.u32 %s123, 1
        %s476 = scalar_lea.sflag [#allocation4], %s475
        %s477 = sand.u32 %s123, 1
        %s478 = smul.addr %s477, 256
        %s479 = scalar_lea.vmem [#allocation5], %s478
        // Predicated region
        $region41: #{bottleneck_forward.7} parent=35 // pred_check
          %p480 = pneg %p133
        $region42: #{bottleneck_forward.7} parent=35 // pred_check_branch
          %482 = sbr.rel (%p480) target = $region44
        $region43: #{bottleneck_forward.7} parent=35 // pred_region
          %s483 = smul.u32 32, %s21
          %485 = vsyncadd %s476, 0
          %s486 = smul.addr %s483, 8
          %s487 = scalar_lea.hbm %s4, %s486
          %s488 = sshll.u32 %s479, 4
          %s489 = int_to_ptr.vmem [resolvable:$true] %s488
          %s490 = sshll.u32 %s487, 4
          %s491 = int_to_ptr.hbm [resolvable:$true] %s490
          %496 = dma.vmem_to_hbm [thread:$0]  %s489, 4096, %s491, %s476, 128, 128, 8
        $region44: #{bottleneck_forward.7} parent=35 // pred_fallthru
          _
      $region36: #{bottleneck_forward.7} parent=5 // pred_fallthru
        _
      %p497 = scmp.le.s32.totalorder 2, %s16
      // Predicated region
      $region45: #{bottleneck_forward.7} parent=5 // pred_check
        %p498 = pneg %p497
      $region46: #{bottleneck_forward.7} parent=5 // pred_check_branch
        %500 = sbr.rel (%p498) target = $region48
      $region47: #{bottleneck_forward.7} parent=5 // pred_region
        %s501 = ssub.s32 %s16, 2
        // Predicated region
        $region49: #{bottleneck_forward.7} parent=47 // pred_check
          %p502 = pneg %p139
        $region50: #{bottleneck_forward.7} parent=47 // pred_check_branch
          %504 = sbr.rel (%p502) target = $region52
        $region51: #{bottleneck_forward.7} parent=47 // pred_region
          %s505 = sand.u32 %s124, 1
          %s506 = scalar_lea.sflag [#allocation4], %s505
          %s507 = sand.u32 %s124, 1
          %s508 = smul.addr %s507, 256
          %s509 = scalar_lea.vmem [#allocation5], %s508
          %511 = dma.done %s506, 4096
        $region52: #{bottleneck_forward.7} parent=47 // pred_fallthru
          _
      $region48: #{bottleneck_forward.7} parent=5 // pred_fallthru
        _
    $region6: #{bottleneck_forward.7} parent=1 // loop_footer
      %s20 = sadd.s32 1, %s16
    $region7: #{bottleneck_forward.7} parent=1 // loop_footer_branch
      %15 = sbr.rel target = $region3
    $region8: #{bottleneck_forward.7} parent=1 // loop_exit
      _
    %512 = vsyncpa [#allocation3], 1
    %s513 = scalar_lea.sflag [#allocation3], 1
    %514 = vsyncpa %s513, 1
    %515 = vsyncpa [#allocation4], 1
    %s516 = scalar_lea.sflag [#allocation4], 1
    %517 = vsyncpa %s516, 1

// kernel: bottleneck_forward.4
$region0: #{bottleneck_forward.4}
  #allocation0 [shape = 'u32[]', space=smem, size = 0x4, offset = 0x4, fixed_abs, tag = 'smem constant byte address 0x4 - core index']
  #allocation1 [shape = 'u32[72,128]{1,0:T(1,128)}', space=vmem, size = 0x9000, scoped, tag = 'internal scratch']
  %s0 = inlined_call_operand.hbm [shape: f32[512,16], index: 0, kind: input, shape index: {}]
  %s1 = inlined_call_operand.vmem [shape: f32[16,4], index: 1, kind: input, shape index: {}]
  %s2 = inlined_call_operand.vmem [shape: f32[512,4], index: 2, kind: output, shape index: {0}]
  %s3 = inlined_call_operand.vmem [shape: f32[1,4], index: 3, kind: output, shape index: {1}]
  %s4 = inlined_call_operand.vmem [shape: f32[1,4], index: 4, kind: output, shape index: {2}]
  %5 = xla_tuple %s2, %s3, %s4
  %s6 = sld [smem:[#allocation0]]
  $region65: #{bottleneck_forward.4} parent=0
    _
  %s8 = ssub.s32 1, %s6
  %s9 = scalar_select 0, %s8, %s6
  $region1: #{bottleneck_forward.4} parent=0
    #allocation2 [shape = 'u8[262144]{0}', space=vmem, size = 0x40000, scoped, tag = 'input window, operand 0']
    #allocation3 [shape = 's32[2]{0}', space=sflag, size = 0x8, scoped, tag = 'scoped memory for bottleneck_forward.4']
    %10 = vsyncpa [#allocation3], 0
    %s11 = scalar_lea.sflag [#allocation3], 1
    %12 = vsyncpa %s11, 0
    loop: start=0, step=1, limit=4
    $region2: #{bottleneck_forward.4} parent=1 // loop_pre_header
      _
    $region3: #{bottleneck_forward.4} parent=1 // loop_header
      %s14 = sphi 0, %s18
      %p15 = scmp.ge.s32.totalorder %s14, 4
      %s24 = sphi 0, %s26
      %s27 = sphi 0, %s24
      %s28 = sphi 0, %s27
      %s44 = sphi 0, %s28
      %s48 = sphi 0, %s48
      %s50 = sphi 0, %s48
      %s51 = sphi 0, %s50
      %s65 = sphi 0, %s51
      %s71 = sphi 0, %s73
      %s74 = sphi 0, %s71
      %s75 = sphi 0, %s74
      %s91 = sphi 0, %s75
      %s95 = sphi 0, %s95
      %s97 = sphi 0, %s95
      %s98 = sphi 0, %s97
      %s112 = sphi 0, %s98
      %s116 = sphi 0, %s116
      %s118 = sphi 0, %s116
      %s119 = sphi 0, %s118
      %s133 = sphi 0, %s119
    $region4: #{bottleneck_forward.4} parent=1 // loop_header_branch
      %17 = sbr.rel (%p15) target = $region8
    $region5: #{bottleneck_forward.4} parent=1 // loop_body
      %s19 = ssub.s32 %s14, 1
      %s20 = ssub.s32 %s14, 2
      %s21 = sadd.s32 %s14, 1
      %s22 = ssub.s32 %s14, %s21
      %p23 = scmp.eq.s32.totalorder %s22, 0
      %s25 = sadd.s32 %s24, 1
      %s26 = scalar_select %p23, %s24, %s25
      %p29 = pneg %p23
      %p30 = scmp.eq.s32.totalorder %s14, 1
      %p31 = por %p29, %p30
      %p32 = scmp.ne.s32.totalorder %s24, %s27
      %p33 = scmp.eq.s32.totalorder %s14, 0
      %p34 = por %p32, %p33
      %p35 = scmp.ne.s32.totalorder %s24, %s27
      %p36 = scmp.eq.s32.totalorder %s19, 1
      %p37 = por %p35, %p36
      %p38 = scmp.ne.s32.totalorder %s27, %s28
      %p39 = scmp.eq.s32.totalorder %s19, 0
      %p40 = por %p38, %p39
      %p41 = scmp.ne.s32.totalorder %s27, %s28
      %p42 = scmp.eq.s32.totalorder %s20, 1
      %p43 = por %p41, %p42
      %p45 = scmp.ne.s32.totalorder %s28, %s44
      %p46 = scmp.eq.s32.totalorder %s20, 0
      %p47 = por %p45, %p46
      %s49 = sadd.s32 %s48, 1
      %p52 = scmp.eq.s32.totalorder %s14, 1
      %p53 = scmp.ne.s32.totalorder %s48, %s50
      %p54 = scmp.eq.s32.totalorder %s14, 0
      %p55 = por %p53, %p54
      %p56 = scmp.ne.s32.totalorder %s48, %s50
      %p57 = scmp.eq.s32.totalorder %s19, 1
      %p58 = por %p56, %p57
      %p59 = scmp.ne.s32.totalorder %s50, %s51
      %p60 = scmp.eq.s32.totalorder %s19, 0
      %p61 = por %p59, %p60
      %p62 = scmp.ne.s32.totalorder %s50, %s51
      %p63 = scmp.eq.s32.totalorder %s20, 1
      %p64 = por %p62, %p63
      %p66 = scmp.ne.s32.totalorder %s51, %s65
      %p67 = scmp.eq.s32.totalorder %s20, 0
      %p68 = por %p66, %p67
      %s69 = ssub.s32 %s14, %s21
      %p70 = scmp.eq.s32.totalorder %s69, 0
      %s72 = sadd.s32 %s71, 1
      %s73 = scalar_select %p70, %s71, %s72
      %p76 = pneg %p70
      %p77 = scmp.eq.s32.totalorder %s14, 1
      %p78 = por %p76, %p77
      %p79 = scmp.ne.s32.totalorder %s71, %s74
      %p80 = scmp.eq.s32.totalorder %s14, 0
      %p81 = por %p79, %p80
      %p82 = scmp.ne.s32.totalorder %s71, %s74
      %p83 = scmp.eq.s32.totalorder %s19, 1
      %p84 = por %p82, %p83
      %p85 = scmp.ne.s32.totalorder %s74, %s75
      %p86 = scmp.eq.s32.totalorder %s19, 0
      %p87 = por %p85, %p86
      %p88 = scmp.ne.s32.totalorder %s74, %s75
      %p89 = scmp.eq.s32.totalorder %s20, 1
      %p90 = por %p88, %p89
      %p92 = scmp.ne.s32.totalorder %s75, %s91
      %p93 = scmp.eq.s32.totalorder %s20, 0
      %p94 = por %p92, %p93
      %s96 = sadd.s32 %s95, 1
      %p99 = scmp.eq.s32.totalorder %s14, 1
      %p100 = scmp.ne.s32.totalorder %s95, %s97
      %p101 = scmp.eq.s32.totalorder %s14, 0
      %p102 = por %p100, %p101
      %p103 = scmp.ne.s32.totalorder %s95, %s97
      %p104 = scmp.eq.s32.totalorder %s19, 1
      %p105 = por %p103, %p104
      %p106 = scmp.ne.s32.totalorder %s97, %s98
      %p107 = scmp.eq.s32.totalorder %s19, 0
      %p108 = por %p106, %p107
      %p109 = scmp.ne.s32.totalorder %s97, %s98
      %p110 = scmp.eq.s32.totalorder %s20, 1
      %p111 = por %p109, %p110
      %p113 = scmp.ne.s32.totalorder %s98, %s112
      %p114 = scmp.eq.s32.totalorder %s20, 0
      %p115 = por %p113, %p114
      %s117 = sadd.s32 %s116, 1
      %p120 = scmp.eq.s32.totalorder %s14, 1
      %p121 = scmp.ne.s32.totalorder %s116, %s118
      %p122 = scmp.eq.s32.totalorder %s14, 0
      %p123 = por %p121, %p122
      %p124 = scmp.ne.s32.totalorder %s116, %s118
      %p125 = scmp.eq.s32.totalorder %s19, 1
      %p126 = por %p124, %p125
      %p127 = scmp.ne.s32.totalorder %s118, %s119
      %p128 = scmp.eq.s32.totalorder %s19, 0
      %p129 = por %p127, %p128
      %p130 = scmp.ne.s32.totalorder %s118, %s119
      %p131 = scmp.eq.s32.totalorder %s20, 1
      %p132 = por %p130, %p131
      %p134 = scmp.ne.s32.totalorder %s119, %s133
      %p135 = scmp.eq.s32.totalorder %s20, 0
      %p136 = por %p134, %p135
      %p137 = scmp.le.s32.totalorder 1, %s14
      %p138 = scmp.lt.s32.totalorder %s14, 3
      %p139 = pnand %p137, %p138
      %p140 = pneg %p139
      // Predicated region
      $region9: #{bottleneck_forward.4} parent=5 // pred_check
        _
      $region10: #{bottleneck_forward.4} parent=5 // pred_check_branch
        %142 = sbr.rel (%p139) target = $region12
      $region11: #{bottleneck_forward.4} parent=5 // pred_region
        %s143 = ssub.s32 %s14, 1
        // Predicated region
        $region13: #{bottleneck_forward.4} parent=11 // pred_check
          %p144 = pneg %p61
        $region14: #{bottleneck_forward.4} parent=11 // pred_check_branch
          %146 = sbr.rel (%p144) target = $region16
        $region15: #{bottleneck_forward.4} parent=11 // pred_region
          _
        $region16: #{bottleneck_forward.4} parent=11 // pred_fallthru
          _
      $region12: #{bottleneck_forward.4} parent=5 // pred_fallthru
        _
      %p147 = scmp.lt.s32.totalorder %s14, 2
      // Predicated region
      $region17: #{bottleneck_forward.4} parent=5 // pred_check
        %p148 = pneg %p147
      $region18: #{bottleneck_forward.4} parent=5 // pred_check_branch
        %150 = sbr.rel (%p148) target = $region20
      $region19: #{bottleneck_forward.4} parent=5 // pred_region
        // Predicated region
        $region21: #{bottleneck_forward.4} parent=19 // pred_check
          %p151 = pneg %p34
        $region22: #{bottleneck_forward.4} parent=19 // pred_check_branch
          %153 = sbr.rel (%p151) target = $region24
        $region23: #{bottleneck_forward.4} parent=19 // pred_region
          %s154 = sand.u32 %s24, 1
          %s155 = scalar_lea.sflag [#allocation3], %s154
          %s156 = sand.u32 %s24, 1
          %s157 = smul.addr %s156, 256
          %s158 = scalar_lea.vmem [#allocation2], %s157
          %s159 = smul.u32 32, %s14
          %161 = vsyncadd %s155, 0
          %s162 = smul.addr %s159, 8
          %s163 = scalar_lea.hbm %s0, %s162
          %s164 = sshll.u32 %s163, 4
          %s165 = int_to_ptr.hbm [resolvable:$true] %s164
          %s166 = sshll.u32 %s158, 4
          %s167 = int_to_ptr.vmem [resolvable:$true] %s166
          %172 = dma.hbm_to_vmem [thread:$0]  %s165, 4096, %s167, %s155, 128, 128, 8
        $region24: #{bottleneck_forward.4} parent=19 // pred_fallthru
          _
      $region20: #{bottleneck_forward.4} parent=5 // pred_fallthru
        _
      %p173 = scmp.le.s32.totalorder 1, %s14
      %p174 = scmp.lt.s32.totalorder %s14, 3
      %p175 = pnand %p173, %p174
      %p176 = pneg %p175
      // Predicated region
      $region25: #{bottleneck_forward.4} parent=5 // pred_check
        _
      $region26: #{bottleneck_forward.4} parent=5 // pred_check_branch
        %178 = sbr.rel (%p175) target = $region28
      $region27: #{bottleneck_forward.4} parent=5 // pred_region
        %s179 = ssub.s32 %s14, 1
        %s180 = sand.u32 %s27, 1
        %s181 = scalar_lea.sflag [#allocation3], %s180
        %s182 = sand.u32 %s27, 1
        %s183 = smul.addr %s182, 256
        %s184 = scalar_lea.vmem [#allocation2], %s183
        // Predicated region
        $region29: #{bottleneck_forward.4} parent=27 // pred_check
          %p185 = pneg %p40
        $region30: #{bottleneck_forward.4} parent=27 // pred_check_branch
          %187 = sbr.rel (%p185) target = $region32
        $region31: #{bottleneck_forward.4} parent=27 // pred_region
          %189 = dma.done %s181, 4096
        $region32: #{bottleneck_forward.4} parent=27 // pred_fallthru
          _
        %s190 = sand.u32 %s27, 1
        %s191 = scalar_lea.sflag [#allocation3], %s190
        %s192 = sand.u32 %s27, 1
        %s193 = smul.addr %s192, 256
        %s194 = scalar_lea.vmem [#allocation2], %s193
        %p195 = pneg %p40
        %p196 = pneg %p37
        %p197 = pneg %p61
        %p198 = pneg %p58
        %p199 = pneg %p87
        %p200 = pneg %p84
        %s201 = smul.u32 32, %s19
        %p202 = scmp.lt.s32.totalorder %s201, 63
        %s203 = scalar_select %p202, %s201, 63
        %s204 = smul.addr %s203, 8
        %s205 = scalar_lea.vmem %s2, %s204
        %p206 = pneg %p108
        %p207 = pneg %p105
        %p208 = pneg %p129
        %p209 = pneg %p126
        %s210 = smul.u32 32, %s19
        %s211 = smul.u32 32, %s19
        %p212 = scmp.lt.s32.totalorder %s211, 63
        %s213 = scalar_select %p212, %s211, 63
        %s214 = smul.addr %s213, 8
        %s215 = scalar_lea.vmem %s2, %s214
        %s216 = smul.u32 32, %s19
        %p217 = scmp.eq.s32.totalorder %s19, 0
        // Predicated region
        $region33: #{bottleneck_forward.4} parent=27 // pred_check
          %p218 = pneg %p217
        $region34: #{bottleneck_forward.4} parent=27 // pred_check_branch
          %220 = sbr.rel (%p218) target = $region36
        $region35: #{bottleneck_forward.4} parent=27 // pred_region
          %vm221 = vcmask 24576
          %222 = vst.msk [vmem:[%s3] sm:$0x1] %vm221, 0.0
          %223 = vst.msk [vmem:[%s4] sm:$0x1] %vm221, 0.0
        $region36: #{bottleneck_forward.4} parent=27 // pred_fallthru
          _
        %v224 = vld [vmem:[%s184] sm:$0xff]
        %v225 = vld [vmem:[%s184 + $0x8] sm:$0xff]
        %v226 = vld [vmem:[%s184 + $0x10] sm:$0xff]
        %v227 = vld [vmem:[%s184 + $0x18] sm:$0xff]
        %v228 = vld [vmem:[%s184 + $0x20] sm:$0xff]
        %v229 = vld [vmem:[%s184 + $0x28] sm:$0xff]
        %v230 = vld [vmem:[%s184 + $0x30] sm:$0xff]
        %v231 = vld [vmem:[%s184 + $0x38] sm:$0xff]
        %v232 = vld [vmem:[%s184 + $0x40] sm:$0xff]
        %v233 = vld [vmem:[%s184 + $0x48] sm:$0xff]
        %v234 = vld [vmem:[%s184 + $0x50] sm:$0xff]
        %v235 = vld [vmem:[%s184 + $0x58] sm:$0xff]
        %v236 = vld [vmem:[%s184 + $0x60] sm:$0xff]
        %v237 = vld [vmem:[%s184 + $0x68] sm:$0xff]
        %v238 = vld [vmem:[%s184 + $0x70] sm:$0xff]
        %v239 = vld [vmem:[%s184 + $0x78] sm:$0xff]
        %v240 = vld [vmem:[%s184 + $0x80] sm:$0xff]
        %v241 = vld [vmem:[%s184 + $0x88] sm:$0xff]
        %v242 = vld [vmem:[%s184 + $0x90] sm:$0xff]
        %v243 = vld [vmem:[%s184 + $0x98] sm:$0xff]
        %v244 = vld [vmem:[%s184 + $0xa0] sm:$0xff]
        %v245 = vld [vmem:[%s184 + $0xa8] sm:$0xff]
        %v246 = vld [vmem:[%s184 + $0xb0] sm:$0xff]
        %v247 = vld [vmem:[%s184 + $0xb8] sm:$0xff]
        %v248 = vld [vmem:[%s184 + $0xc0] sm:$0xff]
        %v249 = vld [vmem:[%s184 + $0xc8] sm:$0xff]
        %v250 = vld [vmem:[%s184 + $0xd0] sm:$0xff]
        %v251 = vld [vmem:[%s184 + $0xd8] sm:$0xff]
        %v252 = vld [vmem:[%s184 + $0xe0] sm:$0xff]
        %v253 = vld [vmem:[%s184 + $0xe8] sm:$0xff]
        %v254 = vld [vmem:[%s184 + $0xf0] sm:$0xff]
        %v255 = vld [vmem:[%s184 + $0xf8] sm:$0xff]
        %v256 = vld [vmem:[%s1] sm:$0xff]
        %v257 = vld [vmem:[%s1 + $0x8] sm:$0xff]
        %vm258 = vcmask 130048
        %v260 = vsel %vm258, %v224, 0
        %v263 = vsel %vm258, %v225, 0
        %v266 = vsel %vm258, %v226, 0
        %v269 = vsel %vm258, %v227, 0
        %v272 = vsel %vm258, %v228, 0
        %v275 = vsel %vm258, %v229, 0
        %v278 = vsel %vm258, %v230, 0
        %v281 = vsel %vm258, %v231, 0
        %v284 = vsel %vm258, %v232, 0
        %v287 = vsel %vm258, %v233, 0
        %v290 = vsel %vm258, %v234, 0
        %v293 = vsel %vm258, %v235, 0
        %v296 = vsel %vm258, %v236, 0
        %v299 = vsel %vm258, %v237, 0
        %v302 = vsel %vm258, %v238, 0
        %v305 = vsel %vm258, %v239, 0
        %v308 = vsel %vm258, %v240, 0
        %v311 = vsel %vm258, %v241, 0
        %v314 = vsel %vm258, %v242, 0
        %v317 = vsel %vm258, %v243, 0
        %v320 = vsel %vm258, %v244, 0
        %v323 = vsel %vm258, %v245, 0
        %v326 = vsel %vm258, %v246, 0
        %v329 = vsel %vm258, %v247, 0
        %v332 = vsel %vm258, %v248, 0
        %v335 = vsel %vm258, %v249, 0
        %v338 = vsel %vm258, %v250, 0
        %v341 = vsel %vm258, %v251, 0
        %v344 = vsel %vm258, %v252, 0
        %v347 = vsel %vm258, %v253, 0
        %v350 = vsel %vm258, %v254, 0
        %v353 = vsel %vm258, %v255, 0
        %355 = vmatpush.msra.mxu0 0.0
        %356 = vmatpush.msra.mxu0 0.0
        %357 = vmatpush.msra.mxu0 0.0
        %358 = vmatpush.msra.mxu0 0.0
        %359 = vmatpush.msra.mxu0 0.0
        %360 = vmatpush.msra.mxu0 0.0
        %361 = vmatpush.msra.mxu0 0.0
        %362 = vmatpush.msra.mxu0 0.0
        %363 = vmatpush.msra.mxu0 0.0
        %364 = vmatpush.msra.mxu0 0.0
        %365 = vmatpush.msra.mxu0 0.0
        %366 = vmatpush.msra.mxu0 0.0
        %367 = vmatpush.msra.mxu0 0.0
        %368 = vmatpush.msra.mxu0 0.0
        %369 = vmatpush.msra.mxu0 %v257
        %370 = vmatpush.msra.mxu0 %v256
        %371 = vmatmul.f32.gmra.mxu0 %v260
        %v372 = vpop.f32.mrf.mxu0
        %v373 = vadd.f32 0.0, %v372
        %374 = vmatmul.f32.gmra.mxu0 %v263
        %v375 = vpop.f32.mrf.mxu0
        %v376 = vadd.f32 0.0, %v375
        %377 = vmatmul.f32.gmra.mxu0 %v266
        %v378 = vpop.f32.mrf.mxu0
        %v379 = vadd.f32 0.0, %v378
        %380 = vmatmul.f32.gmra.mxu0 %v269
        %v381 = vpop.f32.mrf.mxu0
        %v382 = vadd.f32 0.0, %v381
        %383 = vmatmul.f32.gmra.mxu0 %v272
        %v384 = vpop.f32.mrf.mxu0
        %v385 = vadd.f32 0.0, %v384
        %386 = vmatmul.f32.gmra.mxu0 %v275
        %v387 = vpop.f32.mrf.mxu0
        %v388 = vadd.f32 0.0, %v387
        %389 = vmatmul.f32.gmra.mxu0 %v278
        %v390 = vpop.f32.mrf.mxu0
        %v391 = vadd.f32 0.0, %v390
        %392 = vmatmul.f32.gmra.mxu0 %v281
        %v393 = vpop.f32.mrf.mxu0
        %v394 = vadd.f32 0.0, %v393
        %395 = vmatmul.f32.gmra.mxu0 %v284
        %v396 = vpop.f32.mrf.mxu0
        %v397 = vadd.f32 0.0, %v396
        %398 = vmatmul.f32.gmra.mxu0 %v287
        %v399 = vpop.f32.mrf.mxu0
        %v400 = vadd.f32 0.0, %v399
        %401 = vmatmul.f32.gmra.mxu0 %v290
        %v402 = vpop.f32.mrf.mxu0
        %v403 = vadd.f32 0.0, %v402
        %404 = vmatmul.f32.gmra.mxu0 %v293
        %v405 = vpop.f32.mrf.mxu0
        %v406 = vadd.f32 0.0, %v405
        %407 = vmatmul.f32.gmra.mxu0 %v296
        %v408 = vpop.f32.mrf.mxu0
        %v409 = vadd.f32 0.0, %v408
        %410 = vmatmul.f32.gmra.mxu0 %v299
        %v411 = vpop.f32.mrf.mxu0
        %v412 = vadd.f32 0.0, %v411
        %413 = vmatmul.f32.gmra.mxu0 %v302
        %v414 = vpop.f32.mrf.mxu0
        %v415 = vadd.f32 0.0, %v414
        %416 = vmatmul.f32.gmra.mxu0 %v305
        %v417 = vpop.f32.mrf.mxu0
        %v418 = vadd.f32 0.0, %v417
        %419 = vmatmul.f32.gmra.mxu0 %v308
        %v420 = vpop.f32.mrf.mxu0
        %v421 = vadd.f32 0.0, %v420
        %422 = vmatmul.f32.gmra.mxu0 %v311
        %v423 = vpop.f32.mrf.mxu0
        %v424 = vadd.f32 0.0, %v423
        %425 = vmatmul.f32.gmra.mxu0 %v314
        %v426 = vpop.f32.mrf.mxu0
        %v427 = vadd.f32 0.0, %v426
        %428 = vmatmul.f32.gmra.mxu0 %v317
        %v429 = vpop.f32.mrf.mxu0
        %v430 = vadd.f32 0.0, %v429
        %431 = vmatmul.f32.gmra.mxu0 %v320
        %v432 = vpop.f32.mrf.mxu0
        %v433 = vadd.f32 0.0, %v432
        %434 = vmatmul.f32.gmra.mxu0 %v323
        %v435 = vpop.f32.mrf.mxu0
        %v436 = vadd.f32 0.0, %v435
        %437 = vmatmul.f32.gmra.mxu0 %v326
        %v438 = vpop.f32.mrf.mxu0
        %v439 = vadd.f32 0.0, %v438
        %440 = vmatmul.f32.gmra.mxu0 %v329
        %v441 = vpop.f32.mrf.mxu0
        %v442 = vadd.f32 0.0, %v441
        %443 = vmatmul.f32.gmra.mxu0 %v332
        %v444 = vpop.f32.mrf.mxu0
        %v445 = vadd.f32 0.0, %v444
        %446 = vmatmul.f32.gmra.mxu0 %v335
        %v447 = vpop.f32.mrf.mxu0
        %v448 = vadd.f32 0.0, %v447
        %449 = vmatmul.f32.gmra.mxu0 %v338
        %v450 = vpop.f32.mrf.mxu0
        %v451 = vadd.f32 0.0, %v450
        %452 = vmatmul.f32.gmra.mxu0 %v341
        %v453 = vpop.f32.mrf.mxu0
        %v454 = vadd.f32 0.0, %v453
        %455 = vmatmul.f32.gmra.mxu0 %v344
        %v456 = vpop.f32.mrf.mxu0
        %v457 = vadd.f32 0.0, %v456
        %458 = vmatmul.f32.gmra.mxu0 %v347
        %v459 = vpop.f32.mrf.mxu0
        %v460 = vadd.f32 0.0, %v459
        %461 = vmatmul.f32.gmra.mxu0 %v350
        %v462 = vpop.f32.mrf.mxu0
        %v463 = vadd.f32 0.0, %v462
        %464 = vmatmul.f32.gmra.mxu0 %v353
        %v465 = vpop.f32.mrf.mxu0
        %v466 = vadd.f32 0.0, %v465
        %467 = vdwg.mxu0
        %vm468 = vcmask 31744
        %469 = vst.msk [vmem:[%s215] sm:$0xff] %vm468, %v373
        %470 = vst.msk [vmem:[%s215 + $0x8] sm:$0xff] %vm468, %v376
        %471 = vst.msk [vmem:[%s215 + $0x10] sm:$0xff] %vm468, %v379
        %472 = vst.msk [vmem:[%s215 + $0x18] sm:$0xff] %vm468, %v382
        %473 = vst.msk [vmem:[%s215 + $0x20] sm:$0xff] %vm468, %v385
        %474 = vst.msk [vmem:[%s215 + $0x28] sm:$0xff] %vm468, %v388
        %475 = vst.msk [vmem:[%s215 + $0x30] sm:$0xff] %vm468, %v391
        %476 = vst.msk [vmem:[%s215 + $0x38] sm:$0xff] %vm468, %v394
        %477 = vst.msk [vmem:[%s215 + $0x40] sm:$0xff] %vm468, %v397
        %478 = vst.msk [vmem:[%s215 + $0x48] sm:$0xff] %vm468, %v400
        %479 = vst.msk [vmem:[%s215 + $0x50] sm:$0xff] %vm468, %v403
        %480 = vst.msk [vmem:[%s215 + $0x58] sm:$0xff] %vm468, %v406
        %481 = vst.msk [vmem:[%s215 + $0x60] sm:$0xff] %vm468, %v409
        %482 = vst.msk [vmem:[%s215 + $0x68] sm:$0xff] %vm468, %v412
        %483 = vst.msk [vmem:[%s215 + $0x70] sm:$0xff] %vm468, %v415
        %484 = vst.msk [vmem:[%s215 + $0x78] sm:$0xff] %vm468, %v418
        %485 = vst.msk [vmem:[%s215 + $0x80] sm:$0xff] %vm468, %v421
        %486 = vst.msk [vmem:[%s215 + $0x88] sm:$0xff] %vm468, %v424
        %487 = vst.msk [vmem:[%s215 + $0x90] sm:$0xff] %vm468, %v427
        %488 = vst.msk [vmem:[%s215 + $0x98] sm:$0xff] %vm468, %v430
        %489 = vst.msk [vmem:[%s215 + $0xa0] sm:$0xff] %vm468, %v433
        %490 = vst.msk [vmem:[%s215 + $0xa8] sm:$0xff] %vm468, %v436
        %491 = vst.msk [vmem:[%s215 + $0xb0] sm:$0xff] %vm468, %v439
        %492 = vst.msk [vmem:[%s215 + $0xb8] sm:$0xff] %vm468, %v442
        %493 = vst.msk [vmem:[%s215 + $0xc0] sm:$0xff] %vm468, %v445
        %494 = vst.msk [vmem:[%s215 + $0xc8] sm:$0xff] %vm468, %v448
        %495 = vst.msk [vmem:[%s215 + $0xd0] sm:$0xff] %vm468, %v451
        %496 = vst.msk [vmem:[%s215 + $0xd8] sm:$0xff] %vm468, %v454
        %497 = vst.msk [vmem:[%s215 + $0xe0] sm:$0xff] %vm468, %v457
        %498 = vst.msk [vmem:[%s215 + $0xe8] sm:$0xff] %vm468, %v460
        %499 = vst.msk [vmem:[%s215 + $0xf0] sm:$0xff] %vm468, %v463
        %500 = vst.msk [vmem:[%s215 + $0xf8] sm:$0xff] %vm468, %v466
        %v501 = vld [vmem:[%s3] sm:$0x1]
        %v502 = vsel %vm468, %v373, 0.0
        %v503 = vsel %vm468, %v376, 0.0
        %v504 = vadd.f32 %v502, %v503
        %v505 = vsel %vm468, %v379, 0.0
        %v506 = vadd.f32 %v504, %v505
        %v507 = vsel %vm468, %v382, 0.0
        %v508 = vadd.f32 %v506, %v507
        %v509 = vsel %vm468, %v385, 0.0
        %v510 = vadd.f32 %v508, %v509
        %v511 = vsel %vm468, %v388, 0.0
        %v512 = vadd.f32 %v510, %v511
        %v513 = vsel %vm468, %v391, 0.0
        %v514 = vadd.f32 %v512, %v513
        %v515 = vsel %vm468, %v394, 0.0
        %v516 = vadd.f32 %v514, %v515
        %v517 = vsel %vm468, %v397, 0.0
        %v518 = vadd.f32 %v516, %v517
        %v519 = vsel %vm468, %v400, 0.0
        %v520 = vadd.f32 %v518, %v519
        %v521 = vsel %vm468, %v403, 0.0
        %v522 = vadd.f32 %v520, %v521
        %v523 = vsel %vm468, %v406, 0.0
        %v524 = vadd.f32 %v522, %v523
        %v525 = vsel %vm468, %v409, 0.0
        %v526 = vadd.f32 %v524, %v525
        %v527 = vsel %vm468, %v412, 0.0
        %v528 = vadd.f32 %v526, %v527
        %v529 = vsel %vm468, %v415, 0.0
        %v530 = vadd.f32 %v528, %v529
        %v531 = vsel %vm468, %v418, 0.0
        %v532 = vadd.f32 %v530, %v531
        %v533 = vsel %vm468, %v421, 0.0
        %v534 = vadd.f32 %v532, %v533
        %v535 = vsel %vm468, %v424, 0.0
        %v536 = vadd.f32 %v534, %v535
        %v537 = vsel %vm468, %v427, 0.0
        %v538 = vadd.f32 %v536, %v537
        %v539 = vsel %vm468, %v430, 0.0
        %v540 = vadd.f32 %v538, %v539
        %v541 = vsel %vm468, %v433, 0.0
        %v542 = vadd.f32 %v540, %v541
        %v543 = vsel %vm468, %v436, 0.0
        %v544 = vadd.f32 %v542, %v543
        %v545 = vsel %vm468, %v439, 0.0
        %v546 = vadd.f32 %v544, %v545
        %v547 = vsel %vm468, %v442, 0.0
        %v548 = vadd.f32 %v546, %v547
        %v549 = vsel %vm468, %v445, 0.0
        %v550 = vadd.f32 %v548, %v549
        %v551 = vsel %vm468, %v448, 0.0
        %v552 = vadd.f32 %v550, %v551
        %v553 = vsel %vm468, %v451, 0.0
        %v554 = vadd.f32 %v552, %v553
        %v555 = vsel %vm468, %v454, 0.0
        %v556 = vadd.f32 %v554, %v555
        %v557 = vsel %vm468, %v457, 0.0
        %v558 = vadd.f32 %v556, %v557
        %v559 = vsel %vm468, %v460, 0.0
        %v560 = vadd.f32 %v558, %v559
        %v561 = vsel %vm468, %v463, 0.0
        %v562 = vadd.f32 %v560, %v561
        %v563 = vsel %vm468, %v466, 0.0
        %v564 = vadd.f32 %v562, %v563
        %v565 = vrot.slane %v564, 4
        %v566 = vadd.f32 %v564, %v565
        %v567 = vrot.slane %v566, 2
        %v568 = vadd.f32 %v566, %v567
        %v569 = vrot.slane %v568, 1
        %v570 = vadd.f32 %v568, %v569
        %v571 = vadd.f32 %v501, %v570
        %vm572 = vcmask 24576
        %573 = vst.msk [vmem:[%s3] sm:$0x1] %vm572, %v571
        %v574 = vld [vmem:[%s4] sm:$0x1]
        %v575 = vmul.f32 %v373, %v373
        %v576 = vmul.f32 %v376, %v376
        %v577 = vmul.f32 %v379, %v379
        %v578 = vmul.f32 %v382, %v382
        %v579 = vmul.f32 %v385, %v385
        %v580 = vmul.f32 %v388, %v388
        %v581 = vmul.f32 %v391, %v391
        %v582 = vmul.f32 %v394, %v394
        %v583 = vmul.f32 %v397, %v397
        %v584 = vmul.f32 %v400, %v400
        %v585 = vmul.f32 %v403, %v403
        %v586 = vmul.f32 %v406, %v406
        %v587 = vmul.f32 %v409, %v409
        %v588 = vmul.f32 %v412, %v412
        %v589 = vmul.f32 %v415, %v415
        %v590 = vmul.f32 %v418, %v418
        %v591 = vmul.f32 %v421, %v421
        %v592 = vmul.f32 %v424, %v424
        %v593 = vmul.f32 %v427, %v427
        %v594 = vmul.f32 %v430, %v430
        %v595 = vmul.f32 %v433, %v433
        %v596 = vmul.f32 %v436, %v436
        %v597 = vmul.f32 %v439, %v439
        %v598 = vmul.f32 %v442, %v442
        %v599 = vmul.f32 %v445, %v445
        %v600 = vmul.f32 %v448, %v448
        %v601 = vmul.f32 %v451, %v451
        %v602 = vmul.f32 %v454, %v454
        %v603 = vmul.f32 %v457, %v457
        %v604 = vmul.f32 %v460, %v460
        %v605 = vmul.f32 %v463, %v463
        %v606 = vmul.f32 %v466, %v466
        %v607 = vsel %vm468, %v575, 0.0
        %v608 = vsel %vm468, %v576, 0.0
        %v609 = vadd.f32 %v607, %v608
        %v610 = vsel %vm468, %v577, 0.0
        %v611 = vadd.f32 %v609, %v610
        %v612 = vsel %vm468, %v578, 0.0
        %v613 = vadd.f32 %v611, %v612
        %v614 = vsel %vm468, %v579, 0.0
        %v615 = vadd.f32 %v613, %v614
        %v616 = vsel %vm468, %v580, 0.0
        %v617 = vadd.f32 %v615, %v616
        %v618 = vsel %vm468, %v581, 0.0
        %v619 = vadd.f32 %v617, %v618
        %v620 = vsel %vm468, %v582, 0.0
        %v621 = vadd.f32 %v619, %v620
        %v622 = vsel %vm468, %v583, 0.0
        %v623 = vadd.f32 %v621, %v622
        %v624 = vsel %vm468, %v584, 0.0
        %v625 = vadd.f32 %v623, %v624
        %v626 = vsel %vm468, %v585, 0.0
        %v627 = vadd.f32 %v625, %v626
        %v628 = vsel %vm468, %v586, 0.0
        %v629 = vadd.f32 %v627, %v628
        %v630 = vsel %vm468, %v587, 0.0
        %v631 = vadd.f32 %v629, %v630
        %v632 = vsel %vm468, %v588, 0.0
        %v633 = vadd.f32 %v631, %v632
        %v634 = vsel %vm468, %v589, 0.0
        %v635 = vadd.f32 %v633, %v634
        %v636 = vsel %vm468, %v590, 0.0
        %v637 = vadd.f32 %v635, %v636
        %v638 = vsel %vm468, %v591, 0.0
        %v639 = vadd.f32 %v637, %v638
        %v640 = vsel %vm468, %v592, 0.0
        %v641 = vadd.f32 %v639, %v640
        %v642 = vsel %vm468, %v593, 0.0
        %v643 = vadd.f32 %v641, %v642
        %v644 = vsel %vm468, %v594, 0.0
        %v645 = vadd.f32 %v643, %v644
        %v646 = vsel %vm468, %v595, 0.0
        %v647 = vadd.f32 %v645, %v646
        %v648 = vsel %vm468, %v596, 0.0
        %v649 = vadd.f32 %v647, %v648
        %v650 = vsel %vm468, %v597, 0.0
        %v651 = vadd.f32 %v649, %v650
        %v652 = vsel %vm468, %v598, 0.0
        %v653 = vadd.f32 %v651, %v652
        %v654 = vsel %vm468, %v599, 0.0
        %v655 = vadd.f32 %v653, %v654
        %v656 = vsel %vm468, %v600, 0.0
        %v657 = vadd.f32 %v655, %v656
        %v658 = vsel %vm468, %v601, 0.0
        %v659 = vadd.f32 %v657, %v658
        %v660 = vsel %vm468, %v602, 0.0
        %v661 = vadd.f32 %v659, %v660
        %v662 = vsel %vm468, %v603, 0.0
        %v663 = vadd.f32 %v661, %v662
        %v664 = vsel %vm468, %v604, 0.0
        %v665 = vadd.f32 %v663, %v664
        %v666 = vsel %vm468, %v605, 0.0
        %v667 = vadd.f32 %v665, %v666
        %v668 = vsel %vm468, %v606, 0.0
        %v669 = vadd.f32 %v667, %v668
        %v670 = vrot.slane %v669, 4
        %v671 = vadd.f32 %v669, %v670
        %v672 = vrot.slane %v671, 2
        %v673 = vadd.f32 %v671, %v672
        %v674 = vrot.slane %v673, 1
        %v675 = vadd.f32 %v673, %v674
        %v676 = vadd.f32 %v574, %v675
        %677 = vst.msk [vmem:[%s4] sm:$0x1] %vm572, %v676
        %s678 = smul.u32 32, %s19
        %p679 = scmp.lt.s32.totalorder %s678, 63
        %s680 = scalar_select %p679, %s678, 63
        %s681 = smul.addr %s680, 8
        %s682 = scalar_lea.vmem %s2, %s681
        // Predicated region
        $region37: #{bottleneck_forward.4} parent=27 // pred_check
          %p683 = pneg %p84
        $region38: #{bottleneck_forward.4} parent=27 // pred_check_branch
          %685 = sbr.rel (%p683) target = $region40
        $region39: #{bottleneck_forward.4} parent=27 // pred_region
          %s686 = smul.u32 32, %s19
        $region40: #{bottleneck_forward.4} parent=27 // pred_fallthru
          _
        // Predicated region
        $region41: #{bottleneck_forward.4} parent=27 // pred_check
          %p687 = pneg %p105
        $region42: #{bottleneck_forward.4} parent=27 // pred_check_branch
          %689 = sbr.rel (%p687) target = $region44
        $region43: #{bottleneck_forward.4} parent=27 // pred_region
          _
        $region44: #{bottleneck_forward.4} parent=27 // pred_fallthru
          _
        // Predicated region
        $region45: #{bottleneck_forward.4} parent=27 // pred_check
          %p690 = pneg %p126
        $region46: #{bottleneck_forward.4} parent=27 // pred_check_branch
          %692 = sbr.rel (%p690) target = $region48
        $region47: #{bottleneck_forward.4} parent=27 // pred_region
          _
        $region48: #{bottleneck_forward.4} parent=27 // pred_fallthru
          _
        // Predicated region
        $region49: #{bottleneck_forward.4} parent=27 // pred_check
          %p693 = pneg %p105
        $region50: #{bottleneck_forward.4} parent=27 // pred_check_branch
          %695 = sbr.rel (%p693) target = $region52
        $region51: #{bottleneck_forward.4} parent=27 // pred_region
          _
        $region52: #{bottleneck_forward.4} parent=27 // pred_fallthru
          _
        // Predicated region
        $region53: #{bottleneck_forward.4} parent=27 // pred_check
          %p696 = pneg %p126
        $region54: #{bottleneck_forward.4} parent=27 // pred_check_branch
          %698 = sbr.rel (%p696) target = $region56
        $region55: #{bottleneck_forward.4} parent=27 // pred_region
          _
        $region56: #{bottleneck_forward.4} parent=27 // pred_fallthru
          _
      $region28: #{bottleneck_forward.4} parent=5 // pred_fallthru
        _
      %p699 = scmp.le.s32.totalorder 2, %s14
      // Predicated region
      $region57: #{bottleneck_forward.4} parent=5 // pred_check
        %p700 = pneg %p699
      $region58: #{bottleneck_forward.4} parent=5 // pred_check_branch
        %702 = sbr.rel (%p700) target = $region60
      $region59: #{bottleneck_forward.4} parent=5 // pred_region
        %s703 = ssub.s32 %s14, 2
        // Predicated region
        $region61: #{bottleneck_forward.4} parent=59 // pred_check
          %p704 = pneg %p90
        $region62: #{bottleneck_forward.4} parent=59 // pred_check_branch
          %706 = sbr.rel (%p704) target = $region64
        $region63: #{bottleneck_forward.4} parent=59 // pred_region
          %s707 = smul.u32 32, %s20
          %p708 = scmp.lt.s32.totalorder %s707, 63
          %s709 = scalar_select %p708, %s707, 63
          %s710 = smul.addr %s709, 8
          %s711 = scalar_lea.vmem %s2, %s710
        $region64: #{bottleneck_forward.4} parent=59 // pred_fallthru
          _
      $region60: #{bottleneck_forward.4} parent=5 // pred_fallthru
        _
    $region6: #{bottleneck_forward.4} parent=1 // loop_footer
      %s18 = sadd.s32 1, %s14
    $region7: #{bottleneck_forward.4} parent=1 // loop_footer_branch
      %13 = sbr.rel target = $region3
    $region8: #{bottleneck_forward.4} parent=1 // loop_exit
      _
    %712 = vsyncpa [#allocation3], 1
    %s713 = scalar_lea.sflag [#allocation3], 1
    %714 = vsyncpa %s713, 1

// kernel: bottleneck_forward.6
$region0: #{bottleneck_forward.6}
  #allocation0 [shape = 'u32[]', space=smem, size = 0x4, offset = 0x4, fixed_abs, tag = 'smem constant byte address 0x4 - core index']
  #allocation1 [shape = 'u32[72,128]{1,0:T(1,128)}', space=vmem, size = 0x9000, scoped, tag = 'internal scratch']
  %s0 = inlined_call_operand.vmem [shape: f32[512,4], index: 0, kind: input, shape index: {}]
  %s1 = inlined_call_operand.vmem [shape: f32[1,4], index: 1, kind: input, shape index: {}]
  %s2 = inlined_call_operand.vmem [shape: f32[1,4], index: 2, kind: input, shape index: {}]
  %s3 = inlined_call_operand.vmem [shape: f32[4,16], index: 3, kind: input, shape index: {}]
  %s4 = inlined_call_operand.vmem [shape: f32[512,16], index: 4, kind: output, shape index: {0}]
  %s5 = inlined_call_operand.vmem [shape: f32[1,16], index: 5, kind: output, shape index: {1}]
  %s6 = inlined_call_operand.vmem [shape: f32[1,16], index: 6, kind: output, shape index: {2}]
  %7 = xla_tuple %s4, %s5, %s6
  %s8 = sld [smem:[#allocation0]]
  $region69: #{bottleneck_forward.6} parent=0
    _
  %s10 = ssub.s32 1, %s8
  %s11 = scalar_select 0, %s10, %s8
  loop: start=0, step=1, limit=4
  $region2: #{bottleneck_forward.6} parent=0 // loop_pre_header
    _
  $region3: #{bottleneck_forward.6} parent=0 // loop_header
    %s13 = sphi 0, %s17
    %p14 = scmp.ge.s32.totalorder %s13, 4
    %s23 = sphi 0, %s25
    %s26 = sphi 0, %s23
    %s27 = sphi 0, %s26
    %s43 = sphi 0, %s27
    %s47 = sphi 0, %s47
    %s49 = sphi 0, %s47
    %s50 = sphi 0, %s49
    %s64 = sphi 0, %s50
    %s68 = sphi 0, %s68
    %s70 = sphi 0, %s68
    %s71 = sphi 0, %s70
    %s85 = sphi 0, %s71
    %s89 = sphi 0, %s89
    %s91 = sphi 0, %s89
    %s92 = sphi 0, %s91
    %s106 = sphi 0, %s92
    %s112 = sphi 0, %s114
    %s115 = sphi 0, %s112
    %s116 = sphi 0, %s115
    %s132 = sphi 0, %s116
    %s136 = sphi 0, %s136
    %s138 = sphi 0, %s136
    %s139 = sphi 0, %s138
    %s153 = sphi 0, %s139
    %s157 = sphi 0, %s157
    %s159 = sphi 0, %s157
    %s160 = sphi 0, %s159
    %s174 = sphi 0, %s160
  $region4: #{bottleneck_forward.6} parent=0 // loop_header_branch
    %16 = sbr.rel (%p14) target = $region8
  $region5: #{bottleneck_forward.6} parent=0 // loop_body
    %s18 = ssub.s32 %s13, 1
    %s19 = ssub.s32 %s13, 2
    %s20 = sadd.s32 %s13, 1
    %s21 = ssub.s32 %s13, %s20
    %p22 = scmp.eq.s32.totalorder %s21, 0
    %s24 = sadd.s32 %s23, 1
    %s25 = scalar_select %p22, %s23, %s24
    %p28 = pneg %p22
    %p29 = scmp.eq.s32.totalorder %s13, 1
    %p30 = por %p28, %p29
    %p31 = scmp.ne.s32.totalorder %s23, %s26
    %p32 = scmp.eq.s32.totalorder %s13, 0
    %p33 = por %p31, %p32
    %p34 = scmp.ne.s32.totalorder %s23, %s26
    %p35 = scmp.eq.s32.totalorder %s18, 1
    %p36 = por %p34, %p35
    %p37 = scmp.ne.s32.totalorder %s26, %s27
    %p38 = scmp.eq.s32.totalorder %s18, 0
    %p39 = por %p37, %p38
    %p40 = scmp.ne.s32.totalorder %s26, %s27
    %p41 = scmp.eq.s32.totalorder %s19, 1
    %p42 = por %p40, %p41
    %p44 = scmp.ne.s32.totalorder %s27, %s43
    %p45 = scmp.eq.s32.totalorder %s19, 0
    %p46 = por %p44, %p45
    %s48 = sadd.s32 %s47, 1
    %p51 = scmp.eq.s32.totalorder %s13, 1
    %p52 = scmp.ne.s32.totalorder %s47, %s49
    %p53 = scmp.eq.s32.totalorder %s13, 0
    %p54 = por %p52, %p53
    %p55 = scmp.ne.s32.totalorder %s47, %s49
    %p56 = scmp.eq.s32.totalorder %s18, 1
    %p57 = por %p55, %p56
    %p58 = scmp.ne.s32.totalorder %s49, %s50
    %p59 = scmp.eq.s32.totalorder %s18, 0
    %p60 = por %p58, %p59
    %p61 = scmp.ne.s32.totalorder %s49, %s50
    %p62 = scmp.eq.s32.totalorder %s19, 1
    %p63 = por %p61, %p62
    %p65 = scmp.ne.s32.totalorder %s50, %s64
    %p66 = scmp.eq.s32.totalorder %s19, 0
    %p67 = por %p65, %p66
    %s69 = sadd.s32 %s68, 1
    %p72 = scmp.eq.s32.totalorder %s13, 1
    %p73 = scmp.ne.s32.totalorder %s68, %s70
    %p74 = scmp.eq.s32.totalorder %s13, 0
    %p75 = por %p73, %p74
    %p76 = scmp.ne.s32.totalorder %s68, %s70
    %p77 = scmp.eq.s32.totalorder %s18, 1
    %p78 = por %p76, %p77
    %p79 = scmp.ne.s32.totalorder %s70, %s71
    %p80 = scmp.eq.s32.totalorder %s18, 0
    %p81 = por %p79, %p80
    %p82 = scmp.ne.s32.totalorder %s70, %s71
    %p83 = scmp.eq.s32.totalorder %s19, 1
    %p84 = por %p82, %p83
    %p86 = scmp.ne.s32.totalorder %s71, %s85
    %p87 = scmp.eq.s32.totalorder %s19, 0
    %p88 = por %p86, %p87
    %s90 = sadd.s32 %s89, 1
    %p93 = scmp.eq.s32.totalorder %s13, 1
    %p94 = scmp.ne.s32.totalorder %s89, %s91
    %p95 = scmp.eq.s32.totalorder %s13, 0
    %p96 = por %p94, %p95
    %p97 = scmp.ne.s32.totalorder %s89, %s91
    %p98 = scmp.eq.s32.totalorder %s18, 1
    %p99 = por %p97, %p98
    %p100 = scmp.ne.s32.totalorder %s91, %s92
    %p101 = scmp.eq.s32.totalorder %s18, 0
    %p102 = por %p100, %p101
    %p103 = scmp.ne.s32.totalorder %s91, %s92
    %p104 = scmp.eq.s32.totalorder %s19, 1
    %p105 = por %p103, %p104
    %p107 = scmp.ne.s32.totalorder %s92, %s106
    %p108 = scmp.eq.s32.totalorder %s19, 0
    %p109 = por %p107, %p108
    %s110 = ssub.s32 %s13, %s20
    %p111 = scmp.eq.s32.totalorder %s110, 0
    %s113 = sadd.s32 %s112, 1
    %s114 = scalar_select %p111, %s112, %s113
    %p117 = pneg %p111
    %p118 = scmp.eq.s32.totalorder %s13, 1
    %p119 = por %p117, %p118
    %p120 = scmp.ne.s32.totalorder %s112, %s115
    %p121 = scmp.eq.s32.totalorder %s13, 0
    %p122 = por %p120, %p121
    %p123 = scmp.ne.s32.totalorder %s112, %s115
    %p124 = scmp.eq.s32.totalorder %s18, 1
    %p125 = por %p123, %p124
    %p126 = scmp.ne.s32.totalorder %s115, %s116
    %p127 = scmp.eq.s32.totalorder %s18, 0
    %p128 = por %p126, %p127
    %p129 = scmp.ne.s32.totalorder %s115, %s116
    %p130 = scmp.eq.s32.totalorder %s19, 1
    %p131 = por %p129, %p130
    %p133 = scmp.ne.s32.totalorder %s116, %s132
    %p134 = scmp.eq.s32.totalorder %s19, 0
    %p135 = por %p133, %p134
    %s137 = sadd.s32 %s136, 1
    %p140 = scmp.eq.s32.totalorder %s13, 1
    %p141 = scmp.ne.s32.totalorder %s136, %s138
    %p142 = scmp.eq.s32.totalorder %s13, 0
    %p143 = por %p141, %p142
    %p144 = scmp.ne.s32.totalorder %s136, %s138
    %p145 = scmp.eq.s32.totalorder %s18, 1
    %p146 = por %p144, %p145
    %p147 = scmp.ne.s32.totalorder %s138, %s139
    %p148 = scmp.eq.s32.totalorder %s18, 0
    %p149 = por %p147, %p148
    %p150 = scmp.ne.s32.totalorder %s138, %s139
    %p151 = scmp.eq.s32.totalorder %s19, 1
    %p152 = por %p150, %p151
    %p154 = scmp.ne.s32.totalorder %s139, %s153
    %p155 = scmp.eq.s32.totalorder %s19, 0
    %p156 = por %p154, %p155
    %s158 = sadd.s32 %s157, 1
    %p161 = scmp.eq.s32.totalorder %s13, 1
    %p162 = scmp.ne.s32.totalorder %s157, %s159
    %p163 = scmp.eq.s32.totalorder %s13, 0
    %p164 = por %p162, %p163
    %p165 = scmp.ne.s32.totalorder %s157, %s159
    %p166 = scmp.eq.s32.totalorder %s18, 1
    %p167 = por %p165, %p166
    %p168 = scmp.ne.s32.totalorder %s159, %s160
    %p169 = scmp.eq.s32.totalorder %s18, 0
    %p170 = por %p168, %p169
    %p171 = scmp.ne.s32.totalorder %s159, %s160
    %p172 = scmp.eq.s32.totalorder %s19, 1
    %p173 = por %p171, %p172
    %p175 = scmp.ne.s32.totalorder %s160, %s174
    %p176 = scmp.eq.s32.totalorder %s19, 0
    %p177 = por %p175, %p176
    %p178 = scmp.le.s32.totalorder 1, %s13
    %p179 = scmp.lt.s32.totalorder %s13, 3
    %p180 = pnand %p178, %p179
    %p181 = pneg %p180
    // Predicated region
    $region9: #{bottleneck_forward.6} parent=5 // pred_check
      _
    $region10: #{bottleneck_forward.6} parent=5 // pred_check_branch
      %183 = sbr.rel (%p180) target = $region12
    $region11: #{bottleneck_forward.6} parent=5 // pred_region
      %s184 = ssub.s32 %s13, 1
      // Predicated region
      $region13: #{bottleneck_forward.6} parent=11 // pred_check
        %p185 = pneg %p60
      $region14: #{bottleneck_forward.6} parent=11 // pred_check_branch
        %187 = sbr.rel (%p185) target = $region16
      $region15: #{bottleneck_forward.6} parent=11 // pred_region
        _
      $region16: #{bottleneck_forward.6} parent=11 // pred_fallthru
        _
      // Predicated region
      $region17: #{bottleneck_forward.6} parent=11 // pred_check
        %p188 = pneg %p81
      $region18: #{bottleneck_forward.6} parent=11 // pred_check_branch
        %190 = sbr.rel (%p188) target = $region20
      $region19: #{bottleneck_forward.6} parent=11 // pred_region
        _
      $region20: #{bottleneck_forward.6} parent=11 // pred_fallthru
        _
      // Predicated region
      $region21: #{bottleneck_forward.6} parent=11 // pred_check
        %p191 = pneg %p102
      $region22: #{bottleneck_forward.6} parent=11 // pred_check_branch
        %193 = sbr.rel (%p191) target = $region24
      $region23: #{bottleneck_forward.6} parent=11 // pred_region
        _
      $region24: #{bottleneck_forward.6} parent=11 // pred_fallthru
        _
    $region12: #{bottleneck_forward.6} parent=5 // pred_fallthru
      _
    %p194 = scmp.lt.s32.totalorder %s13, 2
    // Predicated region
    $region25: #{bottleneck_forward.6} parent=5 // pred_check
      %p195 = pneg %p194
    $region26: #{bottleneck_forward.6} parent=5 // pred_check_branch
      %197 = sbr.rel (%p195) target = $region28
    $region27: #{bottleneck_forward.6} parent=5 // pred_region
      // Predicated region
      $region29: #{bottleneck_forward.6} parent=27 // pred_check
        %p198 = pneg %p33
      $region30: #{bottleneck_forward.6} parent=27 // pred_check_branch
        %200 = sbr.rel (%p198) target = $region32
      $region31: #{bottleneck_forward.6} parent=27 // pred_region
        %s201 = smul.u32 32, %s13
        %p202 = scmp.lt.s32.totalorder %s201, 63
        %s203 = scalar_select %p202, %s201, 63
        %s204 = smul.addr %s203, 8
        %s205 = scalar_lea.vmem %s0, %s204
        %s206 = smul.u32 32, %s13
      $region32: #{bottleneck_forward.6} parent=27 // pred_fallthru
        _
    $region28: #{bottleneck_forward.6} parent=5 // pred_fallthru
      _
    %p207 = scmp.le.s32.totalorder 1, %s13
    %p208 = scmp.lt.s32.totalorder %s13, 3
    %p209 = pnand %p207, %p208
    %p210 = pneg %p209
    // Predicated region
    $region33: #{bottleneck_forward.6} parent=5 // pred_check
      _
    $region34: #{bottleneck_forward.6} parent=5 // pred_check_branch
      %212 = sbr.rel (%p209) target = $region36
    $region35: #{bottleneck_forward.6} parent=5 // pred_region
      %s213 = ssub.s32 %s13, 1
      %s214 = smul.u32 32, %s18
      %p215 = scmp.lt.s32.totalorder %s214, 63
      %s216 = scalar_select %p215, %s214, 63
      %s217 = smul.addr %s216, 8
      %s218 = scalar_lea.vmem %s0, %s217
      %p219 = pneg %p39
      %p220 = pneg %p36
      %p221 = pneg %p60
      %p222 = pneg %p57
      %p223 = pneg %p81
      %p224 = pneg %p78
      %p225 = pneg %p102
      %p226 = pneg %p99
      %p227 = pneg %p128
      %p228 = pneg %p125
      %s229 = smul.u32 32, %s18
      %p230 = scmp.lt.s32.totalorder %s229, 63
      %s231 = scalar_select %p230, %s229, 63
      %s232 = smul.addr %s231, 8
      %s233 = scalar_lea.vmem %s4, %s232
      %p234 = pneg %p149
      %p235 = pneg %p146
      %p236 = pneg %p170
      %p237 = pneg %p167
      %s238 = smul.u32 32, %s18
      %p239 = scmp.lt.s32.totalorder %s238, 63
      %s240 = scalar_select %p239, %s238, 63
      %s241 = smul.addr %s240, 8
      %s242 = scalar_lea.vmem %s0, %s241
      %s243 = smul.u32 32, %s18
      %s244 = smul.u32 32, %s18
      %p245 = scmp.lt.s32.totalorder %s244, 63
      %s246 = scalar_select %p245, %s244, 63
      %s247 = smul.addr %s246, 8
      %s248 = scalar_lea.vmem %s4, %s247
      %s249 = smul.u32 32, %s18
      %p250 = scmp.eq.s32.totalorder %s18, 0
      // Predicated region
      $region37: #{bottleneck_forward.6} parent=35 // pred_check
        %p251 = pneg %p250
      $region38: #{bottleneck_forward.6} parent=35 // pred_check_branch
        %253 = sbr.rel (%p251) target = $region40
      $region39: #{bottleneck_forward.6} parent=35 // pred_region
        %vm254 = vcmask 122880
        %255 = vst.msk [vmem:[%s5] sm:$0x1] %vm254, 0.0
        %256 = vst.msk [vmem:[%s6] sm:$0x1] %vm254, 0.0
      $region40: #{bottleneck_forward.6} parent=35 // pred_fallthru
        _
      %v257 = vld [vmem:[%s242] sm:$0xff]
      %v258 = vld [vmem:[%s242 + $0x8] sm:$0xff]
      %v259 = vld [vmem:[%s242 + $0x10] sm:$0xff]
      %v260 = vld [vmem:[%s242 + $0x18] sm:$0xff]
      %v261 = vld [vmem:[%s242 + $0x20] sm:$0xff]
      %v262 = vld [vmem:[%s242 + $0x28] sm:$0xff]
      %v263 = vld [vmem:[%s242 + $0x30] sm:$0xff]
      %v264 = vld [vmem:[%s242 + $0x38] sm:$0xff]
      %v265 = vld [vmem:[%s242 + $0x40] sm:$0xff]
      %v266 = vld [vmem:[%s242 + $0x48] sm:$0xff]
      %v267 = vld [vmem:[%s242 + $0x50] sm:$0xff]
      %v268 = vld [vmem:[%s242 + $0x58] sm:$0xff]
      %v269 = vld [vmem:[%s242 + $0x60] sm:$0xff]
      %v270 = vld [vmem:[%s242 + $0x68] sm:$0xff]
      %v271 = vld [vmem:[%s242 + $0x70] sm:$0xff]
      %v272 = vld [vmem:[%s242 + $0x78] sm:$0xff]
      %v273 = vld [vmem:[%s242 + $0x80] sm:$0xff]
      %v274 = vld [vmem:[%s242 + $0x88] sm:$0xff]
      %v275 = vld [vmem:[%s242 + $0x90] sm:$0xff]
      %v276 = vld [vmem:[%s242 + $0x98] sm:$0xff]
      %v277 = vld [vmem:[%s242 + $0xa0] sm:$0xff]
      %v278 = vld [vmem:[%s242 + $0xa8] sm:$0xff]
      %v279 = vld [vmem:[%s242 + $0xb0] sm:$0xff]
      %v280 = vld [vmem:[%s242 + $0xb8] sm:$0xff]
      %v281 = vld [vmem:[%s242 + $0xc0] sm:$0xff]
      %v282 = vld [vmem:[%s242 + $0xc8] sm:$0xff]
      %v283 = vld [vmem:[%s242 + $0xd0] sm:$0xff]
      %v284 = vld [vmem:[%s242 + $0xd8] sm:$0xff]
      %v285 = vld [vmem:[%s242 + $0xe0] sm:$0xff]
      %v286 = vld [vmem:[%s242 + $0xe8] sm:$0xff]
      %v287 = vld [vmem:[%s242 + $0xf0] sm:$0xff]
      %v288 = vld [vmem:[%s242 + $0xf8] sm:$0xff]
      %v289 = vld [vmem:[%s1] sm:$0x1]
      %v291 = vperm.slane %v289, 0
      %v293 = vmul.f32 %v257, %v291
      %v294 = vmul.f32 %v258, %v291
      %v295 = vmul.f32 %v259, %v291
      %v296 = vmul.f32 %v260, %v291
      %v297 = vmul.f32 %v261, %v291
      %v298 = vmul.f32 %v262, %v291
      %v299 = vmul.f32 %v263, %v291
      %v300 = vmul.f32 %v264, %v291
      %v301 = vmul.f32 %v265, %v291
      %v302 = vmul.f32 %v266, %v291
      %v303 = vmul.f32 %v267, %v291
      %v304 = vmul.f32 %v268, %v291
      %v305 = vmul.f32 %v269, %v291
      %v306 = vmul.f32 %v270, %v291
      %v307 = vmul.f32 %v271, %v291
      %v308 = vmul.f32 %v272, %v291
      %v309 = vmul.f32 %v273, %v291
      %v310 = vmul.f32 %v274, %v291
      %v311 = vmul.f32 %v275, %v291
      %v312 = vmul.f32 %v276, %v291
      %v313 = vmul.f32 %v277, %v291
      %v314 = vmul.f32 %v278, %v291
      %v315 = vmul.f32 %v279, %v291
      %v316 = vmul.f32 %v280, %v291
      %v317 = vmul.f32 %v281, %v291
      %v318 = vmul.f32 %v282, %v291
      %v319 = vmul.f32 %v283, %v291
      %v320 = vmul.f32 %v284, %v291
      %v321 = vmul.f32 %v285, %v291
      %v322 = vmul.f32 %v286, %v291
      %v323 = vmul.f32 %v287, %v291
      %v324 = vmul.f32 %v288, %v291
      %v325 = vld [vmem:[%s2] sm:$0x1]
      %v327 = vperm.slane %v325, 0
      %v329 = vadd.f32 %v293, %v327
      %v330 = vadd.f32 %v294, %v327
      %v331 = vadd.f32 %v295, %v327
      %v332 = vadd.f32 %v296, %v327
      %v333 = vadd.f32 %v297, %v327
      %v334 = vadd.f32 %v298, %v327
      %v335 = vadd.f32 %v299, %v327
      %v336 = vadd.f32 %v300, %v327
      %v337 = vadd.f32 %v301, %v327
      %v338 = vadd.f32 %v302, %v327
      %v339 = vadd.f32 %v303, %v327
      %v340 = vadd.f32 %v304, %v327
      %v341 = vadd.f32 %v305, %v327
      %v342 = vadd.f32 %v306, %v327
      %v343 = vadd.f32 %v307, %v327
      %v344 = vadd.f32 %v308, %v327
      %v345 = vadd.f32 %v309, %v327
      %v346 = vadd.f32 %v310, %v327
      %v347 = vadd.f32 %v311, %v327
      %v348 = vadd.f32 %v312, %v327
      %v349 = vadd.f32 %v313, %v327
      %v350 = vadd.f32 %v314, %v327
      %v351 = vadd.f32 %v315, %v327
      %v352 = vadd.f32 %v316, %v327
      %v353 = vadd.f32 %v317, %v327
      %v354 = vadd.f32 %v318, %v327
      %v355 = vadd.f32 %v319, %v327
      %v356 = vadd.f32 %v320, %v327
      %v357 = vadd.f32 %v321, %v327
      %v358 = vadd.f32 %v322, %v327
      %v359 = vadd.f32 %v323, %v327
      %v360 = vadd.f32 %v324, %v327
      %v361 = vmax.f32 %v329, 0.0
      %v362 = vmax.f32 %v330, 0.0
      %v363 = vmax.f32 %v331, 0.0
      %v364 = vmax.f32 %v332, 0.0
      %v365 = vmax.f32 %v333, 0.0
      %v366 = vmax.f32 %v334, 0.0
      %v367 = vmax.f32 %v335, 0.0
      %v368 = vmax.f32 %v336, 0.0
      %v369 = vmax.f32 %v337, 0.0
      %v370 = vmax.f32 %v338, 0.0
      %v371 = vmax.f32 %v339, 0.0
      %v372 = vmax.f32 %v340, 0.0
      %v373 = vmax.f32 %v341, 0.0
      %v374 = vmax.f32 %v342, 0.0
      %v375 = vmax.f32 %v343, 0.0
      %v376 = vmax.f32 %v344, 0.0
      %v377 = vmax.f32 %v345, 0.0
      %v378 = vmax.f32 %v346, 0.0
      %v379 = vmax.f32 %v347, 0.0
      %v380 = vmax.f32 %v348, 0.0
      %v381 = vmax.f32 %v349, 0.0
      %v382 = vmax.f32 %v350, 0.0
      %v383 = vmax.f32 %v351, 0.0
      %v384 = vmax.f32 %v352, 0.0
      %v385 = vmax.f32 %v353, 0.0
      %v386 = vmax.f32 %v354, 0.0
      %v387 = vmax.f32 %v355, 0.0
      %v388 = vmax.f32 %v356, 0.0
      %v389 = vmax.f32 %v357, 0.0
      %v390 = vmax.f32 %v358, 0.0
      %v391 = vmax.f32 %v359, 0.0
      %v392 = vmax.f32 %v360, 0.0
      %v393 = vld [vmem:[%s3] sm:$0xf]
      %vm394 = vcmask 31744
      %v396 = vsel %vm394, %v361, 0
      %v399 = vsel %vm394, %v362, 0
      %v402 = vsel %vm394, %v363, 0
      %v405 = vsel %vm394, %v364, 0
      %v408 = vsel %vm394, %v365, 0
      %v411 = vsel %vm394, %v366, 0
      %v414 = vsel %vm394, %v367, 0
      %v417 = vsel %vm394, %v368, 0
      %v420 = vsel %vm394, %v369, 0
      %v423 = vsel %vm394, %v370, 0
      %v426 = vsel %vm394, %v371, 0
      %v429 = vsel %vm394, %v372, 0
      %v432 = vsel %vm394, %v373, 0
      %v435 = vsel %vm394, %v374, 0
      %v438 = vsel %vm394, %v375, 0
      %v441 = vsel %vm394, %v376, 0
      %v444 = vsel %vm394, %v377, 0
      %v447 = vsel %vm394, %v378, 0
      %v450 = vsel %vm394, %v379, 0
      %v453 = vsel %vm394, %v380, 0
      %v456 = vsel %vm394, %v381, 0
      %v459 = vsel %vm394, %v382, 0
      %v462 = vsel %vm394, %v383, 0
      %v465 = vsel %vm394, %v384, 0
      %v468 = vsel %vm394, %v385, 0
      %v471 = vsel %vm394, %v386, 0
      %v474 = vsel %vm394, %v387, 0
      %v477 = vsel %vm394, %v388, 0
      %v480 = vsel %vm394, %v389, 0
      %v483 = vsel %vm394, %v390, 0
      %v486 = vsel %vm394, %v391, 0
      %v489 = vsel %vm394, %v392, 0
      %vm491 = vcmask 1043456
      %v493 = vsel %vm491, %v393, 0
      %495 = vmatpush.msra.mxu0 0.0
      %496 = vmatpush.msra.mxu0 0.0
      %497 = vmatpush.msra.mxu0 0.0
      %498 = vmatpush.msra.mxu0 0.0
      %499 = vmatpush.msra.mxu0 0.0
      %500 = vmatpush.msra.mxu0 0.0
      %501 = vmatpush.msra.mxu0 0.0
      %502 = vmatpush.msra.mxu0 0.0
      %503 = vmatpush.msra.mxu0 0.0
      %504 = vmatpush.msra.mxu0 0.0
      %505 = vmatpush.msra.mxu0 0.0
      %506 = vmatpush.msra.mxu0 0.0
      %507 = vmatpush.msra.mxu0 0.0
      %508 = vmatpush.msra.mxu0 0.0
      %509 = vmatpush.msra.mxu0 0.0
      %510 = vmatpush.msra.mxu0 %v493
      %511 = vmatmul.f32.gmra.mxu0 %v396
      %v512 = vpop.f32.mrf.mxu0
      %v513 = vadd.f32 0.0, %v512
      %514 = vmatmul.f32.gmra.mxu0 %v399
      %v515 = vpop.f32.mrf.mxu0
      %v516 = vadd.f32 0.0, %v515
      %517 = vmatmul.f32.gmra.mxu0 %v402
      %v518 = vpop.f32.mrf.mxu0
      %v519 = vadd.f32 0.0, %v518
      %520 = vmatmul.f32.gmra.mxu0 %v405
      %v521 = vpop.f32.mrf.mxu0
      %v522 = vadd.f32 0.0, %v521
      %523 = vmatmul.f32.gmra.mxu0 %v408
      %v524 = vpop.f32.mrf.mxu0
      %v525 = vadd.f32 0.0, %v524
      %526 = vmatmul.f32.gmra.mxu0 %v411
      %v527 = vpop.f32.mrf.mxu0
      %v528 = vadd.f32 0.0, %v527
      %529 = vmatmul.f32.gmra.mxu0 %v414
      %v530 = vpop.f32.mrf.mxu0
      %v531 = vadd.f32 0.0, %v530
      %532 = vmatmul.f32.gmra.mxu0 %v417
      %v533 = vpop.f32.mrf.mxu0
      %v534 = vadd.f32 0.0, %v533
      %535 = vmatmul.f32.gmra.mxu0 %v420
      %v536 = vpop.f32.mrf.mxu0
      %v537 = vadd.f32 0.0, %v536
      %538 = vmatmul.f32.gmra.mxu0 %v423
      %v539 = vpop.f32.mrf.mxu0
      %v540 = vadd.f32 0.0, %v539
      %541 = vmatmul.f32.gmra.mxu0 %v426
      %v542 = vpop.f32.mrf.mxu0
      %v543 = vadd.f32 0.0, %v542
      %544 = vmatmul.f32.gmra.mxu0 %v429
      %v545 = vpop.f32.mrf.mxu0
      %v546 = vadd.f32 0.0, %v545
      %547 = vmatmul.f32.gmra.mxu0 %v432
      %v548 = vpop.f32.mrf.mxu0
      %v549 = vadd.f32 0.0, %v548
      %550 = vmatmul.f32.gmra.mxu0 %v435
      %v551 = vpop.f32.mrf.mxu0
      %v552 = vadd.f32 0.0, %v551
      %553 = vmatmul.f32.gmra.mxu0 %v438
      %v554 = vpop.f32.mrf.mxu0
      %v555 = vadd.f32 0.0, %v554
      %556 = vmatmul.f32.gmra.mxu0 %v441
      %v557 = vpop.f32.mrf.mxu0
      %v558 = vadd.f32 0.0, %v557
      %559 = vmatmul.f32.gmra.mxu0 %v444
      %v560 = vpop.f32.mrf.mxu0
      %v561 = vadd.f32 0.0, %v560
      %562 = vmatmul.f32.gmra.mxu0 %v447
      %v563 = vpop.f32.mrf.mxu0
      %v564 = vadd.f32 0.0, %v563
      %565 = vmatmul.f32.gmra.mxu0 %v450
      %v566 = vpop.f32.mrf.mxu0
      %v567 = vadd.f32 0.0, %v566
      %568 = vmatmul.f32.gmra.mxu0 %v453
      %v569 = vpop.f32.mrf.mxu0
      %v570 = vadd.f32 0.0, %v569
      %571 = vmatmul.f32.gmra.mxu0 %v456
      %v572 = vpop.f32.mrf.mxu0
      %v573 = vadd.f32 0.0, %v572
      %574 = vmatmul.f32.gmra.mxu0 %v459
      %v575 = vpop.f32.mrf.mxu0
      %v576 = vadd.f32 0.0, %v575
      %577 = vmatmul.f32.gmra.mxu0 %v462
      %v578 = vpop.f32.mrf.mxu0
      %v579 = vadd.f32 0.0, %v578
      %580 = vmatmul.f32.gmra.mxu0 %v465
      %v581 = vpop.f32.mrf.mxu0
      %v582 = vadd.f32 0.0, %v581
      %583 = vmatmul.f32.gmra.mxu0 %v468
      %v584 = vpop.f32.mrf.mxu0
      %v585 = vadd.f32 0.0, %v584
      %586 = vmatmul.f32.gmra.mxu0 %v471
      %v587 = vpop.f32.mrf.mxu0
      %v588 = vadd.f32 0.0, %v587
      %589 = vmatmul.f32.gmra.mxu0 %v474
      %v590 = vpop.f32.mrf.mxu0
      %v591 = vadd.f32 0.0, %v590
      %592 = vmatmul.f32.gmra.mxu0 %v477
      %v593 = vpop.f32.mrf.mxu0
      %v594 = vadd.f32 0.0, %v593
      %595 = vmatmul.f32.gmra.mxu0 %v480
      %v596 = vpop.f32.mrf.mxu0
      %v597 = vadd.f32 0.0, %v596
      %598 = vmatmul.f32.gmra.mxu0 %v483
      %v599 = vpop.f32.mrf.mxu0
      %v600 = vadd.f32 0.0, %v599
      %601 = vmatmul.f32.gmra.mxu0 %v486
      %v602 = vpop.f32.mrf.mxu0
      %v603 = vadd.f32 0.0, %v602
      %604 = vmatmul.f32.gmra.mxu0 %v489
      %v605 = vpop.f32.mrf.mxu0
      %v606 = vadd.f32 0.0, %v605
      %607 = vdwg.mxu0
      %vm608 = vcmask 130048
      %609 = vst.msk [vmem:[%s248] sm:$0xff] %vm608, %v513
      %610 = vst.msk [vmem:[%s248 + $0x8] sm:$0xff] %vm608, %v516
      %611 = vst.msk [vmem:[%s248 + $0x10] sm:$0xff] %vm608, %v519
      %612 = vst.msk [vmem:[%s248 + $0x18] sm:$0xff] %vm608, %v522
      %613 = vst.msk [vmem:[%s248 + $0x20] sm:$0xff] %vm608, %v525
      %614 = vst.msk [vmem:[%s248 + $0x28] sm:$0xff] %vm608, %v528
      %615 = vst.msk [vmem:[%s248 + $0x30] sm:$0xff] %vm608, %v531
      %616 = vst.msk [vmem:[%s248 + $0x38] sm:$0xff] %vm608, %v534
      %617 = vst.msk [vmem:[%s248 + $0x40] sm:$0xff] %vm608, %v537
      %618 = vst.msk [vmem:[%s248 + $0x48] sm:$0xff] %vm608, %v540
      %619 = vst.msk [vmem:[%s248 + $0x50] sm:$0xff] %vm608, %v543
      %620 = vst.msk [vmem:[%s248 + $0x58] sm:$0xff] %vm608, %v546
      %621 = vst.msk [vmem:[%s248 + $0x60] sm:$0xff] %vm608, %v549
      %622 = vst.msk [vmem:[%s248 + $0x68] sm:$0xff] %vm608, %v552
      %623 = vst.msk [vmem:[%s248 + $0x70] sm:$0xff] %vm608, %v555
      %624 = vst.msk [vmem:[%s248 + $0x78] sm:$0xff] %vm608, %v558
      %625 = vst.msk [vmem:[%s248 + $0x80] sm:$0xff] %vm608, %v561
      %626 = vst.msk [vmem:[%s248 + $0x88] sm:$0xff] %vm608, %v564
      %627 = vst.msk [vmem:[%s248 + $0x90] sm:$0xff] %vm608, %v567
      %628 = vst.msk [vmem:[%s248 + $0x98] sm:$0xff] %vm608, %v570
      %629 = vst.msk [vmem:[%s248 + $0xa0] sm:$0xff] %vm608, %v573
      %630 = vst.msk [vmem:[%s248 + $0xa8] sm:$0xff] %vm608, %v576
      %631 = vst.msk [vmem:[%s248 + $0xb0] sm:$0xff] %vm608, %v579
      %632 = vst.msk [vmem:[%s248 + $0xb8] sm:$0xff] %vm608, %v582
      %633 = vst.msk [vmem:[%s248 + $0xc0] sm:$0xff] %vm608, %v585
      %634 = vst.msk [vmem:[%s248 + $0xc8] sm:$0xff] %vm608, %v588
      %635 = vst.msk [vmem:[%s248 + $0xd0] sm:$0xff] %vm608, %v591
      %636 = vst.msk [vmem:[%s248 + $0xd8] sm:$0xff] %vm608, %v594
      %637 = vst.msk [vmem:[%s248 + $0xe0] sm:$0xff] %vm608, %v597
      %638 = vst.msk [vmem:[%s248 + $0xe8] sm:$0xff] %vm608, %v600
      %639 = vst.msk [vmem:[%s248 + $0xf0] sm:$0xff] %vm608, %v603
      %640 = vst.msk [vmem:[%s248 + $0xf8] sm:$0xff] %vm608, %v606
      %v641 = vld [vmem:[%s5] sm:$0x1]
      %v642 = vsel %vm608, %v513, 0.0
      %v643 = vsel %vm608, %v516, 0.0
      %v644 = vadd.f32 %v642, %v643
      %v645 = vsel %vm608, %v519, 0.0
      %v646 = vadd.f32 %v644, %v645
      %v647 = vsel %vm608, %v522, 0.0
      %v648 = vadd.f32 %v646, %v647
      %v649 = vsel %vm608, %v525, 0.0
      %v650 = vadd.f32 %v648, %v649
      %v651 = vsel %vm608, %v528, 0.0
      %v652 = vadd.f32 %v650, %v651
      %v653 = vsel %vm608, %v531, 0.0
      %v654 = vadd.f32 %v652, %v653
      %v655 = vsel %vm608, %v534, 0.0
      %v656 = vadd.f32 %v654, %v655
      %v657 = vsel %vm608, %v537, 0.0
      %v658 = vadd.f32 %v656, %v657
      %v659 = vsel %vm608, %v540, 0.0
      %v660 = vadd.f32 %v658, %v659
      %v661 = vsel %vm608, %v543, 0.0
      %v662 = vadd.f32 %v660, %v661
      %v663 = vsel %vm608, %v546, 0.0
      %v664 = vadd.f32 %v662, %v663
      %v665 = vsel %vm608, %v549, 0.0
      %v666 = vadd.f32 %v664, %v665
      %v667 = vsel %vm608, %v552, 0.0
      %v668 = vadd.f32 %v666, %v667
      %v669 = vsel %vm608, %v555, 0.0
      %v670 = vadd.f32 %v668, %v669
      %v671 = vsel %vm608, %v558, 0.0
      %v672 = vadd.f32 %v670, %v671
      %v673 = vsel %vm608, %v561, 0.0
      %v674 = vadd.f32 %v672, %v673
      %v675 = vsel %vm608, %v564, 0.0
      %v676 = vadd.f32 %v674, %v675
      %v677 = vsel %vm608, %v567, 0.0
      %v678 = vadd.f32 %v676, %v677
      %v679 = vsel %vm608, %v570, 0.0
      %v680 = vadd.f32 %v678, %v679
      %v681 = vsel %vm608, %v573, 0.0
      %v682 = vadd.f32 %v680, %v681
      %v683 = vsel %vm608, %v576, 0.0
      %v684 = vadd.f32 %v682, %v683
      %v685 = vsel %vm608, %v579, 0.0
      %v686 = vadd.f32 %v684, %v685
      %v687 = vsel %vm608, %v582, 0.0
      %v688 = vadd.f32 %v686, %v687
      %v689 = vsel %vm608, %v585, 0.0
      %v690 = vadd.f32 %v688, %v689
      %v691 = vsel %vm608, %v588, 0.0
      %v692 = vadd.f32 %v690, %v691
      %v693 = vsel %vm608, %v591, 0.0
      %v694 = vadd.f32 %v692, %v693
      %v695 = vsel %vm608, %v594, 0.0
      %v696 = vadd.f32 %v694, %v695
      %v697 = vsel %vm608, %v597, 0.0
      %v698 = vadd.f32 %v696, %v697
      %v699 = vsel %vm608, %v600, 0.0
      %v700 = vadd.f32 %v698, %v699
      %v701 = vsel %vm608, %v603, 0.0
      %v702 = vadd.f32 %v700, %v701
      %v703 = vsel %vm608, %v606, 0.0
      %v704 = vadd.f32 %v702, %v703
      %v705 = vrot.slane %v704, 4
      %v706 = vadd.f32 %v704, %v705
      %v707 = vrot.slane %v706, 2
      %v708 = vadd.f32 %v706, %v707
      %v709 = vrot.slane %v708, 1
      %v710 = vadd.f32 %v708, %v709
      %v711 = vadd.f32 %v641, %v710
      %vm712 = vcmask 122880
      %713 = vst.msk [vmem:[%s5] sm:$0x1] %vm712, %v711
      %v714 = vld [vmem:[%s6] sm:$0x1]
      %v715 = vmul.f32 %v513, %v513
      %v716 = vmul.f32 %v516, %v516
      %v717 = vmul.f32 %v519, %v519
      %v718 = vmul.f32 %v522, %v522
      %v719 = vmul.f32 %v525, %v525
      %v720 = vmul.f32 %v528, %v528
      %v721 = vmul.f32 %v531, %v531
      %v722 = vmul.f32 %v534, %v534
      %v723 = vmul.f32 %v537, %v537
      %v724 = vmul.f32 %v540, %v540
      %v725 = vmul.f32 %v543, %v543
      %v726 = vmul.f32 %v546, %v546
      %v727 = vmul.f32 %v549, %v549
      %v728 = vmul.f32 %v552, %v552
      %v729 = vmul.f32 %v555, %v555
      %v730 = vmul.f32 %v558, %v558
      %v731 = vmul.f32 %v561, %v561
      %v732 = vmul.f32 %v564, %v564
      %v733 = vmul.f32 %v567, %v567
      %v734 = vmul.f32 %v570, %v570
      %v735 = vmul.f32 %v573, %v573
      %v736 = vmul.f32 %v576, %v576
      %v737 = vmul.f32 %v579, %v579
      %v738 = vmul.f32 %v582, %v582
      %v739 = vmul.f32 %v585, %v585
      %v740 = vmul.f32 %v588, %v588
      %v741 = vmul.f32 %v591, %v591
      %v742 = vmul.f32 %v594, %v594
      %v743 = vmul.f32 %v597, %v597
      %v744 = vmul.f32 %v600, %v600
      %v745 = vmul.f32 %v603, %v603
      %v746 = vmul.f32 %v606, %v606
      %v747 = vsel %vm608, %v715, 0.0
      %v748 = vsel %vm608, %v716, 0.0
      %v749 = vadd.f32 %v747, %v748
      %v750 = vsel %vm608, %v717, 0.0
      %v751 = vadd.f32 %v749, %v750
      %v752 = vsel %vm608, %v718, 0.0
      %v753 = vadd.f32 %v751, %v752
      %v754 = vsel %vm608, %v719, 0.0
      %v755 = vadd.f32 %v753, %v754
      %v756 = vsel %vm608, %v720, 0.0
      %v757 = vadd.f32 %v755, %v756
      %v758 = vsel %vm608, %v721, 0.0
      %v759 = vadd.f32 %v757, %v758
      %v760 = vsel %vm608, %v722, 0.0
      %v761 = vadd.f32 %v759, %v760
      %v762 = vsel %vm608, %v723, 0.0
      %v763 = vadd.f32 %v761, %v762
      %v764 = vsel %vm608, %v724, 0.0
      %v765 = vadd.f32 %v763, %v764
      %v766 = vsel %vm608, %v725, 0.0
      %v767 = vadd.f32 %v765, %v766
      %v768 = vsel %vm608, %v726, 0.0
      %v769 = vadd.f32 %v767, %v768
      %v770 = vsel %vm608, %v727, 0.0
      %v771 = vadd.f32 %v769, %v770
      %v772 = vsel %vm608, %v728, 0.0
      %v773 = vadd.f32 %v771, %v772
      %v774 = vsel %vm608, %v729, 0.0
      %v775 = vadd.f32 %v773, %v774
      %v776 = vsel %vm608, %v730, 0.0
      %v777 = vadd.f32 %v775, %v776
      %v778 = vsel %vm608, %v731, 0.0
      %v779 = vadd.f32 %v777, %v778
      %v780 = vsel %vm608, %v732, 0.0
      %v781 = vadd.f32 %v779, %v780
      %v782 = vsel %vm608, %v733, 0.0
      %v783 = vadd.f32 %v781, %v782
      %v784 = vsel %vm608, %v734, 0.0
      %v785 = vadd.f32 %v783, %v784
      %v786 = vsel %vm608, %v735, 0.0
      %v787 = vadd.f32 %v785, %v786
      %v788 = vsel %vm608, %v736, 0.0
      %v789 = vadd.f32 %v787, %v788
      %v790 = vsel %vm608, %v737, 0.0
      %v791 = vadd.f32 %v789, %v790
      %v792 = vsel %vm608, %v738, 0.0
      %v793 = vadd.f32 %v791, %v792
      %v794 = vsel %vm608, %v739, 0.0
      %v795 = vadd.f32 %v793, %v794
      %v796 = vsel %vm608, %v740, 0.0
      %v797 = vadd.f32 %v795, %v796
      %v798 = vsel %vm608, %v741, 0.0
      %v799 = vadd.f32 %v797, %v798
      %v800 = vsel %vm608, %v742, 0.0
      %v801 = vadd.f32 %v799, %v800
      %v802 = vsel %vm608, %v743, 0.0
      %v803 = vadd.f32 %v801, %v802
      %v804 = vsel %vm608, %v744, 0.0
      %v805 = vadd.f32 %v803, %v804
      %v806 = vsel %vm608, %v745, 0.0
      %v807 = vadd.f32 %v805, %v806
      %v808 = vsel %vm608, %v746, 0.0
      %v809 = vadd.f32 %v807, %v808
      %v810 = vrot.slane %v809, 4
      %v811 = vadd.f32 %v809, %v810
      %v812 = vrot.slane %v811, 2
      %v813 = vadd.f32 %v811, %v812
      %v814 = vrot.slane %v813, 1
      %v815 = vadd.f32 %v813, %v814
      %v816 = vadd.f32 %v714, %v815
      %817 = vst.msk [vmem:[%s6] sm:$0x1] %vm712, %v816
      %s818 = smul.u32 32, %s18
      %p819 = scmp.lt.s32.totalorder %s818, 63
      %s820 = scalar_select %p819, %s818, 63
      %s821 = smul.addr %s820, 8
      %s822 = scalar_lea.vmem %s4, %s821
      // Predicated region
      $region41: #{bottleneck_forward.6} parent=35 // pred_check
        %p823 = pneg %p125
      $region42: #{bottleneck_forward.6} parent=35 // pred_check_branch
        %825 = sbr.rel (%p823) target = $region44
      $region43: #{bottleneck_forward.6} parent=35 // pred_region
        %s826 = smul.u32 32, %s18
      $region44: #{bottleneck_forward.6} parent=35 // pred_fallthru
        _
      // Predicated region
      $region45: #{bottleneck_forward.6} parent=35 // pred_check
        %p827 = pneg %p146
      $region46: #{bottleneck_forward.6} parent=35 // pred_check_branch
        %829 = sbr.rel (%p827) target = $region48
      $region47: #{bottleneck_forward.6} parent=35 // pred_region
        _
      $region48: #{bottleneck_forward.6} parent=35 // pred_fallthru
        _
      // Predicated region
      $region49: #{bottleneck_forward.6} parent=35 // pred_check
        %p830 = pneg %p167
      $region50: #{bottleneck_forward.6} parent=35 // pred_check_branch
        %832 = sbr.rel (%p830) target = $region52
      $region51: #{bottleneck_forward.6} parent=35 // pred_region
        _
      $region52: #{bottleneck_forward.6} parent=35 // pred_fallthru
        _
      // Predicated region
      $region53: #{bottleneck_forward.6} parent=35 // pred_check
        %p833 = pneg %p146
      $region54: #{bottleneck_forward.6} parent=35 // pred_check_branch
        %835 = sbr.rel (%p833) target = $region56
      $region55: #{bottleneck_forward.6} parent=35 // pred_region
        _
      $region56: #{bottleneck_forward.6} parent=35 // pred_fallthru
        _
      // Predicated region
      $region57: #{bottleneck_forward.6} parent=35 // pred_check
        %p836 = pneg %p167
      $region58: #{bottleneck_forward.6} parent=35 // pred_check_branch
        %838 = sbr.rel (%p836) target = $region60
      $region59: #{bottleneck_forward.6} parent=35 // pred_region
        _
      $region60: #{bottleneck_forward.6} parent=35 // pred_fallthru
        _
    $region36: #{bottleneck_forward.6} parent=5 // pred_fallthru
      _
    %p839 = scmp.le.s32.totalorder 2, %s13
    // Predicated region
    $region61: #{bottleneck_forward.6} parent=5 // pred_check
      %p840 = pneg %p839
    $region62: #{bottleneck_forward.6} parent=5 // pred_check_branch
      %842 = sbr.rel (%p840) target = $region64
    $region63: #{bottleneck_forward.6} parent=5 // pred_region
      %s843 = ssub.s32 %s13, 2
      // Predicated region
      $region65: #{bottleneck_forward.6} parent=63 // pred_check
        %p844 = pneg %p131
      $region66: #{bottleneck_forward.6} parent=63 // pred_check_branch
        %846 = sbr.rel (%p844) target = $region68
      $region67: #{bottleneck_forward.6} parent=63 // pred_region
        %s847 = smul.u32 32, %s19
        %p848 = scmp.lt.s32.totalorder %s847, 63
        %s849 = scalar_select %p848, %s847, 63
        %s850 = smul.addr %s849, 8
        %s851 = scalar_lea.vmem %s4, %s850
      $region68: #{bottleneck_forward.6} parent=63 // pred_fallthru
        _
    $region64: #{bottleneck_forward.6} parent=5 // pred_fallthru
      _
  $region6: #{bottleneck_forward.6} parent=0 // loop_footer
    %s17 = sadd.s32 1, %s13
  $region7: #{bottleneck_forward.6} parent=0 // loop_footer_branch
    %12 = sbr.rel target = $region3
  $region8: #{bottleneck_forward.6} parent=0 // loop_exit
    _

// kernel: bottleneck_forward.5
$region0: #{bottleneck_forward.5}
  #allocation0 [shape = 'u32[]', space=smem, size = 0x4, offset = 0x4, fixed_abs, tag = 'smem constant byte address 0x4 - core index']
  #allocation1 [shape = 'u32[72,128]{1,0:T(1,128)}', space=vmem, size = 0x9000, scoped, tag = 'internal scratch']
  #allocation2 [shape = 'f32[1,18,18,4]{3,2,1,0:T(8,128)}', space=vmem, size = 0x36000, scoped, tag = 'scratch operand']
  %s0 = inlined_call_operand.vmem [shape: f32[2,16,16,4], index: 0, kind: input, shape index: {}]
  %s1 = inlined_call_operand.vmem [shape: f32[1,4], index: 1, kind: input, shape index: {}]
  %s2 = inlined_call_operand.vmem [shape: f32[1,4], index: 2, kind: input, shape index: {}]
  %s3 = inlined_call_operand.vmem [shape: f32[3,12,4], index: 3, kind: input, shape index: {}]
  %s4 = inlined_call_operand.vmem [shape: f32[2,16,16,4], index: 4, kind: output, shape index: {0}]
  %s5 = inlined_call_operand.vmem [shape: f32[1,4], index: 5, kind: output, shape index: {1}]
  %s6 = inlined_call_operand.vmem [shape: f32[1,4], index: 6, kind: output, shape index: {2}]
  %7 = xla_tuple %s4, %s5, %s6
  %s8 = sld [smem:[#allocation0]]
  $region69: #{bottleneck_forward.5} parent=0
    _
  %s10 = ssub.s32 1, %s8
  %s11 = scalar_select 0, %s10, %s8
  loop: start=0, step=1, limit=4
  $region2: #{bottleneck_forward.5} parent=0 // loop_pre_header
    _
  $region3: #{bottleneck_forward.5} parent=0 // loop_header
    %s13 = sphi 0, %s17
    %p14 = scmp.ge.s32.totalorder %s13, 4
    %s23 = sphi 0, %s25
    %s26 = sphi 0, %s23
    %s27 = sphi 0, %s26
    %s43 = sphi 0, %s27
    %s47 = sphi 0, %s47
    %s49 = sphi 0, %s47
    %s50 = sphi 0, %s49
    %s64 = sphi 0, %s50
    %s68 = sphi 0, %s68
    %s70 = sphi 0, %s68
    %s71 = sphi 0, %s70
    %s85 = sphi 0, %s71
    %s89 = sphi 0, %s89
    %s91 = sphi 0, %s89
    %s92 = sphi 0, %s91
    %s106 = sphi 0, %s92
    %s112 = sphi 0, %s114
    %s115 = sphi 0, %s112
    %s116 = sphi 0, %s115
    %s132 = sphi 0, %s116
    %s136 = sphi 0, %s136
    %s138 = sphi 0, %s136
    %s139 = sphi 0, %s138
    %s153 = sphi 0, %s139
    %s157 = sphi 0, %s157
    %s159 = sphi 0, %s157
    %s160 = sphi 0, %s159
    %s174 = sphi 0, %s160
  $region4: #{bottleneck_forward.5} parent=0 // loop_header_branch
    %16 = sbr.rel (%p14) target = $region8
  $region5: #{bottleneck_forward.5} parent=0 // loop_body
    %s18 = ssub.s32 %s13, 1
    %s19 = ssub.s32 %s13, 2
    %s20 = sadd.s32 %s13, 1
    %s21 = ssub.s32 %s13, %s20
    %p22 = scmp.eq.s32.totalorder %s21, 0
    %s24 = sadd.s32 %s23, 1
    %s25 = scalar_select %p22, %s23, %s24
    %p28 = pneg %p22
    %p29 = scmp.eq.s32.totalorder %s13, 1
    %p30 = por %p28, %p29
    %p31 = scmp.ne.s32.totalorder %s23, %s26
    %p32 = scmp.eq.s32.totalorder %s13, 0
    %p33 = por %p31, %p32
    %p34 = scmp.ne.s32.totalorder %s23, %s26
    %p35 = scmp.eq.s32.totalorder %s18, 1
    %p36 = por %p34, %p35
    %p37 = scmp.ne.s32.totalorder %s26, %s27
    %p38 = scmp.eq.s32.totalorder %s18, 0
    %p39 = por %p37, %p38
    %p40 = scmp.ne.s32.totalorder %s26, %s27
    %p41 = scmp.eq.s32.totalorder %s19, 1
    %p42 = por %p40, %p41
    %p44 = scmp.ne.s32.totalorder %s27, %s43
    %p45 = scmp.eq.s32.totalorder %s19, 0
    %p46 = por %p44, %p45
    %s48 = sadd.s32 %s47, 1
    %p51 = scmp.eq.s32.totalorder %s13, 1
    %p52 = scmp.ne.s32.totalorder %s47, %s49
    %p53 = scmp.eq.s32.totalorder %s13, 0
    %p54 = por %p52, %p53
    %p55 = scmp.ne.s32.totalorder %s47, %s49
    %p56 = scmp.eq.s32.totalorder %s18, 1
    %p57 = por %p55, %p56
    %p58 = scmp.ne.s32.totalorder %s49, %s50
    %p59 = scmp.eq.s32.totalorder %s18, 0
    %p60 = por %p58, %p59
    %p61 = scmp.ne.s32.totalorder %s49, %s50
    %p62 = scmp.eq.s32.totalorder %s19, 1
    %p63 = por %p61, %p62
    %p65 = scmp.ne.s32.totalorder %s50, %s64
    %p66 = scmp.eq.s32.totalorder %s19, 0
    %p67 = por %p65, %p66
    %s69 = sadd.s32 %s68, 1
    %p72 = scmp.eq.s32.totalorder %s13, 1
    %p73 = scmp.ne.s32.totalorder %s68, %s70
    %p74 = scmp.eq.s32.totalorder %s13, 0
    %p75 = por %p73, %p74
    %p76 = scmp.ne.s32.totalorder %s68, %s70
    %p77 = scmp.eq.s32.totalorder %s18, 1
    %p78 = por %p76, %p77
    %p79 = scmp.ne.s32.totalorder %s70, %s71
    %p80 = scmp.eq.s32.totalorder %s18, 0
    %p81 = por %p79, %p80
    %p82 = scmp.ne.s32.totalorder %s70, %s71
    %p83 = scmp.eq.s32.totalorder %s19, 1
    %p84 = por %p82, %p83
    %p86 = scmp.ne.s32.totalorder %s71, %s85
    %p87 = scmp.eq.s32.totalorder %s19, 0
    %p88 = por %p86, %p87
    %s90 = sadd.s32 %s89, 1
    %p93 = scmp.eq.s32.totalorder %s13, 1
    %p94 = scmp.ne.s32.totalorder %s89, %s91
    %p95 = scmp.eq.s32.totalorder %s13, 0
    %p96 = por %p94, %p95
    %p97 = scmp.ne.s32.totalorder %s89, %s91
    %p98 = scmp.eq.s32.totalorder %s18, 1
    %p99 = por %p97, %p98
    %p100 = scmp.ne.s32.totalorder %s91, %s92
    %p101 = scmp.eq.s32.totalorder %s18, 0
    %p102 = por %p100, %p101
    %p103 = scmp.ne.s32.totalorder %s91, %s92
    %p104 = scmp.eq.s32.totalorder %s19, 1
    %p105 = por %p103, %p104
    %p107 = scmp.ne.s32.totalorder %s92, %s106
    %p108 = scmp.eq.s32.totalorder %s19, 0
    %p109 = por %p107, %p108
    %s110 = ssub.s32 %s13, %s20
    %p111 = scmp.eq.s32.totalorder %s110, 0
    %s113 = sadd.s32 %s112, 1
    %s114 = scalar_select %p111, %s112, %s113
    %p117 = pneg %p111
    %p118 = scmp.eq.s32.totalorder %s13, 1
    %p119 = por %p117, %p118
    %p120 = scmp.ne.s32.totalorder %s112, %s115
    %p121 = scmp.eq.s32.totalorder %s13, 0
    %p122 = por %p120, %p121
    %p123 = scmp.ne.s32.totalorder %s112, %s115
    %p124 = scmp.eq.s32.totalorder %s18, 1
    %p125 = por %p123, %p124
    %p126 = scmp.ne.s32.totalorder %s115, %s116
    %p127 = scmp.eq.s32.totalorder %s18, 0
    %p128 = por %p126, %p127
    %p129 = scmp.ne.s32.totalorder %s115, %s116
    %p130 = scmp.eq.s32.totalorder %s19, 1
    %p131 = por %p129, %p130
    %p133 = scmp.ne.s32.totalorder %s116, %s132
    %p134 = scmp.eq.s32.totalorder %s19, 0
    %p135 = por %p133, %p134
    %s137 = sadd.s32 %s136, 1
    %p140 = scmp.eq.s32.totalorder %s13, 1
    %p141 = scmp.ne.s32.totalorder %s136, %s138
    %p142 = scmp.eq.s32.totalorder %s13, 0
    %p143 = por %p141, %p142
    %p144 = scmp.ne.s32.totalorder %s136, %s138
    %p145 = scmp.eq.s32.totalorder %s18, 1
    %p146 = por %p144, %p145
    %p147 = scmp.ne.s32.totalorder %s138, %s139
    %p148 = scmp.eq.s32.totalorder %s18, 0
    %p149 = por %p147, %p148
    %p150 = scmp.ne.s32.totalorder %s138, %s139
    %p151 = scmp.eq.s32.totalorder %s19, 1
    %p152 = por %p150, %p151
    %p154 = scmp.ne.s32.totalorder %s139, %s153
    %p155 = scmp.eq.s32.totalorder %s19, 0
    %p156 = por %p154, %p155
    %s158 = sadd.s32 %s157, 1
    %p161 = scmp.eq.s32.totalorder %s13, 1
    %p162 = scmp.ne.s32.totalorder %s157, %s159
    %p163 = scmp.eq.s32.totalorder %s13, 0
    %p164 = por %p162, %p163
    %p165 = scmp.ne.s32.totalorder %s157, %s159
    %p166 = scmp.eq.s32.totalorder %s18, 1
    %p167 = por %p165, %p166
    %p168 = scmp.ne.s32.totalorder %s159, %s160
    %p169 = scmp.eq.s32.totalorder %s18, 0
    %p170 = por %p168, %p169
    %p171 = scmp.ne.s32.totalorder %s159, %s160
    %p172 = scmp.eq.s32.totalorder %s19, 1
    %p173 = por %p171, %p172
    %p175 = scmp.ne.s32.totalorder %s160, %s174
    %p176 = scmp.eq.s32.totalorder %s19, 0
    %p177 = por %p175, %p176
    %p178 = scmp.le.s32.totalorder 1, %s13
    %p179 = scmp.lt.s32.totalorder %s13, 3
    %p180 = pnand %p178, %p179
    %p181 = pneg %p180
    // Predicated region
    $region9: #{bottleneck_forward.5} parent=5 // pred_check
      _
    $region10: #{bottleneck_forward.5} parent=5 // pred_check_branch
      %183 = sbr.rel (%p180) target = $region12
    $region11: #{bottleneck_forward.5} parent=5 // pred_region
      %s184 = ssub.s32 %s13, 1
      // Predicated region
      $region13: #{bottleneck_forward.5} parent=11 // pred_check
        %p185 = pneg %p60
      $region14: #{bottleneck_forward.5} parent=11 // pred_check_branch
        %187 = sbr.rel (%p185) target = $region16
      $region15: #{bottleneck_forward.5} parent=11 // pred_region
        _
      $region16: #{bottleneck_forward.5} parent=11 // pred_fallthru
        _
      // Predicated region
      $region17: #{bottleneck_forward.5} parent=11 // pred_check
        %p188 = pneg %p81
      $region18: #{bottleneck_forward.5} parent=11 // pred_check_branch
        %190 = sbr.rel (%p188) target = $region20
      $region19: #{bottleneck_forward.5} parent=11 // pred_region
        _
      $region20: #{bottleneck_forward.5} parent=11 // pred_fallthru
        _
      // Predicated region
      $region21: #{bottleneck_forward.5} parent=11 // pred_check
        %p191 = pneg %p102
      $region22: #{bottleneck_forward.5} parent=11 // pred_check_branch
        %193 = sbr.rel (%p191) target = $region24
      $region23: #{bottleneck_forward.5} parent=11 // pred_region
        _
      $region24: #{bottleneck_forward.5} parent=11 // pred_fallthru
        _
    $region12: #{bottleneck_forward.5} parent=5 // pred_fallthru
      _
    %p194 = scmp.lt.s32.totalorder %s13, 2
    // Predicated region
    $region25: #{bottleneck_forward.5} parent=5 // pred_check
      %p195 = pneg %p194
    $region26: #{bottleneck_forward.5} parent=5 // pred_check_branch
      %197 = sbr.rel (%p195) target = $region28
    $region27: #{bottleneck_forward.5} parent=5 // pred_region
      // Predicated region
      $region29: #{bottleneck_forward.5} parent=27 // pred_check
        %p198 = pneg %p33
      $region30: #{bottleneck_forward.5} parent=27 // pred_check_branch
        %200 = sbr.rel (%p198) target = $region32
      $region31: #{bottleneck_forward.5} parent=27 // pred_region
        %p201 = scmp.lt.s32.totalorder %s13, 1
        %s202 = scalar_select %p201, %s13, 1
        %s203 = smul.addr %s202, 32
        %s204 = smul.addr %s203, 8
        %s205 = scalar_lea.vmem %s0, %s204
      $region32: #{bottleneck_forward.5} parent=27 // pred_fallthru
        _
    $region28: #{bottleneck_forward.5} parent=5 // pred_fallthru
      _
    %p206 = scmp.le.s32.totalorder 1, %s13
    %p207 = scmp.lt.s32.totalorder %s13, 3
    %p208 = pnand %p206, %p207
    %p209 = pneg %p208
    // Predicated region
    $region33: #{bottleneck_forward.5} parent=5 // pred_check
      _
    $region34: #{bottleneck_forward.5} parent=5 // pred_check_branch
      %211 = sbr.rel (%p208) target = $region36
    $region35: #{bottleneck_forward.5} parent=5 // pred_region
      %s212 = ssub.s32 %s13, 1
      %p213 = scmp.lt.s32.totalorder %s18, 1
      %s214 = scalar_select %p213, %s18, 1
      %s215 = smul.addr %s214, 32
      %s216 = smul.addr %s215, 8
      %s217 = scalar_lea.vmem %s0, %s216
      %p218 = pneg %p39
      %p219 = pneg %p36
      %p220 = pneg %p60
      %p221 = pneg %p57
      %p222 = pneg %p81
      %p223 = pneg %p78
      %p224 = pneg %p102
      %p225 = pneg %p99
      %p226 = pneg %p128
      %p227 = pneg %p125
      %p228 = scmp.lt.s32.totalorder %s18, 1
      %s229 = scalar_select %p228, %s18, 1
      %s230 = smul.addr %s229, 32
      %s231 = smul.addr %s230, 8
      %s232 = scalar_lea.vmem %s4, %s231
      %p233 = pneg %p149
      %p234 = pneg %p146
      %p235 = pneg %p170
      %p236 = pneg %p167
      %p237 = scmp.lt.s32.totalorder %s18, 1
      %s238 = scalar_select %p237, %s18, 1
      %s239 = smul.addr %s238, 32
      %s240 = smul.addr %s239, 8
      %s241 = scalar_lea.vmem %s0, %s240
      %p242 = scmp.lt.s32.totalorder %s18, 1
      %s243 = scalar_select %p242, %s18, 1
      %s244 = smul.addr %s243, 32
      %s245 = smul.addr %s244, 8
      %s246 = scalar_lea.vmem %s4, %s245
      %p247 = scmp.eq.s32.totalorder %s18, 0
      // Predicated region
      $region37: #{bottleneck_forward.5} parent=35 // pred_check
        %p248 = pneg %p247
      $region38: #{bottleneck_forward.5} parent=35 // pred_check_branch
        %250 = sbr.rel (%p248) target = $region40
      $region39: #{bottleneck_forward.5} parent=35 // pred_region
        %vm251 = vcmask 24576
        %252 = vst.msk [vmem:[%s5] sm:$0x1] %vm251, 0.0
        %253 = vst.msk [vmem:[%s6] sm:$0x1] %vm251, 0.0
        %vm254 = vcmask 31744
        %255 = vst.msk [vmem:[#allocation2] sm:$0xff] %vm254, 0.0
        %256 = vst.msk [vmem:[#allocation2 + $0x8] sm:$0xff] %vm254, 0.0
        %vm257 = vcmask 25600
        %258 = vst.msk [vmem:[#allocation2 + $0x10] sm:$0x3] %vm257, 0.0
        %s259 = scalar_lea.vmem [#allocation2], 408
        %260 = vst.msk [vmem:[%s259] sm:$0xff] %vm254, 0.0
        %261 = vst.msk [vmem:[%s259 + $0x8] sm:$0xff] %vm254, 0.0
        %262 = vst.msk [vmem:[%s259 + $0x10] sm:$0x3] %vm257, 0.0
        %s263 = scalar_lea.vmem [#allocation2], 24
        %264 = vst.msk [vmem:[%s263] sm:$0x1] %vm251, 0.0
        %265 = vst.msk [vmem:[%s263 + $0x18] sm:$0x1] %vm251, 0.0
        %266 = vst.msk [vmem:[%s263 + $0x30] sm:$0x1] %vm251, 0.0
        %267 = vst.msk [vmem:[%s263 + $0x48] sm:$0x1] %vm251, 0.0
        %268 = vst.msk [vmem:[%s263 + $0x60] sm:$0x1] %vm251, 0.0
        %269 = vst.msk [vmem:[%s263 + $0x78] sm:$0x1] %vm251, 0.0
        %270 = vst.msk [vmem:[%s263 + $0x90] sm:$0x1] %vm251, 0.0
        %271 = vst.msk [vmem:[%s263 + $0xa8] sm:$0x1] %vm251, 0.0
        %272 = vst.msk [vmem:[%s263 + $0xc0] sm:$0x1] %vm251, 0.0
        %273 = vst.msk [vmem:[%s263 + $0xd8] sm:$0x1] %vm251, 0.0
        %274 = vst.msk [vmem:[%s263 + $0xf0] sm:$0x1] %vm251, 0.0
        %275 = vst.msk [vmem:[%s263 + $0x108] sm:$0x1] %vm251, 0.0
        %276 = vst.msk [vmem:[%s263 + $0x120] sm:$0x1] %vm251, 0.0
        %277 = vst.msk [vmem:[%s263 + $0x138] sm:$0x1] %vm251, 0.0
        %278 = vst.msk [vmem:[%s263 + $0x150] sm:$0x1] %vm251, 0.0
        %279 = vst.msk [vmem:[%s263 + $0x168] sm:$0x1] %vm251, 0.0
        %280 = vst.msk [vmem:[%s263 + $0x11] sm:$0x1] %vm251, 0.0
        %281 = vst.msk [vmem:[%s263 + $0x29] sm:$0x1] %vm251, 0.0
        %282 = vst.msk [vmem:[%s263 + $0x41] sm:$0x1] %vm251, 0.0
        %283 = vst.msk [vmem:[%s263 + $0x59] sm:$0x1] %vm251, 0.0
        %284 = vst.msk [vmem:[%s263 + $0x71] sm:$0x1] %vm251, 0.0
        %285 = vst.msk [vmem:[%s263 + $0x89] sm:$0x1] %vm251, 0.0
        %286 = vst.msk [vmem:[%s263 + $0xa1] sm:$0x1] %vm251, 0.0
        %287 = vst.msk [vmem:[%s263 + $0xb9] sm:$0x1] %vm251, 0.0
        %288 = vst.msk [vmem:[%s263 + $0xd1] sm:$0x1] %vm251, 0.0
        %289 = vst.msk [vmem:[%s263 + $0xe9] sm:$0x1] %vm251, 0.0
        %290 = vst.msk [vmem:[%s263 + $0x101] sm:$0x1] %vm251, 0.0
        %291 = vst.msk [vmem:[%s263 + $0x119] sm:$0x1] %vm251, 0.0
        %292 = vst.msk [vmem:[%s263 + $0x131] sm:$0x1] %vm251, 0.0
        %293 = vst.msk [vmem:[%s263 + $0x149] sm:$0x1] %vm251, 0.0
        %294 = vst.msk [vmem:[%s263 + $0x161] sm:$0x1] %vm251, 0.0
        %295 = vst.msk [vmem:[%s263 + $0x179] sm:$0x1] %vm251, 0.0
      $region40: #{bottleneck_forward.5} parent=35 // pred_fallthru
        _
      %v296 = vld [vmem:[%s241] sm:$0xff]
      %v297 = vld [vmem:[%s241 + $0x8] sm:$0xff]
      %v298 = vld [vmem:[%s241 + $0x10] sm:$0xff]
      %v299 = vld [vmem:[%s241 + $0x18] sm:$0xff]
      %v300 = vld [vmem:[%s241 + $0x20] sm:$0xff]
      %v301 = vld [vmem:[%s241 + $0x28] sm:$0xff]
      %v302 = vld [vmem:[%s241 + $0x30] sm:$0xff]
      %v303 = vld [vmem:[%s241 + $0x38] sm:$0xff]
      %v304 = vld [vmem:[%s241 + $0x40] sm:$0xff]
      %v305 = vld [vmem:[%s241 + $0x48] sm:$0xff]
      %v306 = vld [vmem:[%s241 + $0x50] sm:$0xff]
      %v307 = vld [vmem:[%s241 + $0x58] sm:$0xff]
      %v308 = vld [vmem:[%s241 + $0x60] sm:$0xff]
      %v309 = vld [vmem:[%s241 + $0x68] sm:$0xff]
      %v310 = vld [vmem:[%s241 + $0x70] sm:$0xff]
      %v311 = vld [vmem:[%s241 + $0x78] sm:$0xff]
      %v312 = vld [vmem:[%s241 + $0x80] sm:$0xff]
      %v313 = vld [vmem:[%s241 + $0x88] sm:$0xff]
      %v314 = vld [vmem:[%s241 + $0x90] sm:$0xff]
      %v315 = vld [vmem:[%s241 + $0x98] sm:$0xff]
      %v316 = vld [vmem:[%s241 + $0xa0] sm:$0xff]
      %v317 = vld [vmem:[%s241 + $0xa8] sm:$0xff]
      %v318 = vld [vmem:[%s241 + $0xb0] sm:$0xff]
      %v319 = vld [vmem:[%s241 + $0xb8] sm:$0xff]
      %v320 = vld [vmem:[%s241 + $0xc0] sm:$0xff]
      %v321 = vld [vmem:[%s241 + $0xc8] sm:$0xff]
      %v322 = vld [vmem:[%s241 + $0xd0] sm:$0xff]
      %v323 = vld [vmem:[%s241 + $0xd8] sm:$0xff]
      %v324 = vld [vmem:[%s241 + $0xe0] sm:$0xff]
      %v325 = vld [vmem:[%s241 + $0xe8] sm:$0xff]
      %v326 = vld [vmem:[%s241 + $0xf0] sm:$0xff]
      %v327 = vld [vmem:[%s241 + $0xf8] sm:$0xff]
      %v328 = vld [vmem:[%s1] sm:$0x1]
      %v330 = vperm.slane %v328, 0
      %v332 = vmul.f32 %v296, %v330
      %v333 = vmul.f32 %v297, %v330
      %v334 = vmul.f32 %v298, %v330
      %v335 = vmul.f32 %v299, %v330
      %v336 = vmul.f32 %v300, %v330
      %v337 = vmul.f32 %v301, %v330
      %v338 = vmul.f32 %v302, %v330
      %v339 = vmul.f32 %v303, %v330
      %v340 = vmul.f32 %v304, %v330
      %v341 = vmul.f32 %v305, %v330
      %v342 = vmul.f32 %v306, %v330
      %v343 = vmul.f32 %v307, %v330
      %v344 = vmul.f32 %v308, %v330
      %v345 = vmul.f32 %v309, %v330
      %v346 = vmul.f32 %v310, %v330
      %v347 = vmul.f32 %v311, %v330
      %v348 = vmul.f32 %v312, %v330
      %v349 = vmul.f32 %v313, %v330
      %v350 = vmul.f32 %v314, %v330
      %v351 = vmul.f32 %v315, %v330
      %v352 = vmul.f32 %v316, %v330
      %v353 = vmul.f32 %v317, %v330
      %v354 = vmul.f32 %v318, %v330
      %v355 = vmul.f32 %v319, %v330
      %v356 = vmul.f32 %v320, %v330
      %v357 = vmul.f32 %v321, %v330
      %v358 = vmul.f32 %v322, %v330
      %v359 = vmul.f32 %v323, %v330
      %v360 = vmul.f32 %v324, %v330
      %v361 = vmul.f32 %v325, %v330
      %v362 = vmul.f32 %v326, %v330
      %v363 = vmul.f32 %v327, %v330
      %v364 = vld [vmem:[%s2] sm:$0x1]
      %v366 = vperm.slane %v364, 0
      %v368 = vadd.f32 %v332, %v366
      %v369 = vadd.f32 %v333, %v366
      %v370 = vadd.f32 %v334, %v366
      %v371 = vadd.f32 %v335, %v366
      %v372 = vadd.f32 %v336, %v366
      %v373 = vadd.f32 %v337, %v366
      %v374 = vadd.f32 %v338, %v366
      %v375 = vadd.f32 %v339, %v366
      %v376 = vadd.f32 %v340, %v366
      %v377 = vadd.f32 %v341, %v366
      %v378 = vadd.f32 %v342, %v366
      %v379 = vadd.f32 %v343, %v366
      %v380 = vadd.f32 %v344, %v366
      %v381 = vadd.f32 %v345, %v366
      %v382 = vadd.f32 %v346, %v366
      %v383 = vadd.f32 %v347, %v366
      %v384 = vadd.f32 %v348, %v366
      %v385 = vadd.f32 %v349, %v366
      %v386 = vadd.f32 %v350, %v366
      %v387 = vadd.f32 %v351, %v366
      %v388 = vadd.f32 %v352, %v366
      %v389 = vadd.f32 %v353, %v366
      %v390 = vadd.f32 %v354, %v366
      %v391 = vadd.f32 %v355, %v366
      %v392 = vadd.f32 %v356, %v366
      %v393 = vadd.f32 %v357, %v366
      %v394 = vadd.f32 %v358, %v366
      %v395 = vadd.f32 %v359, %v366
      %v396 = vadd.f32 %v360, %v366
      %v397 = vadd.f32 %v361, %v366
      %v398 = vadd.f32 %v362, %v366
      %v399 = vadd.f32 %v363, %v366
      %v400 = vmax.f32 %v368, 0.0
      %v401 = vmax.f32 %v369, 0.0
      %v402 = vmax.f32 %v370, 0.0
      %v403 = vmax.f32 %v371, 0.0
      %v404 = vmax.f32 %v372, 0.0
      %v405 = vmax.f32 %v373, 0.0
      %v406 = vmax.f32 %v374, 0.0
      %v407 = vmax.f32 %v375, 0.0
      %v408 = vmax.f32 %v376, 0.0
      %v409 = vmax.f32 %v377, 0.0
      %v410 = vmax.f32 %v378, 0.0
      %v411 = vmax.f32 %v379, 0.0
      %v412 = vmax.f32 %v380, 0.0
      %v413 = vmax.f32 %v381, 0.0
      %v414 = vmax.f32 %v382, 0.0
      %v415 = vmax.f32 %v383, 0.0
      %v416 = vmax.f32 %v384, 0.0
      %v417 = vmax.f32 %v385, 0.0
      %v418 = vmax.f32 %v386, 0.0
      %v419 = vmax.f32 %v387, 0.0
      %v420 = vmax.f32 %v388, 0.0
      %v421 = vmax.f32 %v389, 0.0
      %v422 = vmax.f32 %v390, 0.0
      %v423 = vmax.f32 %v391, 0.0
      %v424 = vmax.f32 %v392, 0.0
      %v425 = vmax.f32 %v393, 0.0
      %v426 = vmax.f32 %v394, 0.0
      %v427 = vmax.f32 %v395, 0.0
      %v428 = vmax.f32 %v396, 0.0
      %v429 = vmax.f32 %v397, 0.0
      %v430 = vmax.f32 %v398, 0.0
      %v431 = vmax.f32 %v399, 0.0
      %s432 = scalar_lea.vmem [#allocation2], 24
      %vm433 = vcmask 31744
      %434 = vst.msk [vmem:[%s432 + $0x1] sm:$0xff] %vm433, %v400
      %435 = vst.msk [vmem:[%s432 + $0x9] sm:$0xff] %vm433, %v401
      %436 = vst.msk [vmem:[%s432 + $0x19] sm:$0xff] %vm433, %v402
      %437 = vst.msk [vmem:[%s432 + $0x21] sm:$0xff] %vm433, %v403
      %438 = vst.msk [vmem:[%s432 + $0x31] sm:$0xff] %vm433, %v404
      %439 = vst.msk [vmem:[%s432 + $0x39] sm:$0xff] %vm433, %v405
      %440 = vst.msk [vmem:[%s432 + $0x49] sm:$0xff] %vm433, %v406
      %441 = vst.msk [vmem:[%s432 + $0x51] sm:$0xff] %vm433, %v407
      %442 = vst.msk [vmem:[%s432 + $0x61] sm:$0xff] %vm433, %v408
      %443 = vst.msk [vmem:[%s432 + $0x69] sm:$0xff] %vm433, %v409
      %444 = vst.msk [vmem:[%s432 + $0x79] sm:$0xff] %vm433, %v410
      %445 = vst.msk [vmem:[%s432 + $0x81] sm:$0xff] %vm433, %v411
      %446 = vst.msk [vmem:[%s432 + $0x91] sm:$0xff] %vm433, %v412
      %447 = vst.msk [vmem:[%s432 + $0x99] sm:$0xff] %vm433, %v413
      %448 = vst.msk [vmem:[%s432 + $0xa9] sm:$0xff] %vm433, %v414
      %449 = vst.msk [vmem:[%s432 + $0xb1] sm:$0xff] %vm433, %v415
      %450 = vst.msk [vmem:[%s432 + $0xc1] sm:$0xff] %vm433, %v416
      %451 = vst.msk [vmem:[%s432 + $0xc9] sm:$0xff] %vm433, %v417
      %452 = vst.msk [vmem:[%s432 + $0xd9] sm:$0xff] %vm433, %v418
      %453 = vst.msk [vmem:[%s432 + $0xe1] sm:$0xff] %vm433, %v419
      %454 = vst.msk [vmem:[%s432 + $0xf1] sm:$0xff] %vm433, %v420
      %455 = vst.msk [vmem:[%s432 + $0xf9] sm:$0xff] %vm433, %v421
      %456 = vst.msk [vmem:[%s432 + $0x109] sm:$0xff] %vm433, %v422
      %457 = vst.msk [vmem:[%s432 + $0x111] sm:$0xff] %vm433, %v423
      %458 = vst.msk [vmem:[%s432 + $0x121] sm:$0xff] %vm433, %v424
      %459 = vst.msk [vmem:[%s432 + $0x129] sm:$0xff] %vm433, %v425
      %460 = vst.msk [vmem:[%s432 + $0x139] sm:$0xff] %vm433, %v426
      %461 = vst.msk [vmem:[%s432 + $0x141] sm:$0xff] %vm433, %v427
      %462 = vst.msk [vmem:[%s432 + $0x151] sm:$0xff] %vm433, %v428
      %463 = vst.msk [vmem:[%s432 + $0x159] sm:$0xff] %vm433, %v429
      %464 = vst.msk [vmem:[%s432 + $0x169] sm:$0xff] %vm433, %v430
      %465 = vst.msk [vmem:[%s432 + $0x171] sm:$0xff] %vm433, %v431
      %v466 = vld [vmem:[%s3] sm:$0xff]
      %v467 = vld [vmem:[%s3 + $0x8] sm:$0xf]
      %v468 = vld [vmem:[%s3 + $0x10] sm:$0xff]
      %v469 = vld [vmem:[%s3 + $0x18] sm:$0xf]
      %v470 = vld [vmem:[%s3 + $0x20] sm:$0xff]
      %v471 = vld [vmem:[%s3 + $0x28] sm:$0xf]
      %v472 = vld [vmem:[#allocation2] sm:$0xff]
      %v473 = vld [vmem:[#allocation2 + $0x8] sm:$0xff]
      %v474 = vld [vmem:[#allocation2 + $0x10] sm:$0x3]
      %v475 = vld [vmem:[#allocation2 + $0x18] sm:$0xff]
      %v476 = vld [vmem:[#allocation2 + $0x20] sm:$0xff]
      %v477 = vld [vmem:[#allocation2 + $0x28] sm:$0x3]
      %v478 = vld [vmem:[#allocation2 + $0x30] sm:$0xff]
      %v479 = vld [vmem:[#allocation2 + $0x38] sm:$0xff]
      %v480 = vld [vmem:[#allocation2 + $0x40] sm:$0x3]
      %v481 = vld [vmem:[#allocation2 + $0x48] sm:$0xff]
      %v482 = vld [vmem:[#allocation2 + $0x50] sm:$0xff]
      %v483 = vld [vmem:[#allocation2 + $0x58] sm:$0x3]
      %v484 = vld [vmem:[#allocation2 + $0x60] sm:$0xff]
      %v485 = vld [vmem:[#allocation2 + $0x68] sm:$0xff]
      %v486 = vld [vmem:[#allocation2 + $0x70] sm:$0x3]
      %v487 = vld [vmem:[#allocation2 + $0x78] sm:$0xff]
      %v488 = vld [vmem:[#allocation2 + $0x80] sm:$0xff]
      %v489 = vld [vmem:[#allocation2 + $0x88] sm:$0x3]
      %v490 = vld [vmem:[#allocation2 + $0x90] sm:$0xff]
      %v491 = vld [vmem:[#allocation2 + $0x98] sm:$0xff]
      %v492 = vld [vmem:[#allocation2 + $0xa0] sm:$0x3]
      %v493 = vld [vmem:[#allocation2 + $0xa8] sm:$0xff]
      %v494 = vld [vmem:[#allocation2 + $0xb0] sm:$0xff]
      %v495 = vld [vmem:[#allocation2 + $0xb8] sm:$0x3]
      %v496 = vld [vmem:[#allocation2 + $0xc0] sm:$0xff]
      %v497 = vld [vmem:[#allocation2 + $0xc8] sm:$0xff]
      %v498 = vld [vmem:[#allocation2 + $0xd0] sm:$0x3]
      %v499 = vld [vmem:[#allocation2 + $0xd8] sm:$0xff]
      %v500 = vld [vmem:[#allocation2 + $0xe0] sm:$0xff]
      %v501 = vld [vmem:[#allocation2 + $0xe8] sm:$0x3]
      %v502 = vld [vmem:[#allocation2 + $0xf0] sm:$0xff]
      %v503 = vld [vmem:[#allocation2 + $0xf8] sm:$0xff]
      %v504 = vld [vmem:[#allocation2 + $0x100] sm:$0x3]
      %v505 = vld [vmem:[#allocation2 + $0x108] sm:$0xff]
      %v506 = vld [vmem:[#allocation2 + $0x110] sm:$0xff]
      %v507 = vld [vmem:[#allocation2 + $0x118] sm:$0x3]
      %v508 = vld [vmem:[#allocation2 + $0x120] sm:$0xff]
      %v509 = vld [vmem:[#allocation2 + $0x128] sm:$0xff]
      %v510 = vld [vmem:[#allocation2 + $0x130] sm:$0x3]
      %v511 = vld [vmem:[#allocation2 + $0x138] sm:$0xff]
      %v512 = vld [vmem:[#allocation2 + $0x140] sm:$0xff]
      %v513 = vld [vmem:[#allocation2 + $0x148] sm:$0x3]
      %v514 = vld [vmem:[#allocation2 + $0x150] sm:$0xff]
      %v515 = vld [vmem:[#allocation2 + $0x158] sm:$0xff]
      %v516 = vld [vmem:[#allocation2 + $0x160] sm:$0x3]
      %v517 = vld [vmem:[#allocation2 + $0x168] sm:$0xff]
      %v518 = vld [vmem:[#allocation2 + $0x170] sm:$0xff]
      %v519 = vld [vmem:[#allocation2 + $0x178] sm:$0x3]
      %vm568 = vcmask 1046528
      %v569 = vrot.slane %v472, 1
      %v570 = vrot.slane %v473, 1
      %v571 = vsel %vm568, %v569, %v570
      %v572 = vrot.slane %v474, 1
      %v573 = vsel %vm568, %v570, %v572
      %v574 = vrot.slane %v475, 1
      %v575 = vrot.slane %v476, 1
      %v576 = vsel %vm568, %v574, %v575
      %v577 = vrot.slane %v477, 1
      %v578 = vsel %vm568, %v575, %v577
      %v579 = vrot.slane %v478, 1
      %v580 = vrot.slane %v479, 1
      %v581 = vsel %vm568, %v579, %v580
      %v582 = vrot.slane %v480, 1
      %v583 = vsel %vm568, %v580, %v582
      %v584 = vrot.slane %v481, 1
      %v585 = vrot.slane %v482, 1
      %v586 = vsel %vm568, %v584, %v585
      %v587 = vrot.slane %v483, 1
      %v588 = vsel %vm568, %v585, %v587
      %v589 = vrot.slane %v484, 1
      %v590 = vrot.slane %v485, 1
      %v591 = vsel %vm568, %v589, %v590
      %v592 = vrot.slane %v486, 1
      %v593 = vsel %vm568, %v590, %v592
      %v594 = vrot.slane %v487, 1
      %v595 = vrot.slane %v488, 1
      %v596 = vsel %vm568, %v594, %v595
      %v597 = vrot.slane %v489, 1
      %v598 = vsel %vm568, %v595, %v597
      %v599 = vrot.slane %v490, 1
      %v600 = vrot.slane %v491, 1
      %v601 = vsel %vm568, %v599, %v600
      %v602 = vrot.slane %v492, 1
      %v603 = vsel %vm568, %v600, %v602
      %v604 = vrot.slane %v493, 1
      %v605 = vrot.slane %v494, 1
      %v606 = vsel %vm568, %v604, %v605
      %v607 = vrot.slane %v495, 1
      %v608 = vsel %vm568, %v605, %v607
      %v609 = vrot.slane %v496, 1
      %v610 = vrot.slane %v497, 1
      %v611 = vsel %vm568, %v609, %v610
      %v612 = vrot.slane %v498, 1
      %v613 = vsel %vm568, %v610, %v612
      %v614 = vrot.slane %v499, 1
      %v615 = vrot.slane %v500, 1
      %v616 = vsel %vm568, %v614, %v615
      %v617 = vrot.slane %v501, 1
      %v618 = vsel %vm568, %v615, %v617
      %v619 = vrot.slane %v502, 1
      %v620 = vrot.slane %v503, 1
      %v621 = vsel %vm568, %v619, %v620
      %v622 = vrot.slane %v504, 1
      %v623 = vsel %vm568, %v620, %v622
      %v624 = vrot.slane %v505, 1
      %v625 = vrot.slane %v506, 1
      %v626 = vsel %vm568, %v624, %v625
      %v627 = vrot.slane %v507, 1
      %v628 = vsel %vm568, %v625, %v627
      %v629 = vrot.slane %v508, 1
      %v630 = vrot.slane %v509, 1
      %v631 = vsel %vm568, %v629, %v630
      %v632 = vrot.slane %v510, 1
      %v633 = vsel %vm568, %v630, %v632
      %v634 = vrot.slane %v511, 1
      %v635 = vrot.slane %v512, 1
      %v636 = vsel %vm568, %v634, %v635
      %v637 = vrot.slane %v513, 1
      %v638 = vsel %vm568, %v635, %v637
      %v639 = vrot.slane %v514, 1
      %v640 = vrot.slane %v515, 1
      %v641 = vsel %vm568, %v639, %v640
      %v642 = vrot.slane %v516, 1
      %v643 = vsel %vm568, %v640, %v642
      %v644 = vrot.slane %v517, 1
      %v645 = vrot.slane %v518, 1
      %v646 = vsel %vm568, %v644, %v645
      %v647 = vrot.slane %v519, 1
      %v648 = vsel %vm568, %v645, %v647
      %649 = vrot.lane.b32.xlu0 %v571, 4
      %v650 = vpop.permute.xlu0 %649
      %651 = vrot.lane.b32.xlu0 %v573, 4
      %v652 = vpop.permute.xlu0 %651
      %653 = vrot.lane.b32.xlu0 %v576, 4
      %v654 = vpop.permute.xlu0 %653
      %655 = vrot.lane.b32.xlu0 %v578, 4
      %v656 = vpop.permute.xlu0 %655
      %657 = vrot.lane.b32.xlu0 %v581, 4
      %v658 = vpop.permute.xlu0 %657
      %659 = vrot.lane.b32.xlu0 %v583, 4
      %v660 = vpop.permute.xlu0 %659
      %661 = vrot.lane.b32.xlu0 %v586, 4
      %v662 = vpop.permute.xlu0 %661
      %663 = vrot.lane.b32.xlu0 %v588, 4
      %v664 = vpop.permute.xlu0 %663
      %665 = vrot.lane.b32.xlu0 %v591, 4
      %v666 = vpop.permute.xlu0 %665
      %667 = vrot.lane.b32.xlu0 %v593, 4
      %v668 = vpop.permute.xlu0 %667
      %669 = vrot.lane.b32.xlu0 %v596, 4
      %v670 = vpop.permute.xlu0 %669
      %671 = vrot.lane.b32.xlu0 %v598, 4
      %v672 = vpop.permute.xlu0 %671
      %673 = vrot.lane.b32.xlu0 %v601, 4
      %v674 = vpop.permute.xlu0 %673
      %675 = vrot.lane.b32.xlu0 %v603, 4
      %v676 = vpop.permute.xlu0 %675
      %677 = vrot.lane.b32.xlu0 %v606, 4
      %v678 = vpop.permute.xlu0 %677
      %679 = vrot.lane.b32.xlu0 %v608, 4
      %v680 = vpop.permute.xlu0 %679
      %681 = vrot.lane.b32.xlu0 %v611, 4
      %v682 = vpop.permute.xlu0 %681
      %683 = vrot.lane.b32.xlu0 %v613, 4
      %v684 = vpop.permute.xlu0 %683
      %685 = vrot.lane.b32.xlu0 %v616, 4
      %v686 = vpop.permute.xlu0 %685
      %687 = vrot.lane.b32.xlu0 %v618, 4
      %v688 = vpop.permute.xlu0 %687
      %689 = vrot.lane.b32.xlu0 %v621, 4
      %v690 = vpop.permute.xlu0 %689
      %691 = vrot.lane.b32.xlu0 %v623, 4
      %v692 = vpop.permute.xlu0 %691
      %693 = vrot.lane.b32.xlu0 %v626, 4
      %v694 = vpop.permute.xlu0 %693
      %695 = vrot.lane.b32.xlu0 %v628, 4
      %v696 = vpop.permute.xlu0 %695
      %697 = vrot.lane.b32.xlu0 %v631, 4
      %v698 = vpop.permute.xlu0 %697
      %699 = vrot.lane.b32.xlu0 %v633, 4
      %v700 = vpop.permute.xlu0 %699
      %701 = vrot.lane.b32.xlu0 %v636, 4
      %v702 = vpop.permute.xlu0 %701
      %703 = vrot.lane.b32.xlu0 %v638, 4
      %v704 = vpop.permute.xlu0 %703
      %705 = vrot.lane.b32.xlu0 %v641, 4
      %v706 = vpop.permute.xlu0 %705
      %707 = vrot.lane.b32.xlu0 %v643, 4
      %v708 = vpop.permute.xlu0 %707
      %709 = vrot.lane.b32.xlu0 %v646, 4
      %v710 = vpop.permute.xlu0 %709
      %711 = vrot.lane.b32.xlu0 %v648, 4
      %v712 = vpop.permute.xlu0 %711
      %vm745 = vcmask 1045504
      %v746 = vrot.slane %v472, 2
      %v747 = vrot.slane %v473, 2
      %v748 = vsel %vm745, %v746, %v747
      %v749 = vrot.slane %v474, 2
      %v750 = vsel %vm745, %v747, %v749
      %v751 = vrot.slane %v475, 2
      %v752 = vrot.slane %v476, 2
      %v753 = vsel %vm745, %v751, %v752
      %v754 = vrot.slane %v477, 2
      %v755 = vsel %vm745, %v752, %v754
      %v756 = vrot.slane %v478, 2
      %v757 = vrot.slane %v479, 2
      %v758 = vsel %vm745, %v756, %v757
      %v759 = vrot.slane %v480, 2
      %v760 = vsel %vm745, %v757, %v759
      %v761 = vrot.slane %v481, 2
      %v762 = vrot.slane %v482, 2
      %v763 = vsel %vm745, %v761, %v762
      %v764 = vrot.slane %v483, 2
      %v765 = vsel %vm745, %v762, %v764
      %v766 = vrot.slane %v484, 2
      %v767 = vrot.slane %v485, 2
      %v768 = vsel %vm745, %v766, %v767
      %v769 = vrot.slane %v486, 2
      %v770 = vsel %vm745, %v767, %v769
      %v771 = vrot.slane %v487, 2
      %v772 = vrot.slane %v488, 2
      %v773 = vsel %vm745, %v771, %v772
      %v774 = vrot.slane %v489, 2
      %v775 = vsel %vm745, %v772, %v774
      %v776 = vrot.slane %v490, 2
      %v777 = vrot.slane %v491, 2
      %v778 = vsel %vm745, %v776, %v777
      %v779 = vrot.slane %v492, 2
      %v780 = vsel %vm745, %v777, %v779
      %v781 = vrot.slane %v493, 2
      %v782 = vrot.slane %v494, 2
      %v783 = vsel %vm745, %v781, %v782
      %v784 = vrot.slane %v495, 2
      %v785 = vsel %vm745, %v782, %v784
      %v786 = vrot.slane %v496, 2
      %v787 = vrot.slane %v497, 2
      %v788 = vsel %vm745, %v786, %v787
      %v789 = vrot.slane %v498, 2
      %v790 = vsel %vm745, %v787, %v789
      %v791 = vrot.slane %v499, 2
      %v792 = vrot.slane %v500, 2
      %v793 = vsel %vm745, %v791, %v792
      %v794 = vrot.slane %v501, 2
      %v795 = vsel %vm745, %v792, %v794
      %v796 = vrot.slane %v502, 2
      %v797 = vrot.slane %v503, 2
      %v798 = vsel %vm745, %v796, %v797
      %v799 = vrot.slane %v504, 2
      %v800 = vsel %vm745, %v797, %v799
      %v801 = vrot.slane %v505, 2
      %v802 = vrot.slane %v506, 2
      %v803 = vsel %vm745, %v801, %v802
      %v804 = vrot.slane %v507, 2
      %v805 = vsel %vm745, %v802, %v804
      %v806 = vrot.slane %v508, 2
      %v807 = vrot.slane %v509, 2
      %v808 = vsel %vm745, %v806, %v807
      %v809 = vrot.slane %v510, 2
      %v810 = vsel %vm745, %v807, %v809
      %v811 = vrot.slane %v511, 2
      %v812 = vrot.slane %v512, 2
      %v813 = vsel %vm745, %v811, %v812
      %v814 = vrot.slane %v513, 2
      %v815 = vsel %vm745, %v812, %v814
      %v816 = vrot.slane %v514, 2
      %v817 = vrot.slane %v515, 2
      %v818 = vsel %vm745, %v816, %v817
      %v819 = vrot.slane %v516, 2
      %v820 = vsel %vm745, %v817, %v819
      %v821 = vrot.slane %v517, 2
      %v822 = vrot.slane %v518, 2
      %v823 = vsel %vm745, %v821, %v822
      %v824 = vrot.slane %v519, 2
      %v825 = vsel %vm745, %v822, %v824
      %826 = vrot.lane.b32.xlu0 %v748, 8
      %v827 = vpop.permute.xlu0 %826
      %828 = vrot.lane.b32.xlu0 %v750, 8
      %v829 = vpop.permute.xlu0 %828
      %830 = vrot.lane.b32.xlu0 %v753, 8
      %v831 = vpop.permute.xlu0 %830
      %832 = vrot.lane.b32.xlu0 %v755, 8
      %v833 = vpop.permute.xlu0 %832
      %834 = vrot.lane.b32.xlu0 %v758, 8
      %v835 = vpop.permute.xlu0 %834
      %836 = vrot.lane.b32.xlu0 %v760, 8
      %v837 = vpop.permute.xlu0 %836
      %838 = vrot.lane.b32.xlu0 %v763, 8
      %v839 = vpop.permute.xlu0 %838
      %840 = vrot.lane.b32.xlu0 %v765, 8
      %v841 = vpop.permute.xlu0 %840
      %842 = vrot.lane.b32.xlu0 %v768, 8
      %v843 = vpop.permute.xlu0 %842
      %844 = vrot.lane.b32.xlu0 %v770, 8
      %v845 = vpop.permute.xlu0 %844
      %846 = vrot.lane.b32.xlu0 %v773, 8
      %v847 = vpop.permute.xlu0 %846
      %848 = vrot.lane.b32.xlu0 %v775, 8
      %v849 = vpop.permute.xlu0 %848
      %850 = vrot.lane.b32.xlu0 %v778, 8
      %v851 = vpop.permute.xlu0 %850
      %852 = vrot.lane.b32.xlu0 %v780, 8
      %v853 = vpop.permute.xlu0 %852
      %854 = vrot.lane.b32.xlu0 %v783, 8
      %v855 = vpop.permute.xlu0 %854
      %856 = vrot.lane.b32.xlu0 %v785, 8
      %v857 = vpop.permute.xlu0 %856
      %858 = vrot.lane.b32.xlu0 %v788, 8
      %v859 = vpop.permute.xlu0 %858
      %860 = vrot.lane.b32.xlu0 %v790, 8
      %v861 = vpop.permute.xlu0 %860
      %862 = vrot.lane.b32.xlu0 %v793, 8
      %v863 = vpop.permute.xlu0 %862
      %864 = vrot.lane.b32.xlu0 %v795, 8
      %v865 = vpop.permute.xlu0 %864
      %866 = vrot.lane.b32.xlu0 %v798, 8
      %v867 = vpop.permute.xlu0 %866
      %868 = vrot.lane.b32.xlu0 %v800, 8
      %v869 = vpop.permute.xlu0 %868
      %870 = vrot.lane.b32.xlu0 %v803, 8
      %v871 = vpop.permute.xlu0 %870
      %872 = vrot.lane.b32.xlu0 %v805, 8
      %v873 = vpop.permute.xlu0 %872
      %874 = vrot.lane.b32.xlu0 %v808, 8
      %v875 = vpop.permute.xlu0 %874
      %876 = vrot.lane.b32.xlu0 %v810, 8
      %v877 = vpop.permute.xlu0 %876
      %878 = vrot.lane.b32.xlu0 %v813, 8
      %v879 = vpop.permute.xlu0 %878
      %880 = vrot.lane.b32.xlu0 %v815, 8
      %v881 = vpop.permute.xlu0 %880
      %882 = vrot.lane.b32.xlu0 %v818, 8
      %v883 = vpop.permute.xlu0 %882
      %884 = vrot.lane.b32.xlu0 %v820, 8
      %v885 = vpop.permute.xlu0 %884
      %886 = vrot.lane.b32.xlu0 %v823, 8
      %v887 = vpop.permute.xlu0 %886
      %888 = vrot.lane.b32.xlu0 %v825, 8
      %v889 = vpop.permute.xlu0 %888
      %v922 = vsel %vm433, %v472, %v650
      %v923 = vsel %vm433, %v473, %v652
      %v924 = vsel %vm433, %v475, %v654
      %v925 = vsel %vm433, %v476, %v656
      %v926 = vsel %vm433, %v478, %v658
      %v927 = vsel %vm433, %v479, %v660
      %v928 = vsel %vm433, %v481, %v662
      %v929 = vsel %vm433, %v482, %v664
      %v930 = vsel %vm433, %v484, %v666
      %v931 = vsel %vm433, %v485, %v668
      %v932 = vsel %vm433, %v487, %v670
      %v933 = vsel %vm433, %v488, %v672
      %v934 = vsel %vm433, %v490, %v674
      %v935 = vsel %vm433, %v491, %v676
      %v936 = vsel %vm433, %v493, %v678
      %v937 = vsel %vm433, %v494, %v680
      %v938 = vsel %vm433, %v496, %v682
      %v939 = vsel %vm433, %v497, %v684
      %v940 = vsel %vm433, %v499, %v686
      %v941 = vsel %vm433, %v500, %v688
      %v942 = vsel %vm433, %v502, %v690
      %v943 = vsel %vm433, %v503, %v692
      %v944 = vsel %vm433, %v505, %v694
      %v945 = vsel %vm433, %v506, %v696
      %v946 = vsel %vm433, %v508, %v698
      %v947 = vsel %vm433, %v509, %v700
      %v948 = vsel %vm433, %v511, %v702
      %v949 = vsel %vm433, %v512, %v704
      %v950 = vsel %vm433, %v514, %v706
      %v951 = vsel %vm433, %v515, %v708
      %v952 = vsel %vm433, %v517, %v710
      %v953 = vsel %vm433, %v518, %v712
      %vm954 = vcmask 64512
      %v955 = vsel %vm954, %v922, %v827
      %v956 = vsel %vm954, %v923, %v829
      %v957 = vsel %vm954, %v924, %v831
      %v958 = vsel %vm954, %v925, %v833
      %v959 = vsel %vm954, %v926, %v835
      %v960 = vsel %vm954, %v927, %v837
      %v961 = vsel %vm954, %v928, %v839
      %v962 = vsel %vm954, %v929, %v841
      %v963 = vsel %vm954, %v930, %v843
      %v964 = vsel %vm954, %v931, %v845
      %v965 = vsel %vm954, %v932, %v847
      %v966 = vsel %vm954, %v933, %v849
      %v967 = vsel %vm954, %v934, %v851
      %v968 = vsel %vm954, %v935, %v853
      %v969 = vsel %vm954, %v936, %v855
      %v970 = vsel %vm954, %v937, %v857
      %v971 = vsel %vm954, %v938, %v859
      %v972 = vsel %vm954, %v939, %v861
      %v973 = vsel %vm954, %v940, %v863
      %v974 = vsel %vm954, %v941, %v865
      %v975 = vsel %vm954, %v942, %v867
      %v976 = vsel %vm954, %v943, %v869
      %v977 = vsel %vm954, %v944, %v871
      %v978 = vsel %vm954, %v945, %v873
      %v979 = vsel %vm954, %v946, %v875
      %v980 = vsel %vm954, %v947, %v877
      %v981 = vsel %vm954, %v948, %v879
      %v982 = vsel %vm954, %v949, %v881
      %v983 = vsel %vm954, %v950, %v883
      %v984 = vsel %vm954, %v951, %v885
      %v985 = vsel %vm954, %v952, %v887
      %v986 = vsel %vm954, %v953, %v889
      %v987 = vld [vmem:[%s432] sm:$0xff]
      %v988 = vld [vmem:[%s432 + $0x8] sm:$0xff]
      %v989 = vld [vmem:[%s432 + $0x10] sm:$0x3]
      %v990 = vld [vmem:[%s432 + $0x18] sm:$0xff]
      %v991 = vld [vmem:[%s432 + $0x20] sm:$0xff]
      %v992 = vld [vmem:[%s432 + $0x28] sm:$0x3]
      %v993 = vld [vmem:[%s432 + $0x30] sm:$0xff]
      %v994 = vld [vmem:[%s432 + $0x38] sm:$0xff]
      %v995 = vld [vmem:[%s432 + $0x40] sm:$0x3]
      %v996 = vld [vmem:[%s432 + $0x48] sm:$0xff]
      %v997 = vld [vmem:[%s432 + $0x50] sm:$0xff]
      %v998 = vld [vmem:[%s432 + $0x58] sm:$0x3]
      %v999 = vld [vmem:[%s432 + $0x60] sm:$0xff]
      %v1000 = vld [vmem:[%s432 + $0x68] sm:$0xff]
      %v1001 = vld [vmem:[%s432 + $0x70] sm:$0x3]
      %v1002 = vld [vmem:[%s432 + $0x78] sm:$0xff]
      %v1003 = vld [vmem:[%s432 + $0x80] sm:$0xff]
      %v1004 = vld [vmem:[%s432 + $0x88] sm:$0x3]
      %v1005 = vld [vmem:[%s432 + $0x90] sm:$0xff]
      %v1006 = vld [vmem:[%s432 + $0x98] sm:$0xff]
      %v1007 = vld [vmem:[%s432 + $0xa0] sm:$0x3]
      %v1008 = vld [vmem:[%s432 + $0xa8] sm:$0xff]
      %v1009 = vld [vmem:[%s432 + $0xb0] sm:$0xff]
      %v1010 = vld [vmem:[%s432 + $0xb8] sm:$0x3]
      %v1011 = vld [vmem:[%s432 + $0xc0] sm:$0xff]
      %v1012 = vld [vmem:[%s432 + $0xc8] sm:$0xff]
      %v1013 = vld [vmem:[%s432 + $0xd0] sm:$0x3]
      %v1014 = vld [vmem:[%s432 + $0xd8] sm:$0xff]
      %v1015 = vld [vmem:[%s432 + $0xe0] sm:$0xff]
      %v1016 = vld [vmem:[%s432 + $0xe8] sm:$0x3]
      %v1017 = vld [vmem:[%s432 + $0xf0] sm:$0xff]
      %v1018 = vld [vmem:[%s432 + $0xf8] sm:$0xff]
      %v1019 = vld [vmem:[%s432 + $0x100] sm:$0x3]
      %v1020 = vld [vmem:[%s432 + $0x108] sm:$0xff]
      %v1021 = vld [vmem:[%s432 + $0x110] sm:$0xff]
      %v1022 = vld [vmem:[%s432 + $0x118] sm:$0x3]
      %v1023 = vld [vmem:[%s432 + $0x120] sm:$0xff]
      %v1024 = vld [vmem:[%s432 + $0x128] sm:$0xff]
      %v1025 = vld [vmem:[%s432 + $0x130] sm:$0x3]
      %v1026 = vld [vmem:[%s432 + $0x138] sm:$0xff]
      %v1027 = vld [vmem:[%s432 + $0x140] sm:$0xff]
      %v1028 = vld [vmem:[%s432 + $0x148] sm:$0x3]
      %v1029 = vld [vmem:[%s432 + $0x150] sm:$0xff]
      %v1030 = vld [vmem:[%s432 + $0x158] sm:$0xff]
      %v1031 = vld [vmem:[%s432 + $0x160] sm:$0x3]
      %v1032 = vld [vmem:[%s432 + $0x168] sm:$0xff]
      %v1033 = vld [vmem:[%s432 + $0x170] sm:$0xff]
      %v1034 = vld [vmem:[%s432 + $0x178] sm:$0x3]
      %v1083 = vrot.slane %v987, 1
      %v1084 = vrot.slane %v988, 1
      %v1085 = vsel %vm568, %v1083, %v1084
      %v1086 = vrot.slane %v989, 1
      %v1087 = vsel %vm568, %v1084, %v1086
      %v1088 = vrot.slane %v990, 1
      %v1089 = vrot.slane %v991, 1
      %v1090 = vsel %vm568, %v1088, %v1089
      %v1091 = vrot.slane %v992, 1
      %v1092 = vsel %vm568, %v1089, %v1091
      %v1093 = vrot.slane %v993, 1
      %v1094 = vrot.slane %v994, 1
      %v1095 = vsel %vm568, %v1093, %v1094
      %v1096 = vrot.slane %v995, 1
      %v1097 = vsel %vm568, %v1094, %v1096
      %v1098 = vrot.slane %v996, 1
      %v1099 = vrot.slane %v997, 1
      %v1100 = vsel %vm568, %v1098, %v1099
      %v1101 = vrot.slane %v998, 1
      %v1102 = vsel %vm568, %v1099, %v1101
      %v1103 = vrot.slane %v999, 1
      %v1104 = vrot.slane %v1000, 1
      %v1105 = vsel %vm568, %v1103, %v1104
      %v1106 = vrot.slane %v1001, 1
      %v1107 = vsel %vm568, %v1104, %v1106
      %v1108 = vrot.slane %v1002, 1
      %v1109 = vrot.slane %v1003, 1
      %v1110 = vsel %vm568, %v1108, %v1109
      %v1111 = vrot.slane %v1004, 1
      %v1112 = vsel %vm568, %v1109, %v1111
      %v1113 = vrot.slane %v1005, 1
      %v1114 = vrot.slane %v1006, 1
      %v1115 = vsel %vm568, %v1113, %v1114
      %v1116 = vrot.slane %v1007, 1
      %v1117 = vsel %vm568, %v1114, %v1116
      %v1118 = vrot.slane %v1008, 1
      %v1119 = vrot.slane %v1009, 1
      %v1120 = vsel %vm568, %v1118, %v1119
      %v1121 = vrot.slane %v1010, 1
      %v1122 = vsel %vm568, %v1119, %v1121
      %v1123 = vrot.slane %v1011, 1
      %v1124 = vrot.slane %v1012, 1
      %v1125 = vsel %vm568, %v1123, %v1124
      %v1126 = vrot.slane %v1013, 1
      %v1127 = vsel %vm568, %v1124, %v1126
      %v1128 = vrot.slane %v1014, 1
      %v1129 = vrot.slane %v1015, 1
      %v1130 = vsel %vm568, %v1128, %v1129
      %v1131 = vrot.slane %v1016, 1
      %v1132 = vsel %vm568, %v1129, %v1131
      %v1133 = vrot.slane %v1017, 1
      %v1134 = vrot.slane %v1018, 1
      %v1135 = vsel %vm568, %v1133, %v1134
      %v1136 = vrot.slane %v1019, 1
      %v1137 = vsel %vm568, %v1134, %v1136
      %v1138 = vrot.slane %v1020, 1
      %v1139 = vrot.slane %v1021, 1
      %v1140 = vsel %vm568, %v1138, %v1139
      %v1141 = vrot.slane %v1022, 1
      %v1142 = vsel %vm568, %v1139, %v1141
      %v1143 = vrot.slane %v1023, 1
      %v1144 = vrot.slane %v1024, 1
      %v1145 = vsel %vm568, %v1143, %v1144
      %v1146 = vrot.slane %v1025, 1
      %v1147 = vsel %vm568, %v1144, %v1146
      %v1148 = vrot.slane %v1026, 1
      %v1149 = vrot.slane %v1027, 1
      %v1150 = vsel %vm568, %v1148, %v1149
      %v1151 = vrot.slane %v1028, 1
      %v1152 = vsel %vm568, %v1149, %v1151
      %v1153 = vrot.slane %v1029, 1
      %v1154 = vrot.slane %v1030, 1
      %v1155 = vsel %vm568, %v1153, %v1154
      %v1156 = vrot.slane %v1031, 1
      %v1157 = vsel %vm568, %v1154, %v1156
      %v1158 = vrot.slane %v1032, 1
      %v1159 = vrot.slane %v1033, 1
      %v1160 = vsel %vm568, %v1158, %v1159
      %v1161 = vrot.slane %v1034, 1
      %v1162 = vsel %vm568, %v1159, %v1161
      %1163 = vrot.lane.b32.xlu0 %v1085, 4
      %v1164 = vpop.permute.xlu0 %1163
      %1165 = vrot.lane.b32.xlu0 %v1087, 4
      %v1166 = vpop.permute.xlu0 %1165
      %1167 = vrot.lane.b32.xlu0 %v1090, 4
      %v1168 = vpop.permute.xlu0 %1167
      %1169 = vrot.lane.b32.xlu0 %v1092, 4
      %v1170 = vpop.permute.xlu0 %1169
      %1171 = vrot.lane.b32.xlu0 %v1095, 4
      %v1172 = vpop.permute.xlu0 %1171
      %1173 = vrot.lane.b32.xlu0 %v1097, 4
      %v1174 = vpop.permute.xlu0 %1173
      %1175 = vrot.lane.b32.xlu0 %v1100, 4
      %v1176 = vpop.permute.xlu0 %1175
      %1177 = vrot.lane.b32.xlu0 %v1102, 4
      %v1178 = vpop.permute.xlu0 %1177
      %1179 = vrot.lane.b32.xlu0 %v1105, 4
      %v1180 = vpop.permute.xlu0 %1179
      %1181 = vrot.lane.b32.xlu0 %v1107, 4
      %v1182 = vpop.permute.xlu0 %1181
      %1183 = vrot.lane.b32.xlu0 %v1110, 4
      %v1184 = vpop.permute.xlu0 %1183
      %1185 = vrot.lane.b32.xlu0 %v1112, 4
      %v1186 = vpop.permute.xlu0 %1185
      %1187 = vrot.lane.b32.xlu0 %v1115, 4
      %v1188 = vpop.permute.xlu0 %1187
      %1189 = vrot.lane.b32.xlu0 %v1117, 4
      %v1190 = vpop.permute.xlu0 %1189
      %1191 = vrot.lane.b32.xlu0 %v1120, 4
      %v1192 = vpop.permute.xlu0 %1191
      %1193 = vrot.lane.b32.xlu0 %v1122, 4
      %v1194 = vpop.permute.xlu0 %1193
      %1195 = vrot.lane.b32.xlu0 %v1125, 4
      %v1196 = vpop.permute.xlu0 %1195
      %1197 = vrot.lane.b32.xlu0 %v1127, 4
      %v1198 = vpop.permute.xlu0 %1197
      %1199 = vrot.lane.b32.xlu0 %v1130, 4
      %v1200 = vpop.permute.xlu0 %1199
      %1201 = vrot.lane.b32.xlu0 %v1132, 4
      %v1202 = vpop.permute.xlu0 %1201
      %1203 = vrot.lane.b32.xlu0 %v1135, 4
      %v1204 = vpop.permute.xlu0 %1203
      %1205 = vrot.lane.b32.xlu0 %v1137, 4
      %v1206 = vpop.permute.xlu0 %1205
      %1207 = vrot.lane.b32.xlu0 %v1140, 4
      %v1208 = vpop.permute.xlu0 %1207
      %1209 = vrot.lane.b32.xlu0 %v1142, 4
      %v1210 = vpop.permute.xlu0 %1209
      %1211 = vrot.lane.b32.xlu0 %v1145, 4
      %v1212 = vpop.permute.xlu0 %1211
      %1213 = vrot.lane.b32.xlu0 %v1147, 4
      %v1214 = vpop.permute.xlu0 %1213
      %1215 = vrot.lane.b32.xlu0 %v1150, 4
      %v1216 = vpop.permute.xlu0 %1215
      %1217 = vrot.lane.b32.xlu0 %v1152, 4
      %v1218 = vpop.permute.xlu0 %1217
      %1219 = vrot.lane.b32.xlu0 %v1155, 4
      %v1220 = vpop.permute.xlu0 %1219
      %1221 = vrot.lane.b32.xlu0 %v1157, 4
      %v1222 = vpop.permute.xlu0 %1221
      %1223 = vrot.lane.b32.xlu0 %v1160, 4
      %v1224 = vpop.permute.xlu0 %1223
      %1225 = vrot.lane.b32.xlu0 %v1162, 4
      %v1226 = vpop.permute.xlu0 %1225
      %v1259 = vrot.slane %v987, 2
      %v1260 = vrot.slane %v988, 2
      %v1261 = vsel %vm745, %v1259, %v1260
      %v1262 = vrot.slane %v989, 2
      %v1263 = vsel %vm745, %v1260, %v1262
      %v1264 = vrot.slane %v990, 2
      %v1265 = vrot.slane %v991, 2
      %v1266 = vsel %vm745, %v1264, %v1265
      %v1267 = vrot.slane %v992, 2
      %v1268 = vsel %vm745, %v1265, %v1267
      %v1269 = vrot.slane %v993, 2
      %v1270 = vrot.slane %v994, 2
      %v1271 = vsel %vm745, %v1269, %v1270
      %v1272 = vrot.slane %v995, 2
      %v1273 = vsel %vm745, %v1270, %v1272
      %v1274 = vrot.slane %v996, 2
      %v1275 = vrot.slane %v997, 2
      %v1276 = vsel %vm745, %v1274, %v1275
      %v1277 = vrot.slane %v998, 2
      %v1278 = vsel %vm745, %v1275, %v1277
      %v1279 = vrot.slane %v999, 2
      %v1280 = vrot.slane %v1000, 2
      %v1281 = vsel %vm745, %v1279, %v1280
      %v1282 = vrot.slane %v1001, 2
      %v1283 = vsel %vm745, %v1280, %v1282
      %v1284 = vrot.slane %v1002, 2
      %v1285 = vrot.slane %v1003, 2
      %v1286 = vsel %vm745, %v1284, %v1285
      %v1287 = vrot.slane %v1004, 2
      %v1288 = vsel %vm745, %v1285, %v1287
      %v1289 = vrot.slane %v1005, 2
      %v1290 = vrot.slane %v1006, 2
      %v1291 = vsel %vm745, %v1289, %v1290
      %v1292 = vrot.slane %v1007, 2
      %v1293 = vsel %vm745, %v1290, %v1292
      %v1294 = vrot.slane %v1008, 2
      %v1295 = vrot.slane %v1009, 2
      %v1296 = vsel %vm745, %v1294, %v1295
      %v1297 = vrot.slane %v1010, 2
      %v1298 = vsel %vm745, %v1295, %v1297
      %v1299 = vrot.slane %v1011, 2
      %v1300 = vrot.slane %v1012, 2
      %v1301 = vsel %vm745, %v1299, %v1300
      %v1302 = vrot.slane %v1013, 2
      %v1303 = vsel %vm745, %v1300, %v1302
      %v1304 = vrot.slane %v1014, 2
      %v1305 = vrot.slane %v1015, 2
      %v1306 = vsel %vm745, %v1304, %v1305
      %v1307 = vrot.slane %v1016, 2
      %v1308 = vsel %vm745, %v1305, %v1307
      %v1309 = vrot.slane %v1017, 2
      %v1310 = vrot.slane %v1018, 2
      %v1311 = vsel %vm745, %v1309, %v1310
      %v1312 = vrot.slane %v1019, 2
      %v1313 = vsel %vm745, %v1310, %v1312
      %v1314 = vrot.slane %v1020, 2
      %v1315 = vrot.slane %v1021, 2
      %v1316 = vsel %vm745, %v1314, %v1315
      %v1317 = vrot.slane %v1022, 2
      %v1318 = vsel %vm745, %v1315, %v1317
      %v1319 = vrot.slane %v1023, 2
      %v1320 = vrot.slane %v1024, 2
      %v1321 = vsel %vm745, %v1319, %v1320
      %v1322 = vrot.slane %v1025, 2
      %v1323 = vsel %vm745, %v1320, %v1322
      %v1324 = vrot.slane %v1026, 2
      %v1325 = vrot.slane %v1027, 2
      %v1326 = vsel %vm745, %v1324, %v1325
      %v1327 = vrot.slane %v1028, 2
      %v1328 = vsel %vm745, %v1325, %v1327
      %v1329 = vrot.slane %v1029, 2
      %v1330 = vrot.slane %v1030, 2
      %v1331 = vsel %vm745, %v1329, %v1330
      %v1332 = vrot.slane %v1031, 2
      %v1333 = vsel %vm745, %v1330, %v1332
      %v1334 = vrot.slane %v1032, 2
      %v1335 = vrot.slane %v1033, 2
      %v1336 = vsel %vm745, %v1334, %v1335
      %v1337 = vrot.slane %v1034, 2
      %v1338 = vsel %vm745, %v1335, %v1337
      %1339 = vrot.lane.b32.xlu0 %v1261, 8
      %v1340 = vpop.permute.xlu0 %1339
      %1341 = vrot.lane.b32.xlu0 %v1263, 8
      %v1342 = vpop.permute.xlu0 %1341
      %1343 = vrot.lane.b32.xlu0 %v1266, 8
      %v1344 = vpop.permute.xlu0 %1343
      %1345 = vrot.lane.b32.xlu0 %v1268, 8
      %v1346 = vpop.permute.xlu0 %1345
      %1347 = vrot.lane.b32.xlu0 %v1271, 8
      %v1348 = vpop.permute.xlu0 %1347
      %1349 = vrot.lane.b32.xlu0 %v1273, 8
      %v1350 = vpop.permute.xlu0 %1349
      %1351 = vrot.lane.b32.xlu0 %v1276, 8
      %v1352 = vpop.permute.xlu0 %1351
      %1353 = vrot.lane.b32.xlu0 %v1278, 8
      %v1354 = vpop.permute.xlu0 %1353
      %1355 = vrot.lane.b32.xlu0 %v1281, 8
      %v1356 = vpop.permute.xlu0 %1355
      %1357 = vrot.lane.b32.xlu0 %v1283, 8
      %v1358 = vpop.permute.xlu0 %1357
      %1359 = vrot.lane.b32.xlu0 %v1286, 8
      %v1360 = vpop.permute.xlu0 %1359
      %1361 = vrot.lane.b32.xlu0 %v1288, 8
      %v1362 = vpop.permute.xlu0 %1361
      %1363 = vrot.lane.b32.xlu0 %v1291, 8
      %v1364 = vpop.permute.xlu0 %1363
      %1365 = vrot.lane.b32.xlu0 %v1293, 8
      %v1366 = vpop.permute.xlu0 %1365
      %1367 = vrot.lane.b32.xlu0 %v1296, 8
      %v1368 = vpop.permute.xlu0 %1367
      %1369 = vrot.lane.b32.xlu0 %v1298, 8
      %v1370 = vpop.permute.xlu0 %1369
      %1371 = vrot.lane.b32.xlu0 %v1301, 8
      %v1372 = vpop.permute.xlu0 %1371
      %1373 = vrot.lane.b32.xlu0 %v1303, 8
      %v1374 = vpop.permute.xlu0 %1373
      %1375 = vrot.lane.b32.xlu0 %v1306, 8
      %v1376 = vpop.permute.xlu0 %1375
      %1377 = vrot.lane.b32.xlu0 %v1308, 8
      %v1378 = vpop.permute.xlu0 %1377
      %1379 = vrot.lane.b32.xlu0 %v1311, 8
      %v1380 = vpop.permute.xlu0 %1379
      %1381 = vrot.lane.b32.xlu0 %v1313, 8
      %v1382 = vpop.permute.xlu0 %1381
      %1383 = vrot.lane.b32.xlu0 %v1316, 8
      %v1384 = vpop.permute.xlu0 %1383
      %1385 = vrot.lane.b32.xlu0 %v1318, 8
      %v1386 = vpop.permute.xlu0 %1385
      %1387 = vrot.lane.b32.xlu0 %v1321, 8
      %v1388 = vpop.permute.xlu0 %1387
      %1389 = vrot.lane.b32.xlu0 %v1323, 8
      %v1390 = vpop.permute.xlu0 %1389
      %1391 = vrot.lane.b32.xlu0 %v1326, 8
      %v1392 = vpop.permute.xlu0 %1391
      %1393 = vrot.lane.b32.xlu0 %v1328, 8
      %v1394 = vpop.permute.xlu0 %1393
      %1395 = vrot.lane.b32.xlu0 %v1331, 8
      %v1396 = vpop.permute.xlu0 %1395
      %1397 = vrot.lane.b32.xlu0 %v1333, 8
      %v1398 = vpop.permute.xlu0 %1397
      %1399 = vrot.lane.b32.xlu0 %v1336, 8
      %v1400 = vpop.permute.xlu0 %1399
      %1401 = vrot.lane.b32.xlu0 %v1338, 8
      %v1402 = vpop.permute.xlu0 %1401
      %v1435 = vsel %vm433, %v987, %v1164
      %v1436 = vsel %vm433, %v988, %v1166
      %v1437 = vsel %vm433, %v990, %v1168
      %v1438 = vsel %vm433, %v991, %v1170
      %v1439 = vsel %vm433, %v993, %v1172
      %v1440 = vsel %vm433, %v994, %v1174
      %v1441 = vsel %vm433, %v996, %v1176
      %v1442 = vsel %vm433, %v997, %v1178
      %v1443 = vsel %vm433, %v999, %v1180
      %v1444 = vsel %vm433, %v1000, %v1182
      %v1445 = vsel %vm433, %v1002, %v1184
      %v1446 = vsel %vm433, %v1003, %v1186
      %v1447 = vsel %vm433, %v1005, %v1188
      %v1448 = vsel %vm433, %v1006, %v1190
      %v1449 = vsel %vm433, %v1008, %v1192
      %v1450 = vsel %vm433, %v1009, %v1194
      %v1451 = vsel %vm433, %v1011, %v1196
      %v1452 = vsel %vm433, %v1012, %v1198
      %v1453 = vsel %vm433, %v1014, %v1200
      %v1454 = vsel %vm433, %v1015, %v1202
      %v1455 = vsel %vm433, %v1017, %v1204
      %v1456 = vsel %vm433, %v1018, %v1206
      %v1457 = vsel %vm433, %v1020, %v1208
      %v1458 = vsel %vm433, %v1021, %v1210
      %v1459 = vsel %vm433, %v1023, %v1212
      %v1460 = vsel %vm433, %v1024, %v1214
      %v1461 = vsel %vm433, %v1026, %v1216
      %v1462 = vsel %vm433, %v1027, %v1218
      %v1463 = vsel %vm433, %v1029, %v1220
      %v1464 = vsel %vm433, %v1030, %v1222
      %v1465 = vsel %vm433, %v1032, %v1224
      %v1466 = vsel %vm433, %v1033, %v1226
      %v1467 = vsel %vm954, %v1435, %v1340
      %v1468 = vsel %vm954, %v1436, %v1342
      %v1469 = vsel %vm954, %v1437, %v1344
      %v1470 = vsel %vm954, %v1438, %v1346
      %v1471 = vsel %vm954, %v1439, %v1348
      %v1472 = vsel %vm954, %v1440, %v1350
      %v1473 = vsel %vm954, %v1441, %v1352
      %v1474 = vsel %vm954, %v1442, %v1354
      %v1475 = vsel %vm954, %v1443, %v1356
      %v1476 = vsel %vm954, %v1444, %v1358
      %v1477 = vsel %vm954, %v1445, %v1360
      %v1478 = vsel %vm954, %v1446, %v1362
      %v1479 = vsel %vm954, %v1447, %v1364
      %v1480 = vsel %vm954, %v1448, %v1366
      %v1481 = vsel %vm954, %v1449, %v1368
      %v1482 = vsel %vm954, %v1450, %v1370
      %v1483 = vsel %vm954, %v1451, %v1372
      %v1484 = vsel %vm954, %v1452, %v1374
      %v1485 = vsel %vm954, %v1453, %v1376
      %v1486 = vsel %vm954, %v1454, %v1378
      %v1487 = vsel %vm954, %v1455, %v1380
      %v1488 = vsel %vm954, %v1456, %v1382
      %v1489 = vsel %vm954, %v1457, %v1384
      %v1490 = vsel %vm954, %v1458, %v1386
      %v1491 = vsel %vm954, %v1459, %v1388
      %v1492 = vsel %vm954, %v1460, %v1390
      %v1493 = vsel %vm954, %v1461, %v1392
      %v1494 = vsel %vm954, %v1462, %v1394
      %v1495 = vsel %vm954, %v1463, %v1396
      %v1496 = vsel %vm954, %v1464, %v1398
      %v1497 = vsel %vm954, %v1465, %v1400
      %v1498 = vsel %vm954, %v1466, %v1402
      %vm1499 = vcmask 97280
      %v1501 = vsel %vm1499, %v1467, 0
      %v1504 = vsel %vm1499, %v1468, 0
      %v1507 = vsel %vm1499, %v1469, 0
      %v1510 = vsel %vm1499, %v1470, 0
      %v1513 = vsel %vm1499, %v1471, 0
      %v1516 = vsel %vm1499, %v1472, 0
      %v1519 = vsel %vm1499, %v1473, 0
      %v1522 = vsel %vm1499, %v1474, 0
      %v1525 = vsel %vm1499, %v1475, 0
      %v1528 = vsel %vm1499, %v1476, 0
      %v1531 = vsel %vm1499, %v1477, 0
      %v1534 = vsel %vm1499, %v1478, 0
      %v1537 = vsel %vm1499, %v1479, 0
      %v1540 = vsel %vm1499, %v1480, 0
      %v1543 = vsel %vm1499, %v1481, 0
      %v1546 = vsel %vm1499, %v1482, 0
      %v1549 = vsel %vm1499, %v1483, 0
      %v1552 = vsel %vm1499, %v1484, 0
      %v1555 = vsel %vm1499, %v1485, 0
      %v1558 = vsel %vm1499, %v1486, 0
      %v1561 = vsel %vm1499, %v1487, 0
      %v1564 = vsel %vm1499, %v1488, 0
      %v1567 = vsel %vm1499, %v1489, 0
      %v1570 = vsel %vm1499, %v1490, 0
      %v1573 = vsel %vm1499, %v1491, 0
      %v1576 = vsel %vm1499, %v1492, 0
      %v1579 = vsel %vm1499, %v1493, 0
      %v1582 = vsel %vm1499, %v1494, 0
      %v1585 = vsel %vm1499, %v1495, 0
      %v1588 = vsel %vm1499, %v1496, 0
      %v1591 = vsel %vm1499, %v1497, 0
      %v1594 = vsel %vm1499, %v1498, 0
      %vm1596 = vcmask 1043456
      %v1598 = vsel %vm1596, %v469, 0
      %1600 = vmatpush.msra.mxu0 0.0
      %1601 = vmatpush.msra.mxu0 0.0
      %1602 = vmatpush.msra.mxu0 0.0
      %1603 = vmatpush.msra.mxu0 0.0
      %1604 = vmatpush.msra.mxu0 0.0
      %1605 = vmatpush.msra.mxu0 0.0
      %1606 = vmatpush.msra.mxu0 0.0
      %1607 = vmatpush.msra.mxu0 0.0
      %1608 = vmatpush.msra.mxu0 0.0
      %1609 = vmatpush.msra.mxu0 0.0
      %1610 = vmatpush.msra.mxu0 0.0
      %1611 = vmatpush.msra.mxu0 0.0
      %1612 = vmatpush.msra.mxu0 0.0
      %1613 = vmatpush.msra.mxu0 0.0
      %1614 = vmatpush.msra.mxu0 %v1598
      %1615 = vmatpush.msra.mxu0 %v468
      %1616 = vmatmul.f32.gmra.mxu0 %v1501
      %v1617 = vpop.f32.mrf.mxu0
      %v1618 = vadd.f32 0.0, %v1617
      %1619 = vmatmul.f32.gmra.mxu0 %v1504
      %v1620 = vpop.f32.mrf.mxu0
      %v1621 = vadd.f32 0.0, %v1620
      %1622 = vmatmul.f32.gmra.mxu0 %v1507
      %v1623 = vpop.f32.mrf.mxu0
      %v1624 = vadd.f32 0.0, %v1623
      %1625 = vmatmul.f32.gmra.mxu0 %v1510
      %v1626 = vpop.f32.mrf.mxu0
      %v1627 = vadd.f32 0.0, %v1626
      %1628 = vmatmul.f32.gmra.mxu0 %v1513
      %v1629 = vpop.f32.mrf.mxu0
      %v1630 = vadd.f32 0.0, %v1629
      %1631 = vmatmul.f32.gmra.mxu0 %v1516
      %v1632 = vpop.f32.mrf.mxu0
      %v1633 = vadd.f32 0.0, %v1632
      %1634 = vmatmul.f32.gmra.mxu0 %v1519
      %v1635 = vpop.f32.mrf.mxu0
      %v1636 = vadd.f32 0.0, %v1635
      %1637 = vmatmul.f32.gmra.mxu0 %v1522
      %v1638 = vpop.f32.mrf.mxu0
      %v1639 = vadd.f32 0.0, %v1638
      %1640 = vmatmul.f32.gmra.mxu0 %v1525
      %v1641 = vpop.f32.mrf.mxu0
      %v1642 = vadd.f32 0.0, %v1641
      %1643 = vmatmul.f32.gmra.mxu0 %v1528
      %v1644 = vpop.f32.mrf.mxu0
      %v1645 = vadd.f32 0.0, %v1644
      %1646 = vmatmul.f32.gmra.mxu0 %v1531
      %v1647 = vpop.f32.mrf.mxu0
      %v1648 = vadd.f32 0.0, %v1647
      %1649 = vmatmul.f32.gmra.mxu0 %v1534
      %v1650 = vpop.f32.mrf.mxu0
      %v1651 = vadd.f32 0.0, %v1650
      %1652 = vmatmul.f32.gmra.mxu0 %v1537
      %v1653 = vpop.f32.mrf.mxu0
      %v1654 = vadd.f32 0.0, %v1653
      %1655 = vmatmul.f32.gmra.mxu0 %v1540
      %v1656 = vpop.f32.mrf.mxu0
      %v1657 = vadd.f32 0.0, %v1656
      %1658 = vmatmul.f32.gmra.mxu0 %v1543
      %v1659 = vpop.f32.mrf.mxu0
      %v1660 = vadd.f32 0.0, %v1659
      %1661 = vmatmul.f32.gmra.mxu0 %v1546
      %v1662 = vpop.f32.mrf.mxu0
      %v1663 = vadd.f32 0.0, %v1662
      %1664 = vmatmul.f32.gmra.mxu0 %v1549
      %v1665 = vpop.f32.mrf.mxu0
      %v1666 = vadd.f32 0.0, %v1665
      %1667 = vmatmul.f32.gmra.mxu0 %v1552
      %v1668 = vpop.f32.mrf.mxu0
      %v1669 = vadd.f32 0.0, %v1668
      %1670 = vmatmul.f32.gmra.mxu0 %v1555
      %v1671 = vpop.f32.mrf.mxu0
      %v1672 = vadd.f32 0.0, %v1671
      %1673 = vmatmul.f32.gmra.mxu0 %v1558
      %v1674 = vpop.f32.mrf.mxu0
      %v1675 = vadd.f32 0.0, %v1674
      %1676 = vmatmul.f32.gmra.mxu0 %v1561
      %v1677 = vpop.f32.mrf.mxu0
      %v1678 = vadd.f32 0.0, %v1677
      %1679 = vmatmul.f32.gmra.mxu0 %v1564
      %v1680 = vpop.f32.mrf.mxu0
      %v1681 = vadd.f32 0.0, %v1680
      %1682 = vmatmul.f32.gmra.mxu0 %v1567
      %v1683 = vpop.f32.mrf.mxu0
      %v1684 = vadd.f32 0.0, %v1683
      %1685 = vmatmul.f32.gmra.mxu0 %v1570
      %v1686 = vpop.f32.mrf.mxu0
      %v1687 = vadd.f32 0.0, %v1686
      %1688 = vmatmul.f32.gmra.mxu0 %v1573
      %v1689 = vpop.f32.mrf.mxu0
      %v1690 = vadd.f32 0.0, %v1689
      %1691 = vmatmul.f32.gmra.mxu0 %v1576
      %v1692 = vpop.f32.mrf.mxu0
      %v1693 = vadd.f32 0.0, %v1692
      %1694 = vmatmul.f32.gmra.mxu0 %v1579
      %v1695 = vpop.f32.mrf.mxu0
      %v1696 = vadd.f32 0.0, %v1695
      %1697 = vmatmul.f32.gmra.mxu0 %v1582
      %v1698 = vpop.f32.mrf.mxu0
      %v1699 = vadd.f32 0.0, %v1698
      %1700 = vmatmul.f32.gmra.mxu0 %v1585
      %v1701 = vpop.f32.mrf.mxu0
      %v1702 = vadd.f32 0.0, %v1701
      %1703 = vmatmul.f32.gmra.mxu0 %v1588
      %v1704 = vpop.f32.mrf.mxu0
      %v1705 = vadd.f32 0.0, %v1704
      %1706 = vmatmul.f32.gmra.mxu0 %v1591
      %v1707 = vpop.f32.mrf.mxu0
      %v1708 = vadd.f32 0.0, %v1707
      %1709 = vmatmul.f32.gmra.mxu0 %v1594
      %v1710 = vpop.f32.mrf.mxu0
      %v1711 = vadd.f32 0.0, %v1710
      %1712 = vdwg.mxu0
      %v1714 = vsel %vm1499, %v955, 0
      %v1717 = vsel %vm1499, %v956, 0
      %v1720 = vsel %vm1499, %v957, 0
      %v1723 = vsel %vm1499, %v958, 0
      %v1726 = vsel %vm1499, %v959, 0
      %v1729 = vsel %vm1499, %v960, 0
      %v1732 = vsel %vm1499, %v961, 0
      %v1735 = vsel %vm1499, %v962, 0
      %v1738 = vsel %vm1499, %v963, 0
      %v1741 = vsel %vm1499, %v964, 0
      %v1744 = vsel %vm1499, %v965, 0
      %v1747 = vsel %vm1499, %v966, 0
      %v1750 = vsel %vm1499, %v967, 0
      %v1753 = vsel %vm1499, %v968, 0
      %v1756 = vsel %vm1499, %v969, 0
      %v1759 = vsel %vm1499, %v970, 0
      %v1762 = vsel %vm1499, %v971, 0
      %v1765 = vsel %vm1499, %v972, 0
      %v1768 = vsel %vm1499, %v973, 0
      %v1771 = vsel %vm1499, %v974, 0
      %v1774 = vsel %vm1499, %v975, 0
      %v1777 = vsel %vm1499, %v976, 0
      %v1780 = vsel %vm1499, %v977, 0
      %v1783 = vsel %vm1499, %v978, 0
      %v1786 = vsel %vm1499, %v979, 0
      %v1789 = vsel %vm1499, %v980, 0
      %v1792 = vsel %vm1499, %v981, 0
      %v1795 = vsel %vm1499, %v982, 0
      %v1798 = vsel %vm1499, %v983, 0
      %v1801 = vsel %vm1499, %v984, 0
      %v1804 = vsel %vm1499, %v985, 0
      %v1807 = vsel %vm1499, %v986, 0
      %v1810 = vsel %vm1596, %v467, 0
      %1812 = vmatpush.msra.mxu0 0.0
      %1813 = vmatpush.msra.mxu0 0.0
      %1814 = vmatpush.msra.mxu0 0.0
      %1815 = vmatpush.msra.mxu0 0.0
      %1816 = vmatpush.msra.mxu0 0.0
      %1817 = vmatpush.msra.mxu0 0.0
      %1818 = vmatpush.msra.mxu0 0.0
      %1819 = vmatpush.msra.mxu0 0.0
      %1820 = vmatpush.msra.mxu0 0.0
      %1821 = vmatpush.msra.mxu0 0.0
      %1822 = vmatpush.msra.mxu0 0.0
      %1823 = vmatpush.msra.mxu0 0.0
      %1824 = vmatpush.msra.mxu0 0.0
      %1825 = vmatpush.msra.mxu0 0.0
      %1826 = vmatpush.msra.mxu0 %v1810
      %1827 = vmatpush.msra.mxu0 %v466
      %1828 = vmatmul.f32.gmra.mxu0 %v1714
      %v1829 = vpop.f32.mrf.mxu0
      %v1830 = vadd.f32 %v1618, %v1829
      %1831 = vmatmul.f32.gmra.mxu0 %v1717
      %v1832 = vpop.f32.mrf.mxu0
      %v1833 = vadd.f32 %v1621, %v1832
      %1834 = vmatmul.f32.gmra.mxu0 %v1720
      %v1835 = vpop.f32.mrf.mxu0
      %v1836 = vadd.f32 %v1624, %v1835
      %1837 = vmatmul.f32.gmra.mxu0 %v1723
      %v1838 = vpop.f32.mrf.mxu0
      %v1839 = vadd.f32 %v1627, %v1838
      %1840 = vmatmul.f32.gmra.mxu0 %v1726
      %v1841 = vpop.f32.mrf.mxu0
      %v1842 = vadd.f32 %v1630, %v1841
      %1843 = vmatmul.f32.gmra.mxu0 %v1729
      %v1844 = vpop.f32.mrf.mxu0
      %v1845 = vadd.f32 %v1633, %v1844
      %1846 = vmatmul.f32.gmra.mxu0 %v1732
      %v1847 = vpop.f32.mrf.mxu0
      %v1848 = vadd.f32 %v1636, %v1847
      %1849 = vmatmul.f32.gmra.mxu0 %v1735
      %v1850 = vpop.f32.mrf.mxu0
      %v1851 = vadd.f32 %v1639, %v1850
      %1852 = vmatmul.f32.gmra.mxu0 %v1738
      %v1853 = vpop.f32.mrf.mxu0
      %v1854 = vadd.f32 %v1642, %v1853
      %1855 = vmatmul.f32.gmra.mxu0 %v1741
      %v1856 = vpop.f32.mrf.mxu0
      %v1857 = vadd.f32 %v1645, %v1856
      %1858 = vmatmul.f32.gmra.mxu0 %v1744
      %v1859 = vpop.f32.mrf.mxu0
      %v1860 = vadd.f32 %v1648, %v1859
      %1861 = vmatmul.f32.gmra.mxu0 %v1747
      %v1862 = vpop.f32.mrf.mxu0
      %v1863 = vadd.f32 %v1651, %v1862
      %1864 = vmatmul.f32.gmra.mxu0 %v1750
      %v1865 = vpop.f32.mrf.mxu0
      %v1866 = vadd.f32 %v1654, %v1865
      %1867 = vmatmul.f32.gmra.mxu0 %v1753
      %v1868 = vpop.f32.mrf.mxu0
      %v1869 = vadd.f32 %v1657, %v1868
      %1870 = vmatmul.f32.gmra.mxu0 %v1756
      %v1871 = vpop.f32.mrf.mxu0
      %v1872 = vadd.f32 %v1660, %v1871
      %1873 = vmatmul.f32.gmra.mxu0 %v1759
      %v1874 = vpop.f32.mrf.mxu0
      %v1875 = vadd.f32 %v1663, %v1874
      %1876 = vmatmul.f32.gmra.mxu0 %v1762
      %v1877 = vpop.f32.mrf.mxu0
      %v1878 = vadd.f32 %v1666, %v1877
      %1879 = vmatmul.f32.gmra.mxu0 %v1765
      %v1880 = vpop.f32.mrf.mxu0
      %v1881 = vadd.f32 %v1669, %v1880
      %1882 = vmatmul.f32.gmra.mxu0 %v1768
      %v1883 = vpop.f32.mrf.mxu0
      %v1884 = vadd.f32 %v1672, %v1883
      %1885 = vmatmul.f32.gmra.mxu0 %v1771
      %v1886 = vpop.f32.mrf.mxu0
      %v1887 = vadd.f32 %v1675, %v1886
      %1888 = vmatmul.f32.gmra.mxu0 %v1774
      %v1889 = vpop.f32.mrf.mxu0
      %v1890 = vadd.f32 %v1678, %v1889
      %1891 = vmatmul.f32.gmra.mxu0 %v1777
      %v1892 = vpop.f32.mrf.mxu0
      %v1893 = vadd.f32 %v1681, %v1892
      %1894 = vmatmul.f32.gmra.mxu0 %v1780
      %v1895 = vpop.f32.mrf.mxu0
      %v1896 = vadd.f32 %v1684, %v1895
      %1897 = vmatmul.f32.gmra.mxu0 %v1783
      %v1898 = vpop.f32.mrf.mxu0
      %v1899 = vadd.f32 %v1687, %v1898
      %1900 = vmatmul.f32.gmra.mxu0 %v1786
      %v1901 = vpop.f32.mrf.mxu0
      %v1902 = vadd.f32 %v1690, %v1901
      %1903 = vmatmul.f32.gmra.mxu0 %v1789
      %v1904 = vpop.f32.mrf.mxu0
      %v1905 = vadd.f32 %v1693, %v1904
      %1906 = vmatmul.f32.gmra.mxu0 %v1792
      %v1907 = vpop.f32.mrf.mxu0
      %v1908 = vadd.f32 %v1696, %v1907
      %1909 = vmatmul.f32.gmra.mxu0 %v1795
      %v1910 = vpop.f32.mrf.mxu0
      %v1911 = vadd.f32 %v1699, %v1910
      %1912 = vmatmul.f32.gmra.mxu0 %v1798
      %v1913 = vpop.f32.mrf.mxu0
      %v1914 = vadd.f32 %v1702, %v1913
      %1915 = vmatmul.f32.gmra.mxu0 %v1801
      %v1916 = vpop.f32.mrf.mxu0
      %v1917 = vadd.f32 %v1705, %v1916
      %1918 = vmatmul.f32.gmra.mxu0 %v1804
      %v1919 = vpop.f32.mrf.mxu0
      %v1920 = vadd.f32 %v1708, %v1919
      %1921 = vmatmul.f32.gmra.mxu0 %v1807
      %v1922 = vpop.f32.mrf.mxu0
      %v1923 = vadd.f32 %v1711, %v1922
      %1924 = vdwg.mxu0
      %s1925 = scalar_lea.vmem [#allocation2], 48
      %v1926 = vld [vmem:[%s1925] sm:$0xff]
      %v1927 = vld [vmem:[%s1925 + $0x8] sm:$0xff]
      %v1928 = vld [vmem:[%s1925 + $0x10] sm:$0x3]
      %v1929 = vld [vmem:[%s1925 + $0x18] sm:$0xff]
      %v1930 = vld [vmem:[%s1925 + $0x20] sm:$0xff]
      %v1931 = vld [vmem:[%s1925 + $0x28] sm:$0x3]
      %v1932 = vld [vmem:[%s1925 + $0x30] sm:$0xff]
      %v1933 = vld [vmem:[%s1925 + $0x38] sm:$0xff]
      %v1934 = vld [vmem:[%s1925 + $0x40] sm:$0x3]
      %v1935 = vld [vmem:[%s1925 + $0x48] sm:$0xff]
      %v1936 = vld [vmem:[%s1925 + $0x50] sm:$0xff]
      %v1937 = vld [vmem:[%s1925 + $0x58] sm:$0x3]
      %v1938 = vld [vmem:[%s1925 + $0x60] sm:$0xff]
      %v1939 = vld [vmem:[%s1925 + $0x68] sm:$0xff]
      %v1940 = vld [vmem:[%s1925 + $0x70] sm:$0x3]
      %v1941 = vld [vmem:[%s1925 + $0x78] sm:$0xff]
      %v1942 = vld [vmem:[%s1925 + $0x80] sm:$0xff]
      %v1943 = vld [vmem:[%s1925 + $0x88] sm:$0x3]
      %v1944 = vld [vmem:[%s1925 + $0x90] sm:$0xff]
      %v1945 = vld [vmem:[%s1925 + $0x98] sm:$0xff]
      %v1946 = vld [vmem:[%s1925 + $0xa0] sm:$0x3]
      %v1947 = vld [vmem:[%s1925 + $0xa8] sm:$0xff]
      %v1948 = vld [vmem:[%s1925 + $0xb0] sm:$0xff]
      %v1949 = vld [vmem:[%s1925 + $0xb8] sm:$0x3]
      %v1950 = vld [vmem:[%s1925 + $0xc0] sm:$0xff]
      %v1951 = vld [vmem:[%s1925 + $0xc8] sm:$0xff]
      %v1952 = vld [vmem:[%s1925 + $0xd0] sm:$0x3]
      %v1953 = vld [vmem:[%s1925 + $0xd8] sm:$0xff]
      %v1954 = vld [vmem:[%s1925 + $0xe0] sm:$0xff]
      %v1955 = vld [vmem:[%s1925 + $0xe8] sm:$0x3]
      %v1956 = vld [vmem:[%s1925 + $0xf0] sm:$0xff]
      %v1957 = vld [vmem:[%s1925 + $0xf8] sm:$0xff]
      %v1958 = vld [vmem:[%s1925 + $0x100] sm:$0x3]
      %v1959 = vld [vmem:[%s1925 + $0x108] sm:$0xff]
      %v1960 = vld [vmem:[%s1925 + $0x110] sm:$0xff]
      %v1961 = vld [vmem:[%s1925 + $0x118] sm:$0x3]
      %v1962 = vld [vmem:[%s1925 + $0x120] sm:$0xff]
      %v1963 = vld [vmem:[%s1925 + $0x128] sm:$0xff]
      %v1964 = vld [vmem:[%s1925 + $0x130] sm:$0x3]
      %v1965 = vld [vmem:[%s1925 + $0x138] sm:$0xff]
      %v1966 = vld [vmem:[%s1925 + $0x140] sm:$0xff]
      %v1967 = vld [vmem:[%s1925 + $0x148] sm:$0x3]
      %v1968 = vld [vmem:[%s1925 + $0x150] sm:$0xff]
      %v1969 = vld [vmem:[%s1925 + $0x158] sm:$0xff]
      %v1970 = vld [vmem:[%s1925 + $0x160] sm:$0x3]
      %v1971 = vld [vmem:[%s1925 + $0x168] sm:$0xff]
      %v1972 = vld [vmem:[%s1925 + $0x170] sm:$0xff]
      %v1973 = vld [vmem:[%s1925 + $0x178] sm:$0x3]
      %v2022 = vrot.slane %v1926, 1
      %v2023 = vrot.slane %v1927, 1
      %v2024 = vsel %vm568, %v2022, %v2023
      %v2025 = vrot.slane %v1928, 1
      %v2026 = vsel %vm568, %v2023, %v2025
      %v2027 = vrot.slane %v1929, 1
      %v2028 = vrot.slane %v1930, 1
      %v2029 = vsel %vm568, %v2027, %v2028
      %v2030 = vrot.slane %v1931, 1
      %v2031 = vsel %vm568, %v2028, %v2030
      %v2032 = vrot.slane %v1932, 1
      %v2033 = vrot.slane %v1933, 1
      %v2034 = vsel %vm568, %v2032, %v2033
      %v2035 = vrot.slane %v1934, 1
      %v2036 = vsel %vm568, %v2033, %v2035
      %v2037 = vrot.slane %v1935, 1
      %v2038 = vrot.slane %v1936, 1
      %v2039 = vsel %vm568, %v2037, %v2038
      %v2040 = vrot.slane %v1937, 1
      %v2041 = vsel %vm568, %v2038, %v2040
      %v2042 = vrot.slane %v1938, 1
      %v2043 = vrot.slane %v1939, 1
      %v2044 = vsel %vm568, %v2042, %v2043
      %v2045 = vrot.slane %v1940, 1
      %v2046 = vsel %vm568, %v2043, %v2045
      %v2047 = vrot.slane %v1941, 1
      %v2048 = vrot.slane %v1942, 1
      %v2049 = vsel %vm568, %v2047, %v2048
      %v2050 = vrot.slane %v1943, 1
      %v2051 = vsel %vm568, %v2048, %v2050
      %v2052 = vrot.slane %v1944, 1
      %v2053 = vrot.slane %v1945, 1
      %v2054 = vsel %vm568, %v2052, %v2053
      %v2055 = vrot.slane %v1946, 1
      %v2056 = vsel %vm568, %v2053, %v2055
      %v2057 = vrot.slane %v1947, 1
      %v2058 = vrot.slane %v1948, 1
      %v2059 = vsel %vm568, %v2057, %v2058
      %v2060 = vrot.slane %v1949, 1
      %v2061 = vsel %vm568, %v2058, %v2060
      %v2062 = vrot.slane %v1950, 1
      %v2063 = vrot.slane %v1951, 1
      %v2064 = vsel %vm568, %v2062, %v2063
      %v2065 = vrot.slane %v1952, 1
      %v2066 = vsel %vm568, %v2063, %v2065
      %v2067 = vrot.slane %v1953, 1
      %v2068 = vrot.slane %v1954, 1
      %v2069 = vsel %vm568, %v2067, %v2068
      %v2070 = vrot.slane %v1955, 1
      %v2071 = vsel %vm568, %v2068, %v2070
      %v2072 = vrot.slane %v1956, 1
      %v2073 = vrot.slane %v1957, 1
      %v2074 = vsel %vm568, %v2072, %v2073
      %v2075 = vrot.slane %v1958, 1
      %v2076 = vsel %vm568, %v2073, %v2075
      %v2077 = vrot.slane %v1959, 1
      %v2078 = vrot.slane %v1960, 1
      %v2079 = vsel %vm568, %v2077, %v2078
      %v2080 = vrot.slane %v1961, 1
      %v2081 = vsel %vm568, %v2078, %v2080
      %v2082 = vrot.slane %v1962, 1
      %v2083 = vrot.slane %v1963, 1
      %v2084 = vsel %vm568, %v2082, %v2083
      %v2085 = vrot.slane %v1964, 1
      %v2086 = vsel %vm568, %v2083, %v2085
      %v2087 = vrot.slane %v1965, 1
      %v2088 = vrot.slane %v1966, 1
      %v2089 = vsel %vm568, %v2087, %v2088
      %v2090 = vrot.slane %v1967, 1
      %v2091 = vsel %vm568, %v2088, %v2090
      %v2092 = vrot.slane %v1968, 1
      %v2093 = vrot.slane %v1969, 1
      %v2094 = vsel %vm568, %v2092, %v2093
      %v2095 = vrot.slane %v1970, 1
      %v2096 = vsel %vm568, %v2093, %v2095
      %v2097 = vrot.slane %v1971, 1
      %v2098 = vrot.slane %v1972, 1
      %v2099 = vsel %vm568, %v2097, %v2098
      %v2100 = vrot.slane %v1973, 1
      %v2101 = vsel %vm568, %v2098, %v2100
      %2102 = vrot.lane.b32.xlu0 %v2024, 4
      %v2103 = vpop.permute.xlu0 %2102
      %2104 = vrot.lane.b32.xlu0 %v2026, 4
      %v2105 = vpop.permute.xlu0 %2104
      %2106 = vrot.lane.b32.xlu0 %v2029, 4
      %v2107 = vpop.permute.xlu0 %2106
      %2108 = vrot.lane.b32.xlu0 %v2031, 4
      %v2109 = vpop.permute.xlu0 %2108
      %2110 = vrot.lane.b32.xlu0 %v2034, 4
      %v2111 = vpop.permute.xlu0 %2110
      %2112 = vrot.lane.b32.xlu0 %v2036, 4
      %v2113 = vpop.permute.xlu0 %2112
      %2114 = vrot.lane.b32.xlu0 %v2039, 4
      %v2115 = vpop.permute.xlu0 %2114
      %2116 = vrot.lane.b32.xlu0 %v2041, 4
      %v2117 = vpop.permute.xlu0 %2116
      %2118 = vrot.lane.b32.xlu0 %v2044, 4
      %v2119 = vpop.permute.xlu0 %2118
      %2120 = vrot.lane.b32.xlu0 %v2046, 4
      %v2121 = vpop.permute.xlu0 %2120
      %2122 = vrot.lane.b32.xlu0 %v2049, 4
      %v2123 = vpop.permute.xlu0 %2122
      %2124 = vrot.lane.b32.xlu0 %v2051, 4
      %v2125 = vpop.permute.xlu0 %2124
      %2126 = vrot.lane.b32.xlu0 %v2054, 4
      %v2127 = vpop.permute.xlu0 %2126
      %2128 = vrot.lane.b32.xlu0 %v2056, 4
      %v2129 = vpop.permute.xlu0 %2128
      %2130 = vrot.lane.b32.xlu0 %v2059, 4
      %v2131 = vpop.permute.xlu0 %2130
      %2132 = vrot.lane.b32.xlu0 %v2061, 4
      %v2133 = vpop.permute.xlu0 %2132
      %2134 = vrot.lane.b32.xlu0 %v2064, 4
      %v2135 = vpop.permute.xlu0 %2134
      %2136 = vrot.lane.b32.xlu0 %v2066, 4
      %v2137 = vpop.permute.xlu0 %2136
      %2138 = vrot.lane.b32.xlu0 %v2069, 4
      %v2139 = vpop.permute.xlu0 %2138
      %2140 = vrot.lane.b32.xlu0 %v2071, 4
      %v2141 = vpop.permute.xlu0 %2140
      %2142 = vrot.lane.b32.xlu0 %v2074, 4
      %v2143 = vpop.permute.xlu0 %2142
      %2144 = vrot.lane.b32.xlu0 %v2076, 4
      %v2145 = vpop.permute.xlu0 %2144
      %2146 = vrot.lane.b32.xlu0 %v2079, 4
      %v2147 = vpop.permute.xlu0 %2146
      %2148 = vrot.lane.b32.xlu0 %v2081, 4
      %v2149 = vpop.permute.xlu0 %2148
      %2150 = vrot.lane.b32.xlu0 %v2084, 4
      %v2151 = vpop.permute.xlu0 %2150
      %2152 = vrot.lane.b32.xlu0 %v2086, 4
      %v2153 = vpop.permute.xlu0 %2152
      %2154 = vrot.lane.b32.xlu0 %v2089, 4
      %v2155 = vpop.permute.xlu0 %2154
      %2156 = vrot.lane.b32.xlu0 %v2091, 4
      %v2157 = vpop.permute.xlu0 %2156
      %2158 = vrot.lane.b32.xlu0 %v2094, 4
      %v2159 = vpop.permute.xlu0 %2158
      %2160 = vrot.lane.b32.xlu0 %v2096, 4
      %v2161 = vpop.permute.xlu0 %2160
      %2162 = vrot.lane.b32.xlu0 %v2099, 4
      %v2163 = vpop.permute.xlu0 %2162
      %2164 = vrot.lane.b32.xlu0 %v2101, 4
      %v2165 = vpop.permute.xlu0 %2164
      %v2198 = vrot.slane %v1926, 2
      %v2199 = vrot.slane %v1927, 2
      %v2200 = vsel %vm745, %v2198, %v2199
      %v2201 = vrot.slane %v1928, 2
      %v2202 = vsel %vm745, %v2199, %v2201
      %v2203 = vrot.slane %v1929, 2
      %v2204 = vrot.slane %v1930, 2
      %v2205 = vsel %vm745, %v2203, %v2204
      %v2206 = vrot.slane %v1931, 2
      %v2207 = vsel %vm745, %v2204, %v2206
      %v2208 = vrot.slane %v1932, 2
      %v2209 = vrot.slane %v1933, 2
      %v2210 = vsel %vm745, %v2208, %v2209
      %v2211 = vrot.slane %v1934, 2
      %v2212 = vsel %vm745, %v2209, %v2211
      %v2213 = vrot.slane %v1935, 2
      %v2214 = vrot.slane %v1936, 2
      %v2215 = vsel %vm745, %v2213, %v2214
      %v2216 = vrot.slane %v1937, 2
      %v2217 = vsel %vm745, %v2214, %v2216
      %v2218 = vrot.slane %v1938, 2
      %v2219 = vrot.slane %v1939, 2
      %v2220 = vsel %vm745, %v2218, %v2219
      %v2221 = vrot.slane %v1940, 2
      %v2222 = vsel %vm745, %v2219, %v2221
      %v2223 = vrot.slane %v1941, 2
      %v2224 = vrot.slane %v1942, 2
      %v2225 = vsel %vm745, %v2223, %v2224
      %v2226 = vrot.slane %v1943, 2
      %v2227 = vsel %vm745, %v2224, %v2226
      %v2228 = vrot.slane %v1944, 2
      %v2229 = vrot.slane %v1945, 2
      %v2230 = vsel %vm745, %v2228, %v2229
      %v2231 = vrot.slane %v1946, 2
      %v2232 = vsel %vm745, %v2229, %v2231
      %v2233 = vrot.slane %v1947, 2
      %v2234 = vrot.slane %v1948, 2
      %v2235 = vsel %vm745, %v2233, %v2234
      %v2236 = vrot.slane %v1949, 2
      %v2237 = vsel %vm745, %v2234, %v2236
      %v2238 = vrot.slane %v1950, 2
      %v2239 = vrot.slane %v1951, 2
      %v2240 = vsel %vm745, %v2238, %v2239
      %v2241 = vrot.slane %v1952, 2
      %v2242 = vsel %vm745, %v2239, %v2241
      %v2243 = vrot.slane %v1953, 2
      %v2244 = vrot.slane %v1954, 2
      %v2245 = vsel %vm745, %v2243, %v2244
      %v2246 = vrot.slane %v1955, 2
      %v2247 = vsel %vm745, %v2244, %v2246
      %v2248 = vrot.slane %v1956, 2
      %v2249 = vrot.slane %v1957, 2
      %v2250 = vsel %vm745, %v2248, %v2249
      %v2251 = vrot.slane %v1958, 2
      %v2252 = vsel %vm745, %v2249, %v2251
      %v2253 = vrot.slane %v1959, 2
      %v2254 = vrot.slane %v1960, 2
      %v2255 = vsel %vm745, %v2253, %v2254
      %v2256 = vrot.slane %v1961, 2
      %v2257 = vsel %vm745, %v2254, %v2256
      %v2258 = vrot.slane %v1962, 2
      %v2259 = vrot.slane %v1963, 2
      %v2260 = vsel %vm745, %v2258, %v2259
      %v2261 = vrot.slane %v1964, 2
      %v2262 = vsel %vm745, %v2259, %v2261
      %v2263 = vrot.slane %v1965, 2
      %v2264 = vrot.slane %v1966, 2
      %v2265 = vsel %vm745, %v2263, %v2264
      %v2266 = vrot.slane %v1967, 2
      %v2267 = vsel %vm745, %v2264, %v2266
      %v2268 = vrot.slane %v1968, 2
      %v2269 = vrot.slane %v1969, 2
      %v2270 = vsel %vm745, %v2268, %v2269
      %v2271 = vrot.slane %v1970, 2
      %v2272 = vsel %vm745, %v2269, %v2271
      %v2273 = vrot.slane %v1971, 2
      %v2274 = vrot.slane %v1972, 2
      %v2275 = vsel %vm745, %v2273, %v2274
      %v2276 = vrot.slane %v1973, 2
      %v2277 = vsel %vm745, %v2274, %v2276
      %2278 = vrot.lane.b32.xlu0 %v2200, 8
      %v2279 = vpop.permute.xlu0 %2278
      %2280 = vrot.lane.b32.xlu0 %v2202, 8
      %v2281 = vpop.permute.xlu0 %2280
      %2282 = vrot.lane.b32.xlu0 %v2205, 8
      %v2283 = vpop.permute.xlu0 %2282
      %2284 = vrot.lane.b32.xlu0 %v2207, 8
      %v2285 = vpop.permute.xlu0 %2284
      %2286 = vrot.lane.b32.xlu0 %v2210, 8
      %v2287 = vpop.permute.xlu0 %2286
      %2288 = vrot.lane.b32.xlu0 %v2212, 8
      %v2289 = vpop.permute.xlu0 %2288
      %2290 = vrot.lane.b32.xlu0 %v2215, 8
      %v2291 = vpop.permute.xlu0 %2290
      %2292 = vrot.lane.b32.xlu0 %v2217, 8
      %v2293 = vpop.permute.xlu0 %2292
      %2294 = vrot.lane.b32.xlu0 %v2220, 8
      %v2295 = vpop.permute.xlu0 %2294
      %2296 = vrot.lane.b32.xlu0 %v2222, 8
      %v2297 = vpop.permute.xlu0 %2296
      %2298 = vrot.lane.b32.xlu0 %v2225, 8
      %v2299 = vpop.permute.xlu0 %2298
      %2300 = vrot.lane.b32.xlu0 %v2227, 8
      %v2301 = vpop.permute.xlu0 %2300
      %2302 = vrot.lane.b32.xlu0 %v2230, 8
      %v2303 = vpop.permute.xlu0 %2302
      %2304 = vrot.lane.b32.xlu0 %v2232, 8
      %v2305 = vpop.permute.xlu0 %2304
      %2306 = vrot.lane.b32.xlu0 %v2235, 8
      %v2307 = vpop.permute.xlu0 %2306
      %2308 = vrot.lane.b32.xlu0 %v2237, 8
      %v2309 = vpop.permute.xlu0 %2308
      %2310 = vrot.lane.b32.xlu0 %v2240, 8
      %v2311 = vpop.permute.xlu0 %2310
      %2312 = vrot.lane.b32.xlu0 %v2242, 8
      %v2313 = vpop.permute.xlu0 %2312
      %2314 = vrot.lane.b32.xlu0 %v2245, 8
      %v2315 = vpop.permute.xlu0 %2314
      %2316 = vrot.lane.b32.xlu0 %v2247, 8
      %v2317 = vpop.permute.xlu0 %2316
      %2318 = vrot.lane.b32.xlu0 %v2250, 8
      %v2319 = vpop.permute.xlu0 %2318
      %2320 = vrot.lane.b32.xlu0 %v2252, 8
      %v2321 = vpop.permute.xlu0 %2320
      %2322 = vrot.lane.b32.xlu0 %v2255, 8
      %v2323 = vpop.permute.xlu0 %2322
      %2324 = vrot.lane.b32.xlu0 %v2257, 8
      %v2325 = vpop.permute.xlu0 %2324
      %2326 = vrot.lane.b32.xlu0 %v2260, 8
      %v2327 = vpop.permute.xlu0 %2326
      %2328 = vrot.lane.b32.xlu0 %v2262, 8
      %v2329 = vpop.permute.xlu0 %2328
      %2330 = vrot.lane.b32.xlu0 %v2265, 8
      %v2331 = vpop.permute.xlu0 %2330
      %2332 = vrot.lane.b32.xlu0 %v2267, 8
      %v2333 = vpop.permute.xlu0 %2332
      %2334 = vrot.lane.b32.xlu0 %v2270, 8
      %v2335 = vpop.permute.xlu0 %2334
      %2336 = vrot.lane.b32.xlu0 %v2272, 8
      %v2337 = vpop.permute.xlu0 %2336
      %2338 = vrot.lane.b32.xlu0 %v2275, 8
      %v2339 = vpop.permute.xlu0 %2338
      %2340 = vrot.lane.b32.xlu0 %v2277, 8
      %v2341 = vpop.permute.xlu0 %2340
      %v2374 = vsel %vm433, %v1926, %v2103
      %v2375 = vsel %vm433, %v1927, %v2105
      %v2376 = vsel %vm433, %v1929, %v2107
      %v2377 = vsel %vm433, %v1930, %v2109
      %v2378 = vsel %vm433, %v1932, %v2111
      %v2379 = vsel %vm433, %v1933, %v2113
      %v2380 = vsel %vm433, %v1935, %v2115
      %v2381 = vsel %vm433, %v1936, %v2117
      %v2382 = vsel %vm433, %v1938, %v2119
      %v2383 = vsel %vm433, %v1939, %v2121
      %v2384 = vsel %vm433, %v1941, %v2123
      %v2385 = vsel %vm433, %v1942, %v2125
      %v2386 = vsel %vm433, %v1944, %v2127
      %v2387 = vsel %vm433, %v1945, %v2129
      %v2388 = vsel %vm433, %v1947, %v2131
      %v2389 = vsel %vm433, %v1948, %v2133
      %v2390 = vsel %vm433, %v1950, %v2135
      %v2391 = vsel %vm433, %v1951, %v2137
      %v2392 = vsel %vm433, %v1953, %v2139
      %v2393 = vsel %vm433, %v1954, %v2141
      %v2394 = vsel %vm433, %v1956, %v2143
      %v2395 = vsel %vm433, %v1957, %v2145
      %v2396 = vsel %vm433, %v1959, %v2147
      %v2397 = vsel %vm433, %v1960, %v2149
      %v2398 = vsel %vm433, %v1962, %v2151
      %v2399 = vsel %vm433, %v1963, %v2153
      %v2400 = vsel %vm433, %v1965, %v2155
      %v2401 = vsel %vm433, %v1966, %v2157
      %v2402 = vsel %vm433, %v1968, %v2159
      %v2403 = vsel %vm433, %v1969, %v2161
      %v2404 = vsel %vm433, %v1971, %v2163
      %v2405 = vsel %vm433, %v1972, %v2165
      %v2406 = vsel %vm954, %v2374, %v2279
      %v2407 = vsel %vm954, %v2375, %v2281
      %v2408 = vsel %vm954, %v2376, %v2283
      %v2409 = vsel %vm954, %v2377, %v2285
      %v2410 = vsel %vm954, %v2378, %v2287
      %v2411 = vsel %vm954, %v2379, %v2289
      %v2412 = vsel %vm954, %v2380, %v2291
      %v2413 = vsel %vm954, %v2381, %v2293
      %v2414 = vsel %vm954, %v2382, %v2295
      %v2415 = vsel %vm954, %v2383, %v2297
      %v2416 = vsel %vm954, %v2384, %v2299
      %v2417 = vsel %vm954, %v2385, %v2301
      %v2418 = vsel %vm954, %v2386, %v2303
      %v2419 = vsel %vm954, %v2387, %v2305
      %v2420 = vsel %vm954, %v2388, %v2307
      %v2421 = vsel %vm954, %v2389, %v2309
      %v2422 = vsel %vm954, %v2390, %v2311
      %v2423 = vsel %vm954, %v2391, %v2313
      %v2424 = vsel %vm954, %v2392, %v2315
      %v2425 = vsel %vm954, %v2393, %v2317
      %v2426 = vsel %vm954, %v2394, %v2319
      %v2427 = vsel %vm954, %v2395, %v2321
      %v2428 = vsel %vm954, %v2396, %v2323
      %v2429 = vsel %vm954, %v2397, %v2325
      %v2430 = vsel %vm954, %v2398, %v2327
      %v2431 = vsel %vm954, %v2399, %v2329
      %v2432 = vsel %vm954, %v2400, %v2331
      %v2433 = vsel %vm954, %v2401, %v2333
      %v2434 = vsel %vm954, %v2402, %v2335
      %v2435 = vsel %vm954, %v2403, %v2337
      %v2436 = vsel %vm954, %v2404, %v2339
      %v2437 = vsel %vm954, %v2405, %v2341
      %v2439 = vsel %vm1499, %v2406, 0
      %v2442 = vsel %vm1499, %v2407, 0
      %v2445 = vsel %vm1499, %v2408, 0
      %v2448 = vsel %vm1499, %v2409, 0
      %v2451 = vsel %vm1499, %v2410, 0
      %v2454 = vsel %vm1499, %v2411, 0
      %v2457 = vsel %vm1499, %v2412, 0
      %v2460 = vsel %vm1499, %v2413, 0
      %v2463 = vsel %vm1499, %v2414, 0
      %v2466 = vsel %vm1499, %v2415, 0
      %v2469 = vsel %vm1499, %v2416, 0
      %v2472 = vsel %vm1499, %v2417, 0
      %v2475 = vsel %vm1499, %v2418, 0
      %v2478 = vsel %vm1499, %v2419, 0
      %v2481 = vsel %vm1499, %v2420, 0
      %v2484 = vsel %vm1499, %v2421, 0
      %v2487 = vsel %vm1499, %v2422, 0
      %v2490 = vsel %vm1499, %v2423, 0
      %v2493 = vsel %vm1499, %v2424, 0
      %v2496 = vsel %vm1499, %v2425, 0
      %v2499 = vsel %vm1499, %v2426, 0
      %v2502 = vsel %vm1499, %v2427, 0
      %v2505 = vsel %vm1499, %v2428, 0
      %v2508 = vsel %vm1499, %v2429, 0
      %v2511 = vsel %vm1499, %v2430, 0
      %v2514 = vsel %vm1499, %v2431, 0
      %v2517 = vsel %vm1499, %v2432, 0
      %v2520 = vsel %vm1499, %v2433, 0
      %v2523 = vsel %vm1499, %v2434, 0
      %v2526 = vsel %vm1499, %v2435, 0
      %v2529 = vsel %vm1499, %v2436, 0
      %v2532 = vsel %vm1499, %v2437, 0
      %v2535 = vsel %vm1596, %v471, 0
      %2537 = vmatpush.msra.mxu0 0.0
      %2538 = vmatpush.msra.mxu0 0.0
      %2539 = vmatpush.msra.mxu0 0.0
      %2540 = vmatpush.msra.mxu0 0.0
      %2541 = vmatpush.msra.mxu0 0.0
      %2542 = vmatpush.msra.mxu0 0.0
      %2543 = vmatpush.msra.mxu0 0.0
      %2544 = vmatpush.msra.mxu0 0.0
      %2545 = vmatpush.msra.mxu0 0.0
      %2546 = vmatpush.msra.mxu0 0.0
      %2547 = vmatpush.msra.mxu0 0.0
      %2548 = vmatpush.msra.mxu0 0.0
      %2549 = vmatpush.msra.mxu0 0.0
      %2550 = vmatpush.msra.mxu0 0.0
      %2551 = vmatpush.msra.mxu0 %v2535
      %2552 = vmatpush.msra.mxu0 %v470
      %2553 = vmatmul.f32.gmra.mxu0 %v2439
      %v2554 = vpop.f32.mrf.mxu0
      %v2555 = vadd.f32 0.0, %v2554
      %2556 = vmatmul.f32.gmra.mxu0 %v2442
      %v2557 = vpop.f32.mrf.mxu0
      %v2558 = vadd.f32 0.0, %v2557
      %2559 = vmatmul.f32.gmra.mxu0 %v2445
      %v2560 = vpop.f32.mrf.mxu0
      %v2561 = vadd.f32 0.0, %v2560
      %2562 = vmatmul.f32.gmra.mxu0 %v2448
      %v2563 = vpop.f32.mrf.mxu0
      %v2564 = vadd.f32 0.0, %v2563
      %2565 = vmatmul.f32.gmra.mxu0 %v2451
      %v2566 = vpop.f32.mrf.mxu0
      %v2567 = vadd.f32 0.0, %v2566
      %2568 = vmatmul.f32.gmra.mxu0 %v2454
      %v2569 = vpop.f32.mrf.mxu0
      %v2570 = vadd.f32 0.0, %v2569
      %2571 = vmatmul.f32.gmra.mxu0 %v2457
      %v2572 = vpop.f32.mrf.mxu0
      %v2573 = vadd.f32 0.0, %v2572
      %2574 = vmatmul.f32.gmra.mxu0 %v2460
      %v2575 = vpop.f32.mrf.mxu0
      %v2576 = vadd.f32 0.0, %v2575
      %2577 = vmatmul.f32.gmra.mxu0 %v2463
      %v2578 = vpop.f32.mrf.mxu0
      %v2579 = vadd.f32 0.0, %v2578
      %2580 = vmatmul.f32.gmra.mxu0 %v2466
      %v2581 = vpop.f32.mrf.mxu0
      %v2582 = vadd.f32 0.0, %v2581
      %2583 = vmatmul.f32.gmra.mxu0 %v2469
      %v2584 = vpop.f32.mrf.mxu0
      %v2585 = vadd.f32 0.0, %v2584
      %2586 = vmatmul.f32.gmra.mxu0 %v2472
      %v2587 = vpop.f32.mrf.mxu0
      %v2588 = vadd.f32 0.0, %v2587
      %2589 = vmatmul.f32.gmra.mxu0 %v2475
      %v2590 = vpop.f32.mrf.mxu0
      %v2591 = vadd.f32 0.0, %v2590
      %2592 = vmatmul.f32.gmra.mxu0 %v2478
      %v2593 = vpop.f32.mrf.mxu0
      %v2594 = vadd.f32 0.0, %v2593
      %2595 = vmatmul.f32.gmra.mxu0 %v2481
      %v2596 = vpop.f32.mrf.mxu0
      %v2597 = vadd.f32 0.0, %v2596
      %2598 = vmatmul.f32.gmra.mxu0 %v2484
      %v2599 = vpop.f32.mrf.mxu0
      %v2600 = vadd.f32 0.0, %v2599
      %2601 = vmatmul.f32.gmra.mxu0 %v2487
      %v2602 = vpop.f32.mrf.mxu0
      %v2603 = vadd.f32 0.0, %v2602
      %2604 = vmatmul.f32.gmra.mxu0 %v2490
      %v2605 = vpop.f32.mrf.mxu0
      %v2606 = vadd.f32 0.0, %v2605
      %2607 = vmatmul.f32.gmra.mxu0 %v2493
      %v2608 = vpop.f32.mrf.mxu0
      %v2609 = vadd.f32 0.0, %v2608
      %2610 = vmatmul.f32.gmra.mxu0 %v2496
      %v2611 = vpop.f32.mrf.mxu0
      %v2612 = vadd.f32 0.0, %v2611
      %2613 = vmatmul.f32.gmra.mxu0 %v2499
      %v2614 = vpop.f32.mrf.mxu0
      %v2615 = vadd.f32 0.0, %v2614
      %2616 = vmatmul.f32.gmra.mxu0 %v2502
      %v2617 = vpop.f32.mrf.mxu0
      %v2618 = vadd.f32 0.0, %v2617
      %2619 = vmatmul.f32.gmra.mxu0 %v2505
      %v2620 = vpop.f32.mrf.mxu0
      %v2621 = vadd.f32 0.0, %v2620
      %2622 = vmatmul.f32.gmra.mxu0 %v2508
      %v2623 = vpop.f32.mrf.mxu0
      %v2624 = vadd.f32 0.0, %v2623
      %2625 = vmatmul.f32.gmra.mxu0 %v2511
      %v2626 = vpop.f32.mrf.mxu0
      %v2627 = vadd.f32 0.0, %v2626
      %2628 = vmatmul.f32.gmra.mxu0 %v2514
      %v2629 = vpop.f32.mrf.mxu0
      %v2630 = vadd.f32 0.0, %v2629
      %2631 = vmatmul.f32.gmra.mxu0 %v2517
      %v2632 = vpop.f32.mrf.mxu0
      %v2633 = vadd.f32 0.0, %v2632
      %2634 = vmatmul.f32.gmra.mxu0 %v2520
      %v2635 = vpop.f32.mrf.mxu0
      %v2636 = vadd.f32 0.0, %v2635
      %2637 = vmatmul.f32.gmra.mxu0 %v2523
      %v2638 = vpop.f32.mrf.mxu0
      %v2639 = vadd.f32 0.0, %v2638
      %2640 = vmatmul.f32.gmra.mxu0 %v2526
      %v2641 = vpop.f32.mrf.mxu0
      %v2642 = vadd.f32 0.0, %v2641
      %2643 = vmatmul.f32.gmra.mxu0 %v2529
      %v2644 = vpop.f32.mrf.mxu0
      %v2645 = vadd.f32 0.0, %v2644
      %2646 = vmatmul.f32.gmra.mxu0 %v2532
      %v2647 = vpop.f32.mrf.mxu0
      %v2648 = vadd.f32 0.0, %v2647
      %2649 = vdwg.mxu0
      %v2650 = vadd.f32 %v1830, %v2555
      %v2651 = vadd.f32 %v1833, %v2558
      %v2652 = vadd.f32 %v1836, %v2561
      %v2653 = vadd.f32 %v1839, %v2564
      %v2654 = vadd.f32 %v1842, %v2567
      %v2655 = vadd.f32 %v1845, %v2570
      %v2656 = vadd.f32 %v1848, %v2573
      %v2657 = vadd.f32 %v1851, %v2576
      %v2658 = vadd.f32 %v1854, %v2579
      %v2659 = vadd.f32 %v1857, %v2582
      %v2660 = vadd.f32 %v1860, %v2585
      %v2661 = vadd.f32 %v1863, %v2588
      %v2662 = vadd.f32 %v1866, %v2591
      %v2663 = vadd.f32 %v1869, %v2594
      %v2664 = vadd.f32 %v1872, %v2597
      %v2665 = vadd.f32 %v1875, %v2600
      %v2666 = vadd.f32 %v1878, %v2603
      %v2667 = vadd.f32 %v1881, %v2606
      %v2668 = vadd.f32 %v1884, %v2609
      %v2669 = vadd.f32 %v1887, %v2612
      %v2670 = vadd.f32 %v1890, %v2615
      %v2671 = vadd.f32 %v1893, %v2618
      %v2672 = vadd.f32 %v1896, %v2621
      %v2673 = vadd.f32 %v1899, %v2624
      %v2674 = vadd.f32 %v1902, %v2627
      %v2675 = vadd.f32 %v1905, %v2630
      %v2676 = vadd.f32 %v1908, %v2633
      %v2677 = vadd.f32 %v1911, %v2636
      %v2678 = vadd.f32 %v1914, %v2639
      %v2679 = vadd.f32 %v1917, %v2642
      %v2680 = vadd.f32 %v1920, %v2645
      %v2681 = vadd.f32 %v1923, %v2648
      %2682 = vst.msk [vmem:[%s246] sm:$0xff] %vm433, %v2650
      %2683 = vst.msk [vmem:[%s246 + $0x8] sm:$0xff] %vm433, %v2651
      %2684 = vst.msk [vmem:[%s246 + $0x10] sm:$0xff] %vm433, %v2652
      %2685 = vst.msk [vmem:[%s246 + $0x18] sm:$0xff] %vm433, %v2653
      %2686 = vst.msk [vmem:[%s246 + $0x20] sm:$0xff] %vm433, %v2654
      %2687 = vst.msk [vmem:[%s246 + $0x28] sm:$0xff] %vm433, %v2655
      %2688 = vst.msk [vmem:[%s246 + $0x30] sm:$0xff] %vm433, %v2656
      %2689 = vst.msk [vmem:[%s246 + $0x38] sm:$0xff] %vm433, %v2657
      %2690 = vst.msk [vmem:[%s246 + $0x40] sm:$0xff] %vm433, %v2658
      %2691 = vst.msk [vmem:[%s246 + $0x48] sm:$0xff] %vm433, %v2659
      %2692 = vst.msk [vmem:[%s246 + $0x50] sm:$0xff] %vm433, %v2660
      %2693 = vst.msk [vmem:[%s246 + $0x58] sm:$0xff] %vm433, %v2661
      %2694 = vst.msk [vmem:[%s246 + $0x60] sm:$0xff] %vm433, %v2662
      %2695 = vst.msk [vmem:[%s246 + $0x68] sm:$0xff] %vm433, %v2663
      %2696 = vst.msk [vmem:[%s246 + $0x70] sm:$0xff] %vm433, %v2664
      %2697 = vst.msk [vmem:[%s246 + $0x78] sm:$0xff] %vm433, %v2665
      %2698 = vst.msk [vmem:[%s246 + $0x80] sm:$0xff] %vm433, %v2666
      %2699 = vst.msk [vmem:[%s246 + $0x88] sm:$0xff] %vm433, %v2667
      %2700 = vst.msk [vmem:[%s246 + $0x90] sm:$0xff] %vm433, %v2668
      %2701 = vst.msk [vmem:[%s246 + $0x98] sm:$0xff] %vm433, %v2669
      %2702 = vst.msk [vmem:[%s246 + $0xa0] sm:$0xff] %vm433, %v2670
      %2703 = vst.msk [vmem:[%s246 + $0xa8] sm:$0xff] %vm433, %v2671
      %2704 = vst.msk [vmem:[%s246 + $0xb0] sm:$0xff] %vm433, %v2672
      %2705 = vst.msk [vmem:[%s246 + $0xb8] sm:$0xff] %vm433, %v2673
      %2706 = vst.msk [vmem:[%s246 + $0xc0] sm:$0xff] %vm433, %v2674
      %2707 = vst.msk [vmem:[%s246 + $0xc8] sm:$0xff] %vm433, %v2675
      %2708 = vst.msk [vmem:[%s246 + $0xd0] sm:$0xff] %vm433, %v2676
      %2709 = vst.msk [vmem:[%s246 + $0xd8] sm:$0xff] %vm433, %v2677
      %2710 = vst.msk [vmem:[%s246 + $0xe0] sm:$0xff] %vm433, %v2678
      %2711 = vst.msk [vmem:[%s246 + $0xe8] sm:$0xff] %vm433, %v2679
      %2712 = vst.msk [vmem:[%s246 + $0xf0] sm:$0xff] %vm433, %v2680
      %2713 = vst.msk [vmem:[%s246 + $0xf8] sm:$0xff] %vm433, %v2681
      %v2714 = vld [vmem:[%s5] sm:$0x1]
      %v2715 = vsel %vm433, %v2650, 0.0
      %v2716 = vsel %vm433, %v2651, 0.0
      %v2717 = vadd.f32 %v2715, %v2716
      %v2718 = vsel %vm433, %v2652, 0.0
      %v2719 = vadd.f32 %v2717, %v2718
      %v2720 = vsel %vm433, %v2653, 0.0
      %v2721 = vadd.f32 %v2719, %v2720
      %v2722 = vsel %vm433, %v2654, 0.0
      %v2723 = vadd.f32 %v2721, %v2722
      %v2724 = vsel %vm433, %v2655, 0.0
      %v2725 = vadd.f32 %v2723, %v2724
      %v2726 = vsel %vm433, %v2656, 0.0
      %v2727 = vadd.f32 %v2725, %v2726
      %v2728 = vsel %vm433, %v2657, 0.0
      %v2729 = vadd.f32 %v2727, %v2728
      %v2730 = vsel %vm433, %v2658, 0.0
      %v2731 = vadd.f32 %v2729, %v2730
      %v2732 = vsel %vm433, %v2659, 0.0
      %v2733 = vadd.f32 %v2731, %v2732
      %v2734 = vsel %vm433, %v2660, 0.0
      %v2735 = vadd.f32 %v2733, %v2734
      %v2736 = vsel %vm433, %v2661, 0.0
      %v2737 = vadd.f32 %v2735, %v2736
      %v2738 = vsel %vm433, %v2662, 0.0
      %v2739 = vadd.f32 %v2737, %v2738
      %v2740 = vsel %vm433, %v2663, 0.0
      %v2741 = vadd.f32 %v2739, %v2740
      %v2742 = vsel %vm433, %v2664, 0.0
      %v2743 = vadd.f32 %v2741, %v2742
      %v2744 = vsel %vm433, %v2665, 0.0
      %v2745 = vadd.f32 %v2743, %v2744
      %v2746 = vsel %vm433, %v2666, 0.0
      %v2747 = vadd.f32 %v2745, %v2746
      %v2748 = vsel %vm433, %v2667, 0.0
      %v2749 = vadd.f32 %v2747, %v2748
      %v2750 = vsel %vm433, %v2668, 0.0
      %v2751 = vadd.f32 %v2749, %v2750
      %v2752 = vsel %vm433, %v2669, 0.0
      %v2753 = vadd.f32 %v2751, %v2752
      %v2754 = vsel %vm433, %v2670, 0.0
      %v2755 = vadd.f32 %v2753, %v2754
      %v2756 = vsel %vm433, %v2671, 0.0
      %v2757 = vadd.f32 %v2755, %v2756
      %v2758 = vsel %vm433, %v2672, 0.0
      %v2759 = vadd.f32 %v2757, %v2758
      %v2760 = vsel %vm433, %v2673, 0.0
      %v2761 = vadd.f32 %v2759, %v2760
      %v2762 = vsel %vm433, %v2674, 0.0
      %v2763 = vadd.f32 %v2761, %v2762
      %v2764 = vsel %vm433, %v2675, 0.0
      %v2765 = vadd.f32 %v2763, %v2764
      %v2766 = vsel %vm433, %v2676, 0.0
      %v2767 = vadd.f32 %v2765, %v2766
      %v2768 = vsel %vm433, %v2677, 0.0
      %v2769 = vadd.f32 %v2767, %v2768
      %v2770 = vsel %vm433, %v2678, 0.0
      %v2771 = vadd.f32 %v2769, %v2770
      %v2772 = vsel %vm433, %v2679, 0.0
      %v2773 = vadd.f32 %v2771, %v2772
      %v2774 = vsel %vm433, %v2680, 0.0
      %v2775 = vadd.f32 %v2773, %v2774
      %v2776 = vsel %vm433, %v2681, 0.0
      %v2777 = vadd.f32 %v2775, %v2776
      %v2778 = vrot.slane %v2777, 4
      %v2779 = vadd.f32 %v2777, %v2778
      %v2780 = vrot.slane %v2779, 2
      %v2781 = vadd.f32 %v2779, %v2780
      %v2782 = vrot.slane %v2781, 1
      %v2783 = vadd.f32 %v2781, %v2782
      %v2784 = vadd.f32 %v2714, %v2783
      %vm2785 = vcmask 24576
      %2786 = vst.msk [vmem:[%s5] sm:$0x1] %vm2785, %v2784
      %v2787 = vld [vmem:[%s6] sm:$0x1]
      %v2788 = vmul.f32 %v2650, %v2650
      %v2789 = vmul.f32 %v2651, %v2651
      %v2790 = vmul.f32 %v2652, %v2652
      %v2791 = vmul.f32 %v2653, %v2653
      %v2792 = vmul.f32 %v2654, %v2654
      %v2793 = vmul.f32 %v2655, %v2655
      %v2794 = vmul.f32 %v2656, %v2656
      %v2795 = vmul.f32 %v2657, %v2657
      %v2796 = vmul.f32 %v2658, %v2658
      %v2797 = vmul.f32 %v2659, %v2659
      %v2798 = vmul.f32 %v2660, %v2660
      %v2799 = vmul.f32 %v2661, %v2661
      %v2800 = vmul.f32 %v2662, %v2662
      %v2801 = vmul.f32 %v2663, %v2663
      %v2802 = vmul.f32 %v2664, %v2664
      %v2803 = vmul.f32 %v2665, %v2665
      %v2804 = vmul.f32 %v2666, %v2666
      %v2805 = vmul.f32 %v2667, %v2667
      %v2806 = vmul.f32 %v2668, %v2668
      %v2807 = vmul.f32 %v2669, %v2669
      %v2808 = vmul.f32 %v2670, %v2670
      %v2809 = vmul.f32 %v2671, %v2671
      %v2810 = vmul.f32 %v2672, %v2672
      %v2811 = vmul.f32 %v2673, %v2673
      %v2812 = vmul.f32 %v2674, %v2674
      %v2813 = vmul.f32 %v2675, %v2675
      %v2814 = vmul.f32 %v2676, %v2676
      %v2815 = vmul.f32 %v2677, %v2677
      %v2816 = vmul.f32 %v2678, %v2678
      %v2817 = vmul.f32 %v2679, %v2679
      %v2818 = vmul.f32 %v2680, %v2680
      %v2819 = vmul.f32 %v2681, %v2681
      %v2820 = vsel %vm433, %v2788, 0.0
      %v2821 = vsel %vm433, %v2789, 0.0
      %v2822 = vadd.f32 %v2820, %v2821
      %v2823 = vsel %vm433, %v2790, 0.0
      %v2824 = vadd.f32 %v2822, %v2823
      %v2825 = vsel %vm433, %v2791, 0.0
      %v2826 = vadd.f32 %v2824, %v2825
      %v2827 = vsel %vm433, %v2792, 0.0
      %v2828 = vadd.f32 %v2826, %v2827
      %v2829 = vsel %vm433, %v2793, 0.0
      %v2830 = vadd.f32 %v2828, %v2829
      %v2831 = vsel %vm433, %v2794, 0.0
      %v2832 = vadd.f32 %v2830, %v2831
      %v2833 = vsel %vm433, %v2795, 0.0
      %v2834 = vadd.f32 %v2832, %v2833
      %v2835 = vsel %vm433, %v2796, 0.0
      %v2836 = vadd.f32 %v2834, %v2835
      %v2837 = vsel %vm433, %v2797, 0.0
      %v2838 = vadd.f32 %v2836, %v2837
      %v2839 = vsel %vm433, %v2798, 0.0
      %v2840 = vadd.f32 %v2838, %v2839
      %v2841 = vsel %vm433, %v2799, 0.0
      %v2842 = vadd.f32 %v2840, %v2841
      %v2843 = vsel %vm433, %v2800, 0.0
      %v2844 = vadd.f32 %v2842, %v2843
      %v2845 = vsel %vm433, %v2801, 0.0
      %v2846 = vadd.f32 %v2844, %v2845
      %v2847 = vsel %vm433, %v2802, 0.0
      %v2848 = vadd.f32 %v2846, %v2847
      %v2849 = vsel %vm433, %v2803, 0.0
      %v2850 = vadd.f32 %v2848, %v2849
      %v2851 = vsel %vm433, %v2804, 0.0
      %v2852 = vadd.f32 %v2850, %v2851
      %v2853 = vsel %vm433, %v2805, 0.0
      %v2854 = vadd.f32 %v2852, %v2853
      %v2855 = vsel %vm433, %v2806, 0.0
      %v2856 = vadd.f32 %v2854, %v2855
      %v2857 = vsel %vm433, %v2807, 0.0
      %v2858 = vadd.f32 %v2856, %v2857
      %v2859 = vsel %vm433, %v2808, 0.0
      %v2860 = vadd.f32 %v2858, %v2859
      %v2861 = vsel %vm433, %v2809, 0.0
      %v2862 = vadd.f32 %v2860, %v2861
      %v2863 = vsel %vm433, %v2810, 0.0
      %v2864 = vadd.f32 %v2862, %v2863
      %v2865 = vsel %vm433, %v2811, 0.0
      %v2866 = vadd.f32 %v2864, %v2865
      %v2867 = vsel %vm433, %v2812, 0.0
      %v2868 = vadd.f32 %v2866, %v2867
      %v2869 = vsel %vm433, %v2813, 0.0
      %v2870 = vadd.f32 %v2868, %v2869
      %v2871 = vsel %vm433, %v2814, 0.0
      %v2872 = vadd.f32 %v2870, %v2871
      %v2873 = vsel %vm433, %v2815, 0.0
      %v2874 = vadd.f32 %v2872, %v2873
      %v2875 = vsel %vm433, %v2816, 0.0
      %v2876 = vadd.f32 %v2874, %v2875
      %v2877 = vsel %vm433, %v2817, 0.0
      %v2878 = vadd.f32 %v2876, %v2877
      %v2879 = vsel %vm433, %v2818, 0.0
      %v2880 = vadd.f32 %v2878, %v2879
      %v2881 = vsel %vm433, %v2819, 0.0
      %v2882 = vadd.f32 %v2880, %v2881
      %v2883 = vrot.slane %v2882, 4
      %v2884 = vadd.f32 %v2882, %v2883
      %v2885 = vrot.slane %v2884, 2
      %v2886 = vadd.f32 %v2884, %v2885
      %v2887 = vrot.slane %v2886, 1
      %v2888 = vadd.f32 %v2886, %v2887
      %v2889 = vadd.f32 %v2787, %v2888
      %2890 = vst.msk [vmem:[%s6] sm:$0x1] %vm2785, %v2889
      %p2891 = scmp.lt.s32.totalorder %s18, 1
      %s2892 = scalar_select %p2891, %s18, 1
      %s2893 = smul.addr %s2892, 32
      %s2894 = smul.addr %s2893, 8
      %s2895 = scalar_lea.vmem %s4, %s2894
      // Predicated region
      $region41: #{bottleneck_forward.5} parent=35 // pred_check
        %p2896 = pneg %p125
      $region42: #{bottleneck_forward.5} parent=35 // pred_check_branch
        %2898 = sbr.rel (%p2896) target = $region44
      $region43: #{bottleneck_forward.5} parent=35 // pred_region
        _
      $region44: #{bottleneck_forward.5} parent=35 // pred_fallthru
        _
      // Predicated region
      $region45: #{bottleneck_forward.5} parent=35 // pred_check
        %p2899 = pneg %p146
      $region46: #{bottleneck_forward.5} parent=35 // pred_check_branch
        %2901 = sbr.rel (%p2899) target = $region48
      $region47: #{bottleneck_forward.5} parent=35 // pred_region
        _
      $region48: #{bottleneck_forward.5} parent=35 // pred_fallthru
        _
      // Predicated region
      $region49: #{bottleneck_forward.5} parent=35 // pred_check
        %p2902 = pneg %p167
      $region50: #{bottleneck_forward.5} parent=35 // pred_check_branch
        %2904 = sbr.rel (%p2902) target = $region52
      $region51: #{bottleneck_forward.5} parent=35 // pred_region
        _
      $region52: #{bottleneck_forward.5} parent=35 // pred_fallthru
        _
      // Predicated region
      $region53: #{bottleneck_forward.5} parent=35 // pred_check
        %p2905 = pneg %p146
      $region54: #{bottleneck_forward.5} parent=35 // pred_check_branch
        %2907 = sbr.rel (%p2905) target = $region56
      $region55: #{bottleneck_forward.5} parent=35 // pred_region
        _
      $region56: #{bottleneck_forward.5} parent=35 // pred_fallthru
        _
      // Predicated region
      $region57: #{bottleneck_forward.5} parent=35 // pred_check
        %p2908 = pneg %p167
      $region58: #{bottleneck_forward.5} parent=35 // pred_check_branch
        %2910 = sbr.rel (%p2908) target = $region60
      $region59: #{bottleneck_forward.5} parent=35 // pred_region
        _
      $region60: #{bottleneck_forward.5} parent=35 // pred_fallthru
        _
    $region36: #{bottleneck_forward.5} parent=5 // pred_fallthru
      _
    %p2911 = scmp.le.s32.totalorder 2, %s13
    // Predicated region
    $region61: #{bottleneck_forward.5} parent=5 // pred_check
      %p2912 = pneg %p2911
    $region62: #{bottleneck_forward.5} parent=5 // pred_check_branch
      %2914 = sbr.rel (%p2912) target = $region64
    $region63: #{bottleneck_forward.5} parent=5 // pred_region
      %s2915 = ssub.s32 %s13, 2
      // Predicated region
      $region65: #{bottleneck_forward.5} parent=63 // pred_check
        %p2916 = pneg %p131
      $region66: #{bottleneck_forward.5} parent=63 // pred_check_branch
        %2918 = sbr.rel (%p2916) target = $region68
      $region67: #{bottleneck_forward.5} parent=63 // pred_region
        %p2919 = scmp.lt.s32.totalorder %s19, 1
        %s2920 = scalar_select %p2919, %s19, 1
        %s2921 = smul.addr %s2920, 32
        %s2922 = smul.addr %s2921, 8
        %s2923 = scalar_lea.vmem %s4, %s2922
      $region68: #{bottleneck_forward.5} parent=63 // pred_fallthru
        _
    $region64: #{bottleneck_forward.5} parent=5 // pred_fallthru
      _
  $region6: #{bottleneck_forward.5} parent=0 // loop_footer
    %s17 = sadd.s32 1, %s13
  $region7: #{bottleneck_forward.5} parent=0 // loop_footer_branch
    %12 = sbr.rel target = $region3
  $region8: #{bottleneck_forward.5} parent=0 // loop_exit
    _

</llo_original>
